<compile_context>
chip_gen: v7x
topology: tpu7x:2x2x1
jax: 0.10.0
libtpu: 0.0.40
codegen_flags: <defaults>
</compile_context>

<pallas_src>
import functools

import jax
import jax.numpy as jnp
from jax import lax
from jax.experimental import pallas as pl
from jax.experimental.pallas import tpu as pltpu

BN_EPS = 1e-5
LANE = 128


def _round_up(x, m):
    return ((x + m - 1) // m) * m


def _pad_last(a, n):
    d = n - a.shape[-1]
    if d == 0:
        return a
    return jnp.pad(a, [(0, 0)] * (a.ndim - 1) + [(0, d)])


# ----------------------------------------------------------------------------
# Fused Pallas kernel:
#   conv1(3x3,s) + BN1 + ReLU -> VMEM scratch (zero-padded for conv2)
#   conv2(3x3,1) + BN2 + skip(1x1 conv OR identity, fused as one matmul) + ReLU
# ----------------------------------------------------------------------------
def _make_residual_kernel(taps1, skip_off, Ho, Wo, Np):
    """taps1: (row, col) offsets into the parity-plane tensor for conv1.
    skip_off: (row, col) offset of the skip-path window in the same tensor."""

    def kernel(x_ref, w1_ref, b1_ref, w2_ref, b2_ref, w3_ref, o_ref, y1_ref):
        C = x_ref.shape[-1]

        # ---- conv1 (+ folded BN1) + ReLU, accumulated in f32 on the MXU ----
        acc1 = None
        for t, (ro, co) in enumerate(taps1):
            slab = x_ref[0, ro:ro + Ho, co:co + Wo, :].reshape(Ho * Wo, C)
            c = jnp.dot(slab, w1_ref[t], preferred_element_type=jnp.float32)
            acc1 = c if acc1 is None else acc1 + c
        acc1 = jnp.maximum(acc1 + b1_ref[...], 0.0)

        # Write into padded VMEM scratch (borders are conv2's zero padding).
        y1_ref[...] = jnp.zeros_like(y1_ref)
        y1_ref[1:Ho + 1, 1:Wo + 1, :] = (
            acc1.reshape(Ho, Wo, Np).astype(y1_ref.dtype))

        # ---- conv2 (+ folded BN2) over the scratch ----
        acc2 = None
        for di in range(3):
            for dj in range(3):
                slab = y1_ref[di:di + Ho, dj:dj + Wo, :].reshape(Ho * Wo, Np)
                c = jnp.dot(slab, w2_ref[di * 3 + dj],
                            preferred_element_type=jnp.float32)
                acc2 = c if acc2 is None else acc2 + c
        acc2 = acc2 + b2_ref[...]

        # ---- skip path: one extra tap-matmul over the input planes ----
        ro, co = skip_off
        sp = x_ref[0, ro:ro + Ho, co:co + Wo, :].reshape(Ho * Wo, C)
        acc2 = acc2 + jnp.dot(sp, w3_ref[...],
                              preferred_element_type=jnp.float32)

        o_ref[...] = jnp.maximum(acc2, 0.0).reshape(
            1, Ho, Wo, Np).astype(o_ref.dtype)

    return kernel


# ----------------------------------------------------------------------------
# Wrapper glue: parity-plane decomposition (no im2col expansion), BN folding
# ----------------------------------------------------------------------------
def _make_planes(x_nhwc, ksize, stride, pad):
    """Pad + decompose into stride*stride parity planes stacked along H, so
    every conv tap reads a contiguous window.  Total bytes == input bytes."""
    B, H, W, C = x_nhwc.shape
    Ho = (H + 2 * pad - ksize) // stride + 1
    Wo = (W + 2 * pad - ksize) // stride + 1
    Hh = Ho + (ksize - 1) // stride
    Wh = Wo + (ksize - 1) // stride
    eh = (stride - 1) + stride * Hh - (H + pad)
    ew = (stride - 1) + stride * Wh - (W + pad)
    xp = jnp.pad(x_nhwc, ((0, 0), (pad, eh), (pad, ew), (0, 0)))
    planes = [xp[:, p:p + stride * Hh:stride, q:q + stride * Wh:stride, :]
              for p in range(stride) for q in range(stride)]
    planes = jnp.concatenate(planes, axis=1)          # (B, s*s*Hh, Wh, C)
    taps = []
    for di in range(ksize):
        for dj in range(ksize):
            pidx = (di % stride) * stride + (dj % stride)
            taps.append((pidx * Hh + di // stride, dj // stride))
    return planes, taps, (Ho, Wo, Hh)


def _conv_weight_taps(w_oihw):
    """PyTorch (O, I, KH, KW) -> (KH*KW, I, O) matching the tap ordering."""
    O, I, KH, KW = w_oihw.shape
    return jnp.transpose(w_oihw, (2, 3, 1, 0)).reshape(KH * KW, I, O)


def residual_forward(x_nchw, params, use_1conv, stride):
    C_in = x_nchw.shape[1]
    C_out = params["w1"].shape[0]
    Np = _round_up(C_out, LANE)                  # lane-dense output channels
    pad = 1

    x = jnp.transpose(x_nchw, (0, 2, 3, 1)).astype(jnp.bfloat16)   # NHWC bf16
    planes, taps1, (Ho, Wo, Hh) = _make_planes(x, 3, stride, pad)
    B, PH, Wh, C = planes.shape

    # ---- fold BN1 into conv1 weights/bias ----
    s1 = params["g1"] * lax.rsqrt(params["v1"] + BN_EPS)
    w1 = _pad_last(_conv_weight_taps(params["w1"]) * s1[None, None, :], Np)
    b1 = _pad_last((params["cb1"] - params["m1"]) * s1 + params["be1"], Np)

    # ---- fold BN2 into conv2 weights/bias (K dim padded to Np for scratch) ----
    s2 = params["g2"] * lax.rsqrt(params["v2"] + BN_EPS)
    w2 = _pad_last(_conv_weight_taps(params["w2"]) * s2[None, None, :], Np)
    w2 = jnp.pad(w2, ((0, 0), (0, Np - C_out), (0, 0)))
    b2v = (params["cb2"] - params["m2"]) * s2 + params["be2"]

    # ---- skip path as (C_in, Np) matmul weights ----
    if use_1conv:
        w3 = _pad_last(_conv_weight_taps(params["w3"])[0], Np)    # (C_in, Np)
        b2v = b2v + params["cb3"]                 # skip bias folds into b2
    else:
        assert stride == 1 and C_in == C_out, \
            "identity skip requires stride=1 and C_in == C_out"
        w3 = _pad_last(jnp.eye(C_in, dtype=jnp.float32), Np)      # identity

    b2 = _pad_last(b2v, Np)

    # Skip window offset inside the parity-plane tensor: skip pixel (i, j) is
    # x[s*i, s*j] == padded[s*i + pad, s*j + pad].
    pidx = (pad % stride) * stride + (pad % stride)
    skip_off = (pidx * Hh + pad // stride, pad // stride)

    kernel = _make_residual_kernel(tuple(taps1), skip_off, Ho, Wo, Np)
    out = pl.pallas_call(
        kernel,
        out_shape=jax.ShapeDtypeStruct((B, Ho, Wo, Np), jnp.float32),
        grid_spec=pltpu.PrefetchScalarGridSpec(
            num_scalar_prefetch=0,
            grid=(B,),
            in_specs=[
                pl.BlockSpec((1, PH, Wh, C), lambda b: (b, 0, 0, 0)),   # image
                pl.BlockSpec((9, C, Np), lambda b: (0, 0, 0)),          # w1
                pl.BlockSpec((1, Np), lambda b: (0, 0)),                # b1
                pl.BlockSpec((9, Np, Np), lambda b: (0, 0, 0)),         # w2
                pl.BlockSpec((1, Np), lambda b: (0, 0)),                # b2
                pl.BlockSpec((C, Np), lambda b: (0, 0)),                # w3
            ],
            out_specs=pl.BlockSpec((1, Ho, Wo, Np), lambda b: (b, 0, 0, 0)),
            scratch_shapes=[pltpu.VMEM((Ho + 2, Wo + 2, Np), jnp.bfloat16)],
        ),
        compiler_params=pltpu.CompilerParams(
            dimension_semantics=("parallel",)),
    )(planes,
      w1.astype(jnp.bfloat16),
      b1.reshape(1, Np).astype(jnp.float32),
      w2.astype(jnp.bfloat16),
      b2.reshape(1, Np).astype(jnp.float32),
      w3.astype(jnp.bfloat16))

    out = out[..., :C_out]                       # drop lane padding
    return jnp.transpose(out, (0, 3, 1, 2))      # NHWC -> NCHW


@functools.partial(jax.jit, static_argnums=(2, 3))
def residual_forward_jit(x, params, use_1conv, stride):
    return residual_forward(x, params, use_1conv, stride)


# ----------------------------------------------------------------------------
# Pure-JAX reference (lax.conv, f32) for correctness checking
# ----------------------------------------------------------------------------
def reference_forward(x, params, use_1conv, stride):
    def conv(x, w, b, s, pad):
        out = lax.conv_general_dilated(
            x, w, (s, s), [(pad, pad), (pad, pad)],
            dimension_numbers=("NCHW", "OIHW", "NCHW"))
        return out + b[None, :, None, None]

    def bn(x, g, be, m, v):
        return (g[None, :, None, None] * (x - m[None, :, None, None])
                / jnp.sqrt(v[None, :, None, None] + BN_EPS)
                + be[None, :, None, None])

    y = jax.nn.relu(bn(conv(x, params["w1"], params["cb1"], stride, 1),
                       params["g1"], params["be1"], params["m1"], params["v1"]))
    y = bn(conv(y, params["w2"], params["cb2"], 1, 1),
           params["g2"], params["be2"], params["m2"], params["v2"])
    skip = conv(x, params["w3"], params["cb3"], stride, 0) if use_1conv else x
    return jax.nn.relu(y + skip)


# ----------------------------------------------------------------------------
# Deterministic parameter initialization
# ----------------------------------------------------------------------------
def init_params(key, cin, cout, use_1conv):
    ks = jax.random.split(key, 14)
    n = lambda k, s, sc=0.1: sc * jax.random.normal(k, s, jnp.float32)
    p = dict(
        w1=n(ks[0], (cout, cin, 3, 3)), cb1=n(ks[1], (cout,)),
        g1=1.0 + n(ks[2], (cout,)), be1=n(ks[3], (cout,)),
        m1=n(ks[4], (cout,)), v1=jnp.abs(n(ks[5], (cout,), 1.0)) + 0.5,
        w2=n(ks[6], (cout, cout, 3, 3)), cb2=n(ks[7], (cout,)),
        g2=1.0 + n(ks[8], (cout,)), be2=n(ks[9], (cout,)),
        m2=n(ks[10], (cout,)), v2=jnp.abs(n(ks[11], (cout,), 1.0)) + 0.5,
    )
    if use_1conv:
        p["w3"] = n(ks[12], (cout, cin, 1, 1))
        p["cb3"] = n(ks[13], (cout,))
    return p


if __name__ == "__main__":
    key = jax.random.PRNGKey(0)
    kx, kp1, kp2 = jax.random.split(key, 3)

    x1 = jax.random.normal(kx, (2, 4, 16, 16), jnp.float32)

    # Case 1: downsampling block (use_1conv=True, stride=2), 4 -> 8 channels.
    params1 = init_params(kp1, 4, 8, use_1conv=True)
    out1 = jax.block_until_ready(residual_forward_jit(x1, params1, True, 2))
    ref1 = reference_forward(x1, params1, True, 2)
    assert out1.shape == (2, 8, 8, 8), out1.shape
    assert jnp.allclose(out1, ref1, atol=5e-2, rtol=5e-2), \
        float(jnp.max(jnp.abs(out1 - ref1)))

    # Case 2: identity-skip block (use_1conv=False, stride=1), 4 -> 4 channels.
    params2 = init_params(kp2, 4, 4, use_1conv=False)
    out2 = jax.block_until_ready(residual_forward_jit(x1, params2, False, 1))
    ref2 = reference_forward(x1, params2, False, 1)
    assert out2.shape == (2, 4, 16, 16), out2.shape
    assert jnp.allclose(out2, ref2, atol=5e-2, rtol=5e-2), \
        float(jnp.max(jnp.abs(out2 - ref2)))

    print("KERNEL_OK")
</pallas_src>

<mosaic_0001>
module attributes {stable_mosaic.version = 11 : i64} {
  func.func @kernel(%arg0: i32, %arg1: memref<1x36x9x4xbf16, #tpu.memory_space<vmem>>, %arg2: memref<9x4x128xbf16, #tpu.memory_space<vmem>>, %arg3: memref<1x128xf32, #tpu.memory_space<vmem>>, %arg4: memref<9x128x128xbf16, #tpu.memory_space<vmem>>, %arg5: memref<1x128xf32, #tpu.memory_space<vmem>>, %arg6: memref<4x128xbf16, #tpu.memory_space<vmem>>, %arg7: memref<1x8x8x128xf32, #tpu.memory_space<vmem>>, %arg8: memref<10x10x128xbf16, #tpu.memory_space<vmem>>) attributes {dimension_semantics = [#tpu.dimension_semantics<parallel>], iteration_bounds = array<i64: 2>, scalar_prefetch = 0 : i64, scratch_operands = 1 : i64, tpu.core_type = #tpu.core_type<tc>, window_params = [{transform_indices = @transform_0, window_bounds = array<i64: 1, 36, 9, 4>}, {pipeline_mode = #tpu.pipeline_mode<synchronous>, transform_indices = @transform_1, window_bounds = array<i64: 9, 4, 128>}, {pipeline_mode = #tpu.pipeline_mode<synchronous>, transform_indices = @transform_2, window_bounds = array<i64: 1, 128>}, {pipeline_mode = #tpu.pipeline_mode<synchronous>, transform_indices = @transform_3, window_bounds = array<i64: 9, 128, 128>}, {pipeline_mode = #tpu.pipeline_mode<synchronous>, transform_indices = @transform_4, window_bounds = array<i64: 1, 128>}, {pipeline_mode = #tpu.pipeline_mode<synchronous>, transform_indices = @transform_5, window_bounds = array<i64: 4, 128>}, {transform_indices = @transform_6, window_bounds = array<i64: 1, 8, 8, 128>}]} {
    %c0 = arith.constant 0 : index
    %c0_0 = arith.constant 0 : index
    %c0_1 = arith.constant 0 : index
    %c0_2 = arith.constant 0 : index
    %0 = vector.load %arg1[%c0, %c0_0, %c0_1, %c0_2] : memref<1x36x9x4xbf16, #tpu.memory_space<vmem>>, vector<1x8x8x4xbf16>
    %1 = vector.shape_cast %0 : vector<1x8x8x4xbf16> to vector<8x8x4xbf16>
    %2 = vector.shape_cast %1 : vector<8x8x4xbf16> to vector<64x4xbf16>
    %c0_3 = arith.constant 0 : index
    %c0_4 = arith.constant 0 : index
    %c0_5 = arith.constant 0 : index
    %3 = vector.load %arg2[%c0_3, %c0_4, %c0_5] : memref<9x4x128xbf16, #tpu.memory_space<vmem>>, vector<1x4x128xbf16>
    %4 = vector.shape_cast %3 : vector<1x4x128xbf16> to vector<4x128xbf16>
    %cst = arith.constant dense<0.000000e+00> : vector<64x128xf32>
    %5 = tpu.matmul %2, %4, %cst {dimension_numbers = #tpu.dot_dimension_numbers<[1], [0], [0], [1], [0, 0, 1, 1], [], []>} : vector<64x4xbf16>, vector<4x128xbf16>, vector<64x128xf32> -> vector<64x128xf32>
    %c0_6 = arith.constant 0 : index
    %c9 = arith.constant 9 : index
    %c0_7 = arith.constant 0 : index
    %c0_8 = arith.constant 0 : index
    %6 = vector.load %arg1[%c0_6, %c9, %c0_7, %c0_8] : memref<1x36x9x4xbf16, #tpu.memory_space<vmem>>, vector<1x8x8x4xbf16>
    %7 = vector.shape_cast %6 : vector<1x8x8x4xbf16> to vector<8x8x4xbf16>
    %8 = vector.shape_cast %7 : vector<8x8x4xbf16> to vector<64x4xbf16>
    %c1 = arith.constant 1 : index
    %c0_9 = arith.constant 0 : index
    %c0_10 = arith.constant 0 : index
    %9 = vector.load %arg2[%c1, %c0_9, %c0_10] : memref<9x4x128xbf16, #tpu.memory_space<vmem>>, vector<1x4x128xbf16>
    %10 = vector.shape_cast %9 : vector<1x4x128xbf16> to vector<4x128xbf16>
    %cst_11 = arith.constant dense<0.000000e+00> : vector<64x128xf32>
    %11 = tpu.matmul %8, %10, %cst_11 {dimension_numbers = #tpu.dot_dimension_numbers<[1], [0], [0], [1], [0, 0, 1, 1], [], []>} : vector<64x4xbf16>, vector<4x128xbf16>, vector<64x128xf32> -> vector<64x128xf32>
    %12 = arith.addf %5, %11 : vector<64x128xf32>
    %c0_12 = arith.constant 0 : index
    %c0_13 = arith.constant 0 : index
    %c1_14 = arith.constant 1 : index
    %c0_15 = arith.constant 0 : index
    %13 = vector.load %arg1[%c0_12, %c0_13, %c1_14, %c0_15] : memref<1x36x9x4xbf16, #tpu.memory_space<vmem>>, vector<1x8x8x4xbf16>
    %14 = vector.shape_cast %13 : vector<1x8x8x4xbf16> to vector<8x8x4xbf16>
    %15 = vector.shape_cast %14 : vector<8x8x4xbf16> to vector<64x4xbf16>
    %c2 = arith.constant 2 : index
    %c0_16 = arith.constant 0 : index
    %c0_17 = arith.constant 0 : index
    %16 = vector.load %arg2[%c2, %c0_16, %c0_17] : memref<9x4x128xbf16, #tpu.memory_space<vmem>>, vector<1x4x128xbf16>
    %17 = vector.shape_cast %16 : vector<1x4x128xbf16> to vector<4x128xbf16>
    %cst_18 = arith.constant dense<0.000000e+00> : vector<64x128xf32>
    %18 = tpu.matmul %15, %17, %cst_18 {dimension_numbers = #tpu.dot_dimension_numbers<[1], [0], [0], [1], [0, 0, 1, 1], [], []>} : vector<64x4xbf16>, vector<4x128xbf16>, vector<64x128xf32> -> vector<64x128xf32>
    %19 = arith.addf %12, %18 : vector<64x128xf32>
    %c0_19 = arith.constant 0 : index
    %c18 = arith.constant 18 : index
    %c0_20 = arith.constant 0 : index
    %c0_21 = arith.constant 0 : index
    %20 = vector.load %arg1[%c0_19, %c18, %c0_20, %c0_21] : memref<1x36x9x4xbf16, #tpu.memory_space<vmem>>, vector<1x8x8x4xbf16>
    %21 = vector.shape_cast %20 : vector<1x8x8x4xbf16> to vector<8x8x4xbf16>
    %22 = vector.shape_cast %21 : vector<8x8x4xbf16> to vector<64x4xbf16>
    %c3 = arith.constant 3 : index
    %c0_22 = arith.constant 0 : index
    %c0_23 = arith.constant 0 : index
    %23 = vector.load %arg2[%c3, %c0_22, %c0_23] : memref<9x4x128xbf16, #tpu.memory_space<vmem>>, vector<1x4x128xbf16>
    %24 = vector.shape_cast %23 : vector<1x4x128xbf16> to vector<4x128xbf16>
    %cst_24 = arith.constant dense<0.000000e+00> : vector<64x128xf32>
    %25 = tpu.matmul %22, %24, %cst_24 {dimension_numbers = #tpu.dot_dimension_numbers<[1], [0], [0], [1], [0, 0, 1, 1], [], []>} : vector<64x4xbf16>, vector<4x128xbf16>, vector<64x128xf32> -> vector<64x128xf32>
    %26 = arith.addf %19, %25 : vector<64x128xf32>
    %c0_25 = arith.constant 0 : index
    %c27 = arith.constant 27 : index
    %c0_26 = arith.constant 0 : index
    %c0_27 = arith.constant 0 : index
    %27 = vector.load %arg1[%c0_25, %c27, %c0_26, %c0_27] : memref<1x36x9x4xbf16, #tpu.memory_space<vmem>>, vector<1x8x8x4xbf16>
    %28 = vector.shape_cast %27 : vector<1x8x8x4xbf16> to vector<8x8x4xbf16>
    %29 = vector.shape_cast %28 : vector<8x8x4xbf16> to vector<64x4xbf16>
    %c4 = arith.constant 4 : index
    %c0_28 = arith.constant 0 : index
    %c0_29 = arith.constant 0 : index
    %30 = vector.load %arg2[%c4, %c0_28, %c0_29] : memref<9x4x128xbf16, #tpu.memory_space<vmem>>, vector<1x4x128xbf16>
    %31 = vector.shape_cast %30 : vector<1x4x128xbf16> to vector<4x128xbf16>
    %cst_30 = arith.constant dense<0.000000e+00> : vector<64x128xf32>
    %32 = tpu.matmul %29, %31, %cst_30 {dimension_numbers = #tpu.dot_dimension_numbers<[1], [0], [0], [1], [0, 0, 1, 1], [], []>} : vector<64x4xbf16>, vector<4x128xbf16>, vector<64x128xf32> -> vector<64x128xf32>
    %33 = arith.addf %26, %32 : vector<64x128xf32>
    %c0_31 = arith.constant 0 : index
    %c18_32 = arith.constant 18 : index
    %c1_33 = arith.constant 1 : index
    %c0_34 = arith.constant 0 : index
    %34 = vector.load %arg1[%c0_31, %c18_32, %c1_33, %c0_34] : memref<1x36x9x4xbf16, #tpu.memory_space<vmem>>, vector<1x8x8x4xbf16>
    %35 = vector.shape_cast %34 : vector<1x8x8x4xbf16> to vector<8x8x4xbf16>
    %36 = vector.shape_cast %35 : vector<8x8x4xbf16> to vector<64x4xbf16>
    %c5 = arith.constant 5 : index
    %c0_35 = arith.constant 0 : index
    %c0_36 = arith.constant 0 : index
    %37 = vector.load %arg2[%c5, %c0_35, %c0_36] : memref<9x4x128xbf16, #tpu.memory_space<vmem>>, vector<1x4x128xbf16>
    %38 = vector.shape_cast %37 : vector<1x4x128xbf16> to vector<4x128xbf16>
    %cst_37 = arith.constant dense<0.000000e+00> : vector<64x128xf32>
    %39 = tpu.matmul %36, %38, %cst_37 {dimension_numbers = #tpu.dot_dimension_numbers<[1], [0], [0], [1], [0, 0, 1, 1], [], []>} : vector<64x4xbf16>, vector<4x128xbf16>, vector<64x128xf32> -> vector<64x128xf32>
    %40 = arith.addf %33, %39 : vector<64x128xf32>
    %c0_38 = arith.constant 0 : index
    %c1_39 = arith.constant 1 : index
    %c0_40 = arith.constant 0 : index
    %c0_41 = arith.constant 0 : index
    %41 = vector.load %arg1[%c0_38, %c1_39, %c0_40, %c0_41] : memref<1x36x9x4xbf16, #tpu.memory_space<vmem>>, vector<1x8x8x4xbf16>
    %42 = vector.shape_cast %41 : vector<1x8x8x4xbf16> to vector<8x8x4xbf16>
    %43 = vector.shape_cast %42 : vector<8x8x4xbf16> to vector<64x4xbf16>
    %c6 = arith.constant 6 : index
    %c0_42 = arith.constant 0 : index
    %c0_43 = arith.constant 0 : index
    %44 = vector.load %arg2[%c6, %c0_42, %c0_43] : memref<9x4x128xbf16, #tpu.memory_space<vmem>>, vector<1x4x128xbf16>
    %45 = vector.shape_cast %44 : vector<1x4x128xbf16> to vector<4x128xbf16>
    %cst_44 = arith.constant dense<0.000000e+00> : vector<64x128xf32>
    %46 = tpu.matmul %43, %45, %cst_44 {dimension_numbers = #tpu.dot_dimension_numbers<[1], [0], [0], [1], [0, 0, 1, 1], [], []>} : vector<64x4xbf16>, vector<4x128xbf16>, vector<64x128xf32> -> vector<64x128xf32>
    %47 = arith.addf %40, %46 : vector<64x128xf32>
    %c0_45 = arith.constant 0 : index
    %c10 = arith.constant 10 : index
    %c0_46 = arith.constant 0 : index
    %c0_47 = arith.constant 0 : index
    %48 = vector.load %arg1[%c0_45, %c10, %c0_46, %c0_47] : memref<1x36x9x4xbf16, #tpu.memory_space<vmem>>, vector<1x8x8x4xbf16>
    %49 = vector.shape_cast %48 : vector<1x8x8x4xbf16> to vector<8x8x4xbf16>
    %50 = vector.shape_cast %49 : vector<8x8x4xbf16> to vector<64x4xbf16>
    %c7 = arith.constant 7 : index
    %c0_48 = arith.constant 0 : index
    %c0_49 = arith.constant 0 : index
    %51 = vector.load %arg2[%c7, %c0_48, %c0_49] : memref<9x4x128xbf16, #tpu.memory_space<vmem>>, vector<1x4x128xbf16>
    %52 = vector.shape_cast %51 : vector<1x4x128xbf16> to vector<4x128xbf16>
    %cst_50 = arith.constant dense<0.000000e+00> : vector<64x128xf32>
    %53 = tpu.matmul %50, %52, %cst_50 {dimension_numbers = #tpu.dot_dimension_numbers<[1], [0], [0], [1], [0, 0, 1, 1], [], []>} : vector<64x4xbf16>, vector<4x128xbf16>, vector<64x128xf32> -> vector<64x128xf32>
    %54 = arith.addf %47, %53 : vector<64x128xf32>
    %c0_51 = arith.constant 0 : index
    %c1_52 = arith.constant 1 : index
    %c1_53 = arith.constant 1 : index
    %c0_54 = arith.constant 0 : index
    %55 = vector.load %arg1[%c0_51, %c1_52, %c1_53, %c0_54] : memref<1x36x9x4xbf16, #tpu.memory_space<vmem>>, vector<1x8x8x4xbf16>
    %56 = vector.shape_cast %55 : vector<1x8x8x4xbf16> to vector<8x8x4xbf16>
    %57 = vector.shape_cast %56 : vector<8x8x4xbf16> to vector<64x4xbf16>
    %c8 = arith.constant 8 : index
    %c0_55 = arith.constant 0 : index
    %c0_56 = arith.constant 0 : index
    %58 = vector.load %arg2[%c8, %c0_55, %c0_56] : memref<9x4x128xbf16, #tpu.memory_space<vmem>>, vector<1x4x128xbf16>
    %59 = vector.shape_cast %58 : vector<1x4x128xbf16> to vector<4x128xbf16>
    %cst_57 = arith.constant dense<0.000000e+00> : vector<64x128xf32>
    %60 = tpu.matmul %57, %59, %cst_57 {dimension_numbers = #tpu.dot_dimension_numbers<[1], [0], [0], [1], [0, 0, 1, 1], [], []>} : vector<64x4xbf16>, vector<4x128xbf16>, vector<64x128xf32> -> vector<64x128xf32>
    %61 = arith.addf %54, %60 : vector<64x128xf32>
    %c0_58 = arith.constant 0 : index
    %c0_59 = arith.constant 0 : index
    %62 = vector.load %arg3[%c0_58, %c0_59] : memref<1x128xf32, #tpu.memory_space<vmem>>, vector<1x128xf32>
    %63 = vector.broadcast %62 : vector<1x128xf32> to vector<64x128xf32>
    %64 = arith.addf %61, %63 : vector<64x128xf32>
    %cst_60 = arith.constant 0.000000e+00 : f32
    %65 = vector.broadcast %cst_60 : f32 to vector<64x128xf32>
    %66 = arith.maximumf %64, %65 : vector<64x128xf32>
    %cst_61 = arith.constant 0.000000e+00 : bf16
    %67 = vector.broadcast %cst_61 : bf16 to vector<10x10x128xbf16>
    %c0_62 = arith.constant 0 : index
    %c0_63 = arith.constant 0 : index
    %c0_64 = arith.constant 0 : index
    %68 = vector.load %arg8[%c0_62, %c0_63, %c0_64] : memref<10x10x128xbf16, #tpu.memory_space<vmem>>, vector<10x10x128xbf16>
    tpu.vector_store %arg8[%c0_62, %c0_63, %c0_64], %67 {strides = array<i32>} : memref<10x10x128xbf16, #tpu.memory_space<vmem>>, vector<10x10x128xbf16>,
    %69 = vector.shape_cast %66 : vector<64x128xf32> to vector<8x8x128xf32>
    %70 = arith.truncf %69 : vector<8x8x128xf32> to vector<8x8x128xbf16>
    %c1_65 = arith.constant 1 : index
    %c1_66 = arith.constant 1 : index
    %c0_67 = arith.constant 0 : index
    %71 = vector.load %arg8[%c1_65, %c1_66, %c0_67] : memref<10x10x128xbf16, #tpu.memory_space<vmem>>, vector<8x8x128xbf16>
    tpu.vector_store %arg8[%c1_65, %c1_66, %c0_67], %70 {strides = array<i32>} : memref<10x10x128xbf16, #tpu.memory_space<vmem>>, vector<8x8x128xbf16>,
    %c0_68 = arith.constant 0 : index
    %c0_69 = arith.constant 0 : index
    %c0_70 = arith.constant 0 : index
    %72 = vector.load %arg8[%c0_68, %c0_69, %c0_70] : memref<10x10x128xbf16, #tpu.memory_space<vmem>>, vector<8x8x128xbf16>
    %73 = vector.shape_cast %72 : vector<8x8x128xbf16> to vector<64x128xbf16>
    %c0_71 = arith.constant 0 : index
    %c0_72 = arith.constant 0 : index
    %c0_73 = arith.constant 0 : index
    %74 = vector.load %arg4[%c0_71, %c0_72, %c0_73] : memref<9x128x128xbf16, #tpu.memory_space<vmem>>, vector<1x128x128xbf16>
    %75 = vector.shape_cast %74 : vector<1x128x128xbf16> to vector<128x128xbf16>
    %cst_74 = arith.constant dense<0.000000e+00> : vector<64x128xf32>
    %76 = tpu.matmul %73, %75, %cst_74 {dimension_numbers = #tpu.dot_dimension_numbers<[1], [0], [0], [1], [0, 0, 1, 1], [], []>} : vector<64x128xbf16>, vector<128x128xbf16>, vector<64x128xf32> -> vector<64x128xf32>
    %c0_75 = arith.constant 0 : index
    %c1_76 = arith.constant 1 : index
    %c0_77 = arith.constant 0 : index
    %77 = vector.load %arg8[%c0_75, %c1_76, %c0_77] : memref<10x10x128xbf16, #tpu.memory_space<vmem>>, vector<8x8x128xbf16>
    %78 = vector.shape_cast %77 : vector<8x8x128xbf16> to vector<64x128xbf16>
    %c1_78 = arith.constant 1 : index
    %c0_79 = arith.constant 0 : index
    %c0_80 = arith.constant 0 : index
    %79 = vector.load %arg4[%c1_78, %c0_79, %c0_80] : memref<9x128x128xbf16, #tpu.memory_space<vmem>>, vector<1x128x128xbf16>
    %80 = vector.shape_cast %79 : vector<1x128x128xbf16> to vector<128x128xbf16>
    %cst_81 = arith.constant dense<0.000000e+00> : vector<64x128xf32>
    %81 = tpu.matmul %78, %80, %cst_81 {dimension_numbers = #tpu.dot_dimension_numbers<[1], [0], [0], [1], [0, 0, 1, 1], [], []>} : vector<64x128xbf16>, vector<128x128xbf16>, vector<64x128xf32> -> vector<64x128xf32>
    %82 = arith.addf %76, %81 : vector<64x128xf32>
    %c0_82 = arith.constant 0 : index
    %c2_83 = arith.constant 2 : index
    %c0_84 = arith.constant 0 : index
    %83 = vector.load %arg8[%c0_82, %c2_83, %c0_84] : memref<10x10x128xbf16, #tpu.memory_space<vmem>>, vector<8x8x128xbf16>
    %84 = vector.shape_cast %83 : vector<8x8x128xbf16> to vector<64x128xbf16>
    %c2_85 = arith.constant 2 : index
    %c0_86 = arith.constant 0 : index
    %c0_87 = arith.constant 0 : index
    %85 = vector.load %arg4[%c2_85, %c0_86, %c0_87] : memref<9x128x128xbf16, #tpu.memory_space<vmem>>, vector<1x128x128xbf16>
    %86 = vector.shape_cast %85 : vector<1x128x128xbf16> to vector<128x128xbf16>
    %cst_88 = arith.constant dense<0.000000e+00> : vector<64x128xf32>
    %87 = tpu.matmul %84, %86, %cst_88 {dimension_numbers = #tpu.dot_dimension_numbers<[1], [0], [0], [1], [0, 0, 1, 1], [], []>} : vector<64x128xbf16>, vector<128x128xbf16>, vector<64x128xf32> -> vector<64x128xf32>
    %88 = arith.addf %82, %87 : vector<64x128xf32>
    %c1_89 = arith.constant 1 : index
    %c0_90 = arith.constant 0 : index
    %c0_91 = arith.constant 0 : index
    %89 = vector.load %arg8[%c1_89, %c0_90, %c0_91] : memref<10x10x128xbf16, #tpu.memory_space<vmem>>, vector<8x8x128xbf16>
    %90 = vector.shape_cast %89 : vector<8x8x128xbf16> to vector<64x128xbf16>
    %c3_92 = arith.constant 3 : index
    %c0_93 = arith.constant 0 : index
    %c0_94 = arith.constant 0 : index
    %91 = vector.load %arg4[%c3_92, %c0_93, %c0_94] : memref<9x128x128xbf16, #tpu.memory_space<vmem>>, vector<1x128x128xbf16>
    %92 = vector.shape_cast %91 : vector<1x128x128xbf16> to vector<128x128xbf16>
    %cst_95 = arith.constant dense<0.000000e+00> : vector<64x128xf32>
    %93 = tpu.matmul %90, %92, %cst_95 {dimension_numbers = #tpu.dot_dimension_numbers<[1], [0], [0], [1], [0, 0, 1, 1], [], []>} : vector<64x128xbf16>, vector<128x128xbf16>, vector<64x128xf32> -> vector<64x128xf32>
    %94 = arith.addf %88, %93 : vector<64x128xf32>
    %c1_96 = arith.constant 1 : index
    %c1_97 = arith.constant 1 : index
    %c0_98 = arith.constant 0 : index
    %95 = vector.load %arg8[%c1_96, %c1_97, %c0_98] : memref<10x10x128xbf16, #tpu.memory_space<vmem>>, vector<8x8x128xbf16>
    %96 = vector.shape_cast %95 : vector<8x8x128xbf16> to vector<64x128xbf16>
    %c4_99 = arith.constant 4 : index
    %c0_100 = arith.constant 0 : index
    %c0_101 = arith.constant 0 : index
    %97 = vector.load %arg4[%c4_99, %c0_100, %c0_101] : memref<9x128x128xbf16, #tpu.memory_space<vmem>>, vector<1x128x128xbf16>
    %98 = vector.shape_cast %97 : vector<1x128x128xbf16> to vector<128x128xbf16>
    %cst_102 = arith.constant dense<0.000000e+00> : vector<64x128xf32>
    %99 = tpu.matmul %96, %98, %cst_102 {dimension_numbers = #tpu.dot_dimension_numbers<[1], [0], [0], [1], [0, 0, 1, 1], [], []>} : vector<64x128xbf16>, vector<128x128xbf16>, vector<64x128xf32> -> vector<64x128xf32>
    %100 = arith.addf %94, %99 : vector<64x128xf32>
    %c1_103 = arith.constant 1 : index
    %c2_104 = arith.constant 2 : index
    %c0_105 = arith.constant 0 : index
    %101 = vector.load %arg8[%c1_103, %c2_104, %c0_105] : memref<10x10x128xbf16, #tpu.memory_space<vmem>>, vector<8x8x128xbf16>
    %102 = vector.shape_cast %101 : vector<8x8x128xbf16> to vector<64x128xbf16>
    %c5_106 = arith.constant 5 : index
    %c0_107 = arith.constant 0 : index
    %c0_108 = arith.constant 0 : index
    %103 = vector.load %arg4[%c5_106, %c0_107, %c0_108] : memref<9x128x128xbf16, #tpu.memory_space<vmem>>, vector<1x128x128xbf16>
    %104 = vector.shape_cast %103 : vector<1x128x128xbf16> to vector<128x128xbf16>
    %cst_109 = arith.constant dense<0.000000e+00> : vector<64x128xf32>
    %105 = tpu.matmul %102, %104, %cst_109 {dimension_numbers = #tpu.dot_dimension_numbers<[1], [0], [0], [1], [0, 0, 1, 1], [], []>} : vector<64x128xbf16>, vector<128x128xbf16>, vector<64x128xf32> -> vector<64x128xf32>
    %106 = arith.addf %100, %105 : vector<64x128xf32>
    %c2_110 = arith.constant 2 : index
    %c0_111 = arith.constant 0 : index
    %c0_112 = arith.constant 0 : index
    %107 = vector.load %arg8[%c2_110, %c0_111, %c0_112] : memref<10x10x128xbf16, #tpu.memory_space<vmem>>, vector<8x8x128xbf16>
    %108 = vector.shape_cast %107 : vector<8x8x128xbf16> to vector<64x128xbf16>
    %c6_113 = arith.constant 6 : index
    %c0_114 = arith.constant 0 : index
    %c0_115 = arith.constant 0 : index
    %109 = vector.load %arg4[%c6_113, %c0_114, %c0_115] : memref<9x128x128xbf16, #tpu.memory_space<vmem>>, vector<1x128x128xbf16>
    %110 = vector.shape_cast %109 : vector<1x128x128xbf16> to vector<128x128xbf16>
    %cst_116 = arith.constant dense<0.000000e+00> : vector<64x128xf32>
    %111 = tpu.matmul %108, %110, %cst_116 {dimension_numbers = #tpu.dot_dimension_numbers<[1], [0], [0], [1], [0, 0, 1, 1], [], []>} : vector<64x128xbf16>, vector<128x128xbf16>, vector<64x128xf32> -> vector<64x128xf32>
    %112 = arith.addf %106, %111 : vector<64x128xf32>
    %c2_117 = arith.constant 2 : index
    %c1_118 = arith.constant 1 : index
    %c0_119 = arith.constant 0 : index
    %113 = vector.load %arg8[%c2_117, %c1_118, %c0_119] : memref<10x10x128xbf16, #tpu.memory_space<vmem>>, vector<8x8x128xbf16>
    %114 = vector.shape_cast %113 : vector<8x8x128xbf16> to vector<64x128xbf16>
    %c7_120 = arith.constant 7 : index
    %c0_121 = arith.constant 0 : index
    %c0_122 = arith.constant 0 : index
    %115 = vector.load %arg4[%c7_120, %c0_121, %c0_122] : memref<9x128x128xbf16, #tpu.memory_space<vmem>>, vector<1x128x128xbf16>
    %116 = vector.shape_cast %115 : vector<1x128x128xbf16> to vector<128x128xbf16>
    %cst_123 = arith.constant dense<0.000000e+00> : vector<64x128xf32>
    %117 = tpu.matmul %114, %116, %cst_123 {dimension_numbers = #tpu.dot_dimension_numbers<[1], [0], [0], [1], [0, 0, 1, 1], [], []>} : vector<64x128xbf16>, vector<128x128xbf16>, vector<64x128xf32> -> vector<64x128xf32>
    %118 = arith.addf %112, %117 : vector<64x128xf32>
    %c2_124 = arith.constant 2 : index
    %c2_125 = arith.constant 2 : index
    %c0_126 = arith.constant 0 : index
    %119 = vector.load %arg8[%c2_124, %c2_125, %c0_126] : memref<10x10x128xbf16, #tpu.memory_space<vmem>>, vector<8x8x128xbf16>
    %120 = vector.shape_cast %119 : vector<8x8x128xbf16> to vector<64x128xbf16>
    %c8_127 = arith.constant 8 : index
    %c0_128 = arith.constant 0 : index
    %c0_129 = arith.constant 0 : index
    %121 = vector.load %arg4[%c8_127, %c0_128, %c0_129] : memref<9x128x128xbf16, #tpu.memory_space<vmem>>, vector<1x128x128xbf16>
    %122 = vector.shape_cast %121 : vector<1x128x128xbf16> to vector<128x128xbf16>
    %cst_130 = arith.constant dense<0.000000e+00> : vector<64x128xf32>
    %123 = tpu.matmul %120, %122, %cst_130 {dimension_numbers = #tpu.dot_dimension_numbers<[1], [0], [0], [1], [0, 0, 1, 1], [], []>} : vector<64x128xbf16>, vector<128x128xbf16>, vector<64x128xf32> -> vector<64x128xf32>
    %124 = arith.addf %118, %123 : vector<64x128xf32>
    %c0_131 = arith.constant 0 : index
    %c0_132 = arith.constant 0 : index
    %125 = vector.load %arg5[%c0_131, %c0_132] : memref<1x128xf32, #tpu.memory_space<vmem>>, vector<1x128xf32>
    %126 = vector.broadcast %125 : vector<1x128xf32> to vector<64x128xf32>
    %127 = arith.addf %124, %126 : vector<64x128xf32>
    %c0_133 = arith.constant 0 : index
    %c27_134 = arith.constant 27 : index
    %c0_135 = arith.constant 0 : index
    %c0_136 = arith.constant 0 : index
    %128 = vector.load %arg1[%c0_133, %c27_134, %c0_135, %c0_136] : memref<1x36x9x4xbf16, #tpu.memory_space<vmem>>, vector<1x8x8x4xbf16>
    %129 = vector.shape_cast %128 : vector<1x8x8x4xbf16> to vector<8x8x4xbf16>
    %130 = vector.shape_cast %129 : vector<8x8x4xbf16> to vector<64x4xbf16>
    %c0_137 = arith.constant 0 : index
    %c0_138 = arith.constant 0 : index
    %131 = vector.load %arg6[%c0_137, %c0_138] : memref<4x128xbf16, #tpu.memory_space<vmem>>, vector<4x128xbf16>
    %cst_139 = arith.constant dense<0.000000e+00> : vector<64x128xf32>
    %132 = tpu.matmul %130, %131, %cst_139 {dimension_numbers = #tpu.dot_dimension_numbers<[1], [0], [0], [1], [0, 0, 1, 1], [], []>} : vector<64x4xbf16>, vector<4x128xbf16>, vector<64x128xf32> -> vector<64x128xf32>
    %133 = arith.addf %127, %132 : vector<64x128xf32>
    %cst_140 = arith.constant 0.000000e+00 : f32
    %134 = vector.broadcast %cst_140 : f32 to vector<64x128xf32>
    %135 = arith.maximumf %133, %134 : vector<64x128xf32>
    %136 = vector.shape_cast %135 : vector<64x128xf32> to vector<1x8x8x128xf32>
    %c0_141 = arith.constant 0 : index
    %c0_142 = arith.constant 0 : index
    %c0_143 = arith.constant 0 : index
    %c0_144 = arith.constant 0 : index
    %137 = vector.load %arg7[%c0_141, %c0_142, %c0_143, %c0_144] : memref<1x8x8x128xf32, #tpu.memory_space<vmem>>, vector<1x8x8x128xf32>
    tpu.vector_store %arg7[%c0_141, %c0_142, %c0_143, %c0_144], %136 {strides = array<i32>} : memref<1x8x8x128xf32, #tpu.memory_space<vmem>>, vector<1x8x8x128xf32>,
    return
  }
  func.func @transform_0(%arg0: i32) -> (i32, i32, i32, i32) {
    %c0_i32 = arith.constant 0 : i32
    %c0_i32_0 = arith.constant 0 : i32
    %c0_i32_1 = arith.constant 0 : i32
    %c0_i32_2 = arith.constant 0 : i32
    return %arg0, %c0_i32, %c0_i32_0, %c0_i32_1 : i32, i32, i32, i32
  }
  func.func @transform_1(%arg0: i32) -> (i32, i32, i32) {
    %c0_i32 = arith.constant 0 : i32
    %c0_i32_0 = arith.constant 0 : i32
    %c0_i32_1 = arith.constant 0 : i32
    %c0_i32_2 = arith.constant 0 : i32
    return %c0_i32, %c0_i32_0, %c0_i32_1 : i32, i32, i32
  }
  func.func @transform_2(%arg0: i32) -> (i32, i32) {
    %c0_i32 = arith.constant 0 : i32
    %c0_i32_0 = arith.constant 0 : i32
    %c0_i32_1 = arith.constant 0 : i32
    return %c0_i32, %c0_i32_0 : i32, i32
  }
  func.func @transform_3(%arg0: i32) -> (i32, i32, i32) {
    %c0_i32 = arith.constant 0 : i32
    %c0_i32_0 = arith.constant 0 : i32
    %c0_i32_1 = arith.constant 0 : i32
    %c0_i32_2 = arith.constant 0 : i32
    return %c0_i32, %c0_i32_0, %c0_i32_1 : i32, i32, i32
  }
  func.func @transform_4(%arg0: i32) -> (i32, i32) {
    %c0_i32 = arith.constant 0 : i32
    %c0_i32_0 = arith.constant 0 : i32
    %c0_i32_1 = arith.constant 0 : i32
    return %c0_i32, %c0_i32_0 : i32, i32
  }
  func.func @transform_5(%arg0: i32) -> (i32, i32) {
    %c0_i32 = arith.constant 0 : i32
    %c0_i32_0 = arith.constant 0 : i32
    %c0_i32_1 = arith.constant 0 : i32
    return %c0_i32, %c0_i32_0 : i32, i32
  }
  func.func @transform_6(%arg0: i32) -> (i32, i32, i32, i32) {
    %c0_i32 = arith.constant 0 : i32
    %c0_i32_0 = arith.constant 0 : i32
    %c0_i32_1 = arith.constant 0 : i32
    %c0_i32_2 = arith.constant 0 : i32
    return %arg0, %c0_i32, %c0_i32_0, %c0_i32_1 : i32, i32, i32, i32
  }
}

</mosaic_0001>

<llo_original>
// kernel: residual_forward_jit.1
$region0: #{residual_forward_jit.1}
  #allocation0 [shape = 'u32[]', space=smem, size = 0x4, offset = 0x4, fixed_abs, tag = 'smem constant byte address 0x4 - core index']
  #allocation1 [shape = 'u32[144,128]{1,0:T(1,128)}', space=vmem, size = 0x12000, scoped, tag = 'internal scratch']
  #allocation2 [shape = 'bf16[10,10,128]{2,1,0:T(8,128)(2,1)}', space=vmem, size = 0xa000, scoped, tag = 'scratch operand']
  %s0 = inlined_call_operand.vmem [shape: bf16[2,36,9,4], index: 0, kind: input, shape index: {}]
  %s1 = inlined_call_operand.vmem [shape: bf16[9,4,128], index: 1, kind: input, shape index: {}]
  %s2 = inlined_call_operand.vmem [shape: f32[1,128], index: 2, kind: input, shape index: {}]
  %s3 = inlined_call_operand.vmem [shape: bf16[9,128,128], index: 3, kind: input, shape index: {}]
  %s4 = inlined_call_operand.vmem [shape: f32[1,128], index: 4, kind: input, shape index: {}]
  %s5 = inlined_call_operand.vmem [shape: bf16[4,128], index: 5, kind: input, shape index: {}]
  %s6 = inlined_call_operand.vmem [shape: f32[2,8,8,128], index: 6, kind: output, shape index: {}]
  %s7 = sld [smem:[#allocation0]]
  $region57: #{residual_forward_jit.1} parent=0
    _
  %s9 = ssub.s32 1, %s7
  %s10 = scalar_select 0, %s9, %s7
  loop: start=0, step=1, limit=4
  $region2: #{residual_forward_jit.1} parent=0 // loop_pre_header
    _
  $region3: #{residual_forward_jit.1} parent=0 // loop_header
    %s12 = sphi 0, %s16
    %p13 = scmp.ge.s32.totalorder %s12, 4
    %s22 = sphi 0, %s24
    %s25 = sphi 0, %s22
    %s26 = sphi 0, %s25
    %s42 = sphi 0, %s26
    %s46 = sphi 0, %s46
    %s48 = sphi 0, %s46
    %s49 = sphi 0, %s48
    %s63 = sphi 0, %s49
    %s67 = sphi 0, %s67
    %s69 = sphi 0, %s67
    %s70 = sphi 0, %s69
    %s84 = sphi 0, %s70
    %s88 = sphi 0, %s88
    %s90 = sphi 0, %s88
    %s91 = sphi 0, %s90
    %s105 = sphi 0, %s91
    %s109 = sphi 0, %s109
    %s111 = sphi 0, %s109
    %s112 = sphi 0, %s111
    %s126 = sphi 0, %s112
    %s130 = sphi 0, %s130
    %s132 = sphi 0, %s130
    %s133 = sphi 0, %s132
    %s147 = sphi 0, %s133
    %s153 = sphi 0, %s155
    %s156 = sphi 0, %s153
    %s157 = sphi 0, %s156
    %s173 = sphi 0, %s157
  $region4: #{residual_forward_jit.1} parent=0 // loop_header_branch
    %15 = sbr.rel (%p13) target = $region8
  $region5: #{residual_forward_jit.1} parent=0 // loop_body
    %s17 = ssub.s32 %s12, 1
    %s18 = ssub.s32 %s12, 2
    %s19 = sadd.s32 %s12, 1
    %s20 = ssub.s32 %s12, %s19
    %p21 = scmp.eq.s32.totalorder %s20, 0
    %s23 = sadd.s32 %s22, 1
    %s24 = scalar_select %p21, %s22, %s23
    %p27 = pneg %p21
    %p28 = scmp.eq.s32.totalorder %s12, 1
    %p29 = por %p27, %p28
    %p30 = scmp.ne.s32.totalorder %s22, %s25
    %p31 = scmp.eq.s32.totalorder %s12, 0
    %p32 = por %p30, %p31
    %p33 = scmp.ne.s32.totalorder %s22, %s25
    %p34 = scmp.eq.s32.totalorder %s17, 1
    %p35 = por %p33, %p34
    %p36 = scmp.ne.s32.totalorder %s25, %s26
    %p37 = scmp.eq.s32.totalorder %s17, 0
    %p38 = por %p36, %p37
    %p39 = scmp.ne.s32.totalorder %s25, %s26
    %p40 = scmp.eq.s32.totalorder %s18, 1
    %p41 = por %p39, %p40
    %p43 = scmp.ne.s32.totalorder %s26, %s42
    %p44 = scmp.eq.s32.totalorder %s18, 0
    %p45 = por %p43, %p44
    %s47 = sadd.s32 %s46, 1
    %p50 = scmp.eq.s32.totalorder %s12, 1
    %p51 = scmp.ne.s32.totalorder %s46, %s48
    %p52 = scmp.eq.s32.totalorder %s12, 0
    %p53 = por %p51, %p52
    %p54 = scmp.ne.s32.totalorder %s46, %s48
    %p55 = scmp.eq.s32.totalorder %s17, 1
    %p56 = por %p54, %p55
    %p57 = scmp.ne.s32.totalorder %s48, %s49
    %p58 = scmp.eq.s32.totalorder %s17, 0
    %p59 = por %p57, %p58
    %p60 = scmp.ne.s32.totalorder %s48, %s49
    %p61 = scmp.eq.s32.totalorder %s18, 1
    %p62 = por %p60, %p61
    %p64 = scmp.ne.s32.totalorder %s49, %s63
    %p65 = scmp.eq.s32.totalorder %s18, 0
    %p66 = por %p64, %p65
    %s68 = sadd.s32 %s67, 1
    %p71 = scmp.eq.s32.totalorder %s12, 1
    %p72 = scmp.ne.s32.totalorder %s67, %s69
    %p73 = scmp.eq.s32.totalorder %s12, 0
    %p74 = por %p72, %p73
    %p75 = scmp.ne.s32.totalorder %s67, %s69
    %p76 = scmp.eq.s32.totalorder %s17, 1
    %p77 = por %p75, %p76
    %p78 = scmp.ne.s32.totalorder %s69, %s70
    %p79 = scmp.eq.s32.totalorder %s17, 0
    %p80 = por %p78, %p79
    %p81 = scmp.ne.s32.totalorder %s69, %s70
    %p82 = scmp.eq.s32.totalorder %s18, 1
    %p83 = por %p81, %p82
    %p85 = scmp.ne.s32.totalorder %s70, %s84
    %p86 = scmp.eq.s32.totalorder %s18, 0
    %p87 = por %p85, %p86
    %s89 = sadd.s32 %s88, 1
    %p92 = scmp.eq.s32.totalorder %s12, 1
    %p93 = scmp.ne.s32.totalorder %s88, %s90
    %p94 = scmp.eq.s32.totalorder %s12, 0
    %p95 = por %p93, %p94
    %p96 = scmp.ne.s32.totalorder %s88, %s90
    %p97 = scmp.eq.s32.totalorder %s17, 1
    %p98 = por %p96, %p97
    %p99 = scmp.ne.s32.totalorder %s90, %s91
    %p100 = scmp.eq.s32.totalorder %s17, 0
    %p101 = por %p99, %p100
    %p102 = scmp.ne.s32.totalorder %s90, %s91
    %p103 = scmp.eq.s32.totalorder %s18, 1
    %p104 = por %p102, %p103
    %p106 = scmp.ne.s32.totalorder %s91, %s105
    %p107 = scmp.eq.s32.totalorder %s18, 0
    %p108 = por %p106, %p107
    %s110 = sadd.s32 %s109, 1
    %p113 = scmp.eq.s32.totalorder %s12, 1
    %p114 = scmp.ne.s32.totalorder %s109, %s111
    %p115 = scmp.eq.s32.totalorder %s12, 0
    %p116 = por %p114, %p115
    %p117 = scmp.ne.s32.totalorder %s109, %s111
    %p118 = scmp.eq.s32.totalorder %s17, 1
    %p119 = por %p117, %p118
    %p120 = scmp.ne.s32.totalorder %s111, %s112
    %p121 = scmp.eq.s32.totalorder %s17, 0
    %p122 = por %p120, %p121
    %p123 = scmp.ne.s32.totalorder %s111, %s112
    %p124 = scmp.eq.s32.totalorder %s18, 1
    %p125 = por %p123, %p124
    %p127 = scmp.ne.s32.totalorder %s112, %s126
    %p128 = scmp.eq.s32.totalorder %s18, 0
    %p129 = por %p127, %p128
    %s131 = sadd.s32 %s130, 1
    %p134 = scmp.eq.s32.totalorder %s12, 1
    %p135 = scmp.ne.s32.totalorder %s130, %s132
    %p136 = scmp.eq.s32.totalorder %s12, 0
    %p137 = por %p135, %p136
    %p138 = scmp.ne.s32.totalorder %s130, %s132
    %p139 = scmp.eq.s32.totalorder %s17, 1
    %p140 = por %p138, %p139
    %p141 = scmp.ne.s32.totalorder %s132, %s133
    %p142 = scmp.eq.s32.totalorder %s17, 0
    %p143 = por %p141, %p142
    %p144 = scmp.ne.s32.totalorder %s132, %s133
    %p145 = scmp.eq.s32.totalorder %s18, 1
    %p146 = por %p144, %p145
    %p148 = scmp.ne.s32.totalorder %s133, %s147
    %p149 = scmp.eq.s32.totalorder %s18, 0
    %p150 = por %p148, %p149
    %s151 = ssub.s32 %s12, %s19
    %p152 = scmp.eq.s32.totalorder %s151, 0
    %s154 = sadd.s32 %s153, 1
    %s155 = scalar_select %p152, %s153, %s154
    %p158 = pneg %p152
    %p159 = scmp.eq.s32.totalorder %s12, 1
    %p160 = por %p158, %p159
    %p161 = scmp.ne.s32.totalorder %s153, %s156
    %p162 = scmp.eq.s32.totalorder %s12, 0
    %p163 = por %p161, %p162
    %p164 = scmp.ne.s32.totalorder %s153, %s156
    %p165 = scmp.eq.s32.totalorder %s17, 1
    %p166 = por %p164, %p165
    %p167 = scmp.ne.s32.totalorder %s156, %s157
    %p168 = scmp.eq.s32.totalorder %s17, 0
    %p169 = por %p167, %p168
    %p170 = scmp.ne.s32.totalorder %s156, %s157
    %p171 = scmp.eq.s32.totalorder %s18, 1
    %p172 = por %p170, %p171
    %p174 = scmp.ne.s32.totalorder %s157, %s173
    %p175 = scmp.eq.s32.totalorder %s18, 0
    %p176 = por %p174, %p175
    %p177 = scmp.le.s32.totalorder 1, %s12
    %p178 = scmp.lt.s32.totalorder %s12, 3
    %p179 = pnand %p177, %p178
    %p180 = pneg %p179
    // Predicated region
    $region9: #{residual_forward_jit.1} parent=5 // pred_check
      _
    $region10: #{residual_forward_jit.1} parent=5 // pred_check_branch
      %182 = sbr.rel (%p179) target = $region12
    $region11: #{residual_forward_jit.1} parent=5 // pred_region
      %s183 = ssub.s32 %s12, 1
      // Predicated region
      $region13: #{residual_forward_jit.1} parent=11 // pred_check
        %p184 = pneg %p59
      $region14: #{residual_forward_jit.1} parent=11 // pred_check_branch
        %186 = sbr.rel (%p184) target = $region16
      $region15: #{residual_forward_jit.1} parent=11 // pred_region
        _
      $region16: #{residual_forward_jit.1} parent=11 // pred_fallthru
        _
      // Predicated region
      $region17: #{residual_forward_jit.1} parent=11 // pred_check
        %p187 = pneg %p80
      $region18: #{residual_forward_jit.1} parent=11 // pred_check_branch
        %189 = sbr.rel (%p187) target = $region20
      $region19: #{residual_forward_jit.1} parent=11 // pred_region
        _
      $region20: #{residual_forward_jit.1} parent=11 // pred_fallthru
        _
      // Predicated region
      $region21: #{residual_forward_jit.1} parent=11 // pred_check
        %p190 = pneg %p101
      $region22: #{residual_forward_jit.1} parent=11 // pred_check_branch
        %192 = sbr.rel (%p190) target = $region24
      $region23: #{residual_forward_jit.1} parent=11 // pred_region
        _
      $region24: #{residual_forward_jit.1} parent=11 // pred_fallthru
        _
      // Predicated region
      $region25: #{residual_forward_jit.1} parent=11 // pred_check
        %p193 = pneg %p122
      $region26: #{residual_forward_jit.1} parent=11 // pred_check_branch
        %195 = sbr.rel (%p193) target = $region28
      $region27: #{residual_forward_jit.1} parent=11 // pred_region
        _
      $region28: #{residual_forward_jit.1} parent=11 // pred_fallthru
        _
      // Predicated region
      $region29: #{residual_forward_jit.1} parent=11 // pred_check
        %p196 = pneg %p143
      $region30: #{residual_forward_jit.1} parent=11 // pred_check_branch
        %198 = sbr.rel (%p196) target = $region32
      $region31: #{residual_forward_jit.1} parent=11 // pred_region
        _
      $region32: #{residual_forward_jit.1} parent=11 // pred_fallthru
        _
    $region12: #{residual_forward_jit.1} parent=5 // pred_fallthru
      _
    %p199 = scmp.lt.s32.totalorder %s12, 2
    // Predicated region
    $region33: #{residual_forward_jit.1} parent=5 // pred_check
      %p200 = pneg %p199
    $region34: #{residual_forward_jit.1} parent=5 // pred_check_branch
      %202 = sbr.rel (%p200) target = $region36
    $region35: #{residual_forward_jit.1} parent=5 // pred_region
      // Predicated region
      $region37: #{residual_forward_jit.1} parent=35 // pred_check
        %p203 = pneg %p32
      $region38: #{residual_forward_jit.1} parent=35 // pred_check_branch
        %205 = sbr.rel (%p203) target = $region40
      $region39: #{residual_forward_jit.1} parent=35 // pred_region
        %p206 = scmp.lt.s32.totalorder %s12, 1
        %s207 = scalar_select %p206, %s12, 1
        %s208 = smul.addr %s207, 72
        %s209 = smul.addr %s208, 4
        %s210 = scalar_lea.vmem %s0, %s209
      $region40: #{residual_forward_jit.1} parent=35 // pred_fallthru
        _
    $region36: #{residual_forward_jit.1} parent=5 // pred_fallthru
      _
    %p211 = scmp.le.s32.totalorder 1, %s12
    %p212 = scmp.lt.s32.totalorder %s12, 3
    %p213 = pnand %p211, %p212
    %p214 = pneg %p213
    // Predicated region
    $region41: #{residual_forward_jit.1} parent=5 // pred_check
      _
    $region42: #{residual_forward_jit.1} parent=5 // pred_check_branch
      %216 = sbr.rel (%p213) target = $region44
    $region43: #{residual_forward_jit.1} parent=5 // pred_region
      %s217 = ssub.s32 %s12, 1
      %p218 = scmp.lt.s32.totalorder %s17, 1
      %s219 = scalar_select %p218, %s17, 1
      %s220 = smul.addr %s219, 72
      %s221 = smul.addr %s220, 4
      %s222 = scalar_lea.vmem %s0, %s221
      %p223 = pneg %p38
      %p224 = pneg %p35
      %p225 = pneg %p59
      %p226 = pneg %p56
      %p227 = pneg %p80
      %p228 = pneg %p77
      %p229 = pneg %p101
      %p230 = pneg %p98
      %p231 = pneg %p122
      %p232 = pneg %p119
      %p233 = pneg %p143
      %p234 = pneg %p140
      %p235 = pneg %p169
      %p236 = pneg %p166
      %p237 = scmp.lt.s32.totalorder %s17, 1
      %s238 = scalar_select %p237, %s17, 1
      %s239 = smul.addr %s238, 8
      %s240 = smul.addr %s239, 8
      %s241 = scalar_lea.vmem %s6, %s240
      %p242 = scmp.lt.s32.totalorder %s17, 1
      %s243 = scalar_select %p242, %s17, 1
      %s244 = smul.addr %s243, 72
      %s245 = smul.addr %s244, 4
      %s246 = scalar_lea.vmem %s0, %s245
      %p247 = scmp.lt.s32.totalorder %s17, 1
      %s248 = scalar_select %p247, %s17, 1
      %s249 = smul.addr %s248, 8
      %s250 = smul.addr %s249, 8
      %s251 = scalar_lea.vmem %s6, %s250
      %v253 = vld [vmem:[%s246] sm:$0xf]
      %v254 = vld [vmem:[%s246 + $0x8] sm:$0xf]
      %v255 = vld [vmem:[%s246 + $0x10] sm:$0xf]
      %v256 = vld [vmem:[%s246 + $0x18] sm:$0xf]
      %v257 = vld [vmem:[%s246 + $0x20] sm:$0xf]
      %v258 = vld [vmem:[%s246 + $0x28] sm:$0xf]
      %v259 = vld [vmem:[%s246 + $0x30] sm:$0xf]
      %v260 = vld [vmem:[%s246 + $0x38] sm:$0xf]
      %v261 = vld [vmem:[%s1] sm:$0x3]
      %s262 = scalar_lea.vmem %s246, 72
      %v263 = vld [vmem:[%s262] sm:$0xf]
      %v264 = vld [vmem:[%s262 + $0x8] sm:$0xf]
      %v265 = vld [vmem:[%s262 + $0x10] sm:$0xf]
      %v266 = vld [vmem:[%s262 + $0x18] sm:$0xf]
      %v267 = vld [vmem:[%s262 + $0x20] sm:$0xf]
      %v268 = vld [vmem:[%s262 + $0x28] sm:$0xf]
      %v269 = vld [vmem:[%s262 + $0x30] sm:$0xf]
      %v270 = vld [vmem:[%s262 + $0x38] sm:$0xf]
      %s271 = scalar_lea.vmem %s1, 2
      %v272 = vld [vmem:[%s271] sm:$0x3]
      %v281 = vunpack.c.l.b16 %v263
      %v282 = vunpack.c.l.b16 %v264
      %v283 = vunpack.c.l.b16 %v265
      %v284 = vunpack.c.l.b16 %v266
      %v285 = vunpack.c.l.b16 %v267
      %v286 = vunpack.c.l.b16 %v268
      %v287 = vunpack.c.l.b16 %v269
      %v288 = vunpack.c.l.b16 %v270
      %v289 = vpack.c.b16 %v282, %v281
      %v290 = vpack.c.b16 %v284, %v283
      %v291 = vpack.c.b16 %v286, %v285
      %v292 = vpack.c.b16 %v288, %v287
      %vm293 = vcmask 31744
      %v295 = vsel %vm293, %v289, 0
      %v298 = vsel %vm293, %v290, 0
      %v301 = vsel %vm293, %v291, 0
      %v304 = vsel %vm293, %v292, 0
      %vm306 = vcmask 1041408
      %v308 = vsel %vm306, %v272, 0
      %310 = vmatprep.subr.bf16.mxu0 0
      %311 = vmatpush1.bf16.msra.mxu0 %v308
      %312 = vmatprep.subr.bf16.mxu0 0
      %313 = vmatpush1.bf16.msra.mxu0 0
      %314 = vmatprep.subr.bf16.mxu0 0
      %315 = vmatpush1.bf16.msra.mxu0 0
      %316 = vmatprep.subr.bf16.mxu0 0
      %317 = vmatpush1.bf16.msra.mxu0 0
      %318 = vmatprep.subr.bf16.mxu0 0
      %319 = vmatpush1.bf16.msra.mxu0 0
      %320 = vmatprep.subr.bf16.mxu0 0
      %321 = vmatpush1.bf16.msra.mxu0 0
      %322 = vmatprep.subr.bf16.mxu0 0
      %323 = vmatpush1.bf16.msra.mxu0 0
      %324 = vmatprep.subr.bf16.mxu0 0
      %325 = vmatpush1.bf16.msra.mxu0 0
      %326 = vmatprep.subr.bf16.mxu0 0
      %327 = vmatpush1.bf16.msra.mxu0 0
      %328 = vmatprep.subr.bf16.mxu0 0
      %329 = vmatpush1.bf16.msra.mxu0 0
      %330 = vmatprep.subr.bf16.mxu0 0
      %331 = vmatpush1.bf16.msra.mxu0 0
      %332 = vmatprep.subr.bf16.mxu0 0
      %333 = vmatpush1.bf16.msra.mxu0 0
      %334 = vmatprep.subr.bf16.mxu0 0
      %335 = vmatpush1.bf16.msra.mxu0 0
      %336 = vmatprep.subr.bf16.mxu0 0
      %337 = vmatpush1.bf16.msra.mxu0 0
      %338 = vmatprep.subr.bf16.mxu0 0
      %339 = vmatpush1.bf16.msra.mxu0 0
      %340 = vmatprep.subr.bf16.mxu0 0
      %341 = vmatpush1.bf16.msra.mxu0 0
      %342 = vmatprep.mubr.bf16.mxu0 0
      %343 = vmatmul.mubr.bf16.gmra.mrb[0].mxu0 %v295
      %v344 = vpop.f32.mrb[0].mxu0
      %v345 = vadd.f32 0.0, %v344
      %v346 = vpop.f32.mrb[0].mxu0
      %v347 = vpop.f32.mrb[0].mxu0
      %v348 = vadd.f32 0.0, %v347
      %v349 = vpop.f32.mrb[0].mxu0
      %350 = vmatprep.mubr.bf16.mxu0 0
      %351 = vmatmul.mubr.bf16.gmra.mrb[0].mxu0 %v298
      %v352 = vpop.f32.mrb[0].mxu0
      %v353 = vadd.f32 0.0, %v352
      %v354 = vpop.f32.mrb[0].mxu0
      %v355 = vpop.f32.mrb[0].mxu0
      %v356 = vadd.f32 0.0, %v355
      %v357 = vpop.f32.mrb[0].mxu0
      %358 = vmatprep.mubr.bf16.mxu0 0
      %359 = vmatmul.mubr.bf16.gmra.mrb[0].mxu0 %v301
      %v360 = vpop.f32.mrb[0].mxu0
      %v361 = vadd.f32 0.0, %v360
      %v362 = vpop.f32.mrb[0].mxu0
      %v363 = vpop.f32.mrb[0].mxu0
      %v364 = vadd.f32 0.0, %v363
      %v365 = vpop.f32.mrb[0].mxu0
      %366 = vmatprep.mubr.bf16.mxu0 0
      %367 = vmatmul.mubr.bf16.gmra.mrb[0].mxu0 %v304
      %v368 = vpop.f32.mrb[0].mxu0
      %v369 = vadd.f32 0.0, %v368
      %v370 = vpop.f32.mrb[0].mxu0
      %v371 = vpop.f32.mrb[0].mxu0
      %v372 = vadd.f32 0.0, %v371
      %v373 = vpop.f32.mrb[0].mxu0
      %374 = vdwg.mxu0
      %v383 = vunpack.c.l.b16 %v253
      %v384 = vunpack.c.l.b16 %v254
      %v385 = vunpack.c.l.b16 %v255
      %v386 = vunpack.c.l.b16 %v256
      %v387 = vunpack.c.l.b16 %v257
      %v388 = vunpack.c.l.b16 %v258
      %v389 = vunpack.c.l.b16 %v259
      %v390 = vunpack.c.l.b16 %v260
      %v391 = vpack.c.b16 %v384, %v383
      %v392 = vpack.c.b16 %v386, %v385
      %v393 = vpack.c.b16 %v388, %v387
      %v394 = vpack.c.b16 %v390, %v389
      %v396 = vsel %vm293, %v391, 0
      %v399 = vsel %vm293, %v392, 0
      %v402 = vsel %vm293, %v393, 0
      %v405 = vsel %vm293, %v394, 0
      %v408 = vsel %vm306, %v261, 0
      %410 = vmatprep.subr.bf16.mxu0 0
      %411 = vmatpush1.bf16.msra.mxu0 %v408
      %412 = vmatprep.subr.bf16.mxu0 0
      %413 = vmatpush1.bf16.msra.mxu0 0
      %414 = vmatprep.subr.bf16.mxu0 0
      %415 = vmatpush1.bf16.msra.mxu0 0
      %416 = vmatprep.subr.bf16.mxu0 0
      %417 = vmatpush1.bf16.msra.mxu0 0
      %418 = vmatprep.subr.bf16.mxu0 0
      %419 = vmatpush1.bf16.msra.mxu0 0
      %420 = vmatprep.subr.bf16.mxu0 0
      %421 = vmatpush1.bf16.msra.mxu0 0
      %422 = vmatprep.subr.bf16.mxu0 0
      %423 = vmatpush1.bf16.msra.mxu0 0
      %424 = vmatprep.subr.bf16.mxu0 0
      %425 = vmatpush1.bf16.msra.mxu0 0
      %426 = vmatprep.subr.bf16.mxu0 0
      %427 = vmatpush1.bf16.msra.mxu0 0
      %428 = vmatprep.subr.bf16.mxu0 0
      %429 = vmatpush1.bf16.msra.mxu0 0
      %430 = vmatprep.subr.bf16.mxu0 0
      %431 = vmatpush1.bf16.msra.mxu0 0
      %432 = vmatprep.subr.bf16.mxu0 0
      %433 = vmatpush1.bf16.msra.mxu0 0
      %434 = vmatprep.subr.bf16.mxu0 0
      %435 = vmatpush1.bf16.msra.mxu0 0
      %436 = vmatprep.subr.bf16.mxu0 0
      %437 = vmatpush1.bf16.msra.mxu0 0
      %438 = vmatprep.subr.bf16.mxu0 0
      %439 = vmatpush1.bf16.msra.mxu0 0
      %440 = vmatprep.subr.bf16.mxu0 0
      %441 = vmatpush1.bf16.msra.mxu0 0
      %442 = vmatprep.mubr.bf16.mxu0 0
      %443 = vmatmul.mubr.bf16.gmra.mrb[0].mxu0 %v396
      %v444 = vpop.f32.mrb[0].mxu0
      %v445 = vadd.f32 %v345, %v444
      %v446 = vpop.f32.mrb[0].mxu0
      %v447 = vpop.f32.mrb[0].mxu0
      %v448 = vadd.f32 %v348, %v447
      %v449 = vpop.f32.mrb[0].mxu0
      %450 = vmatprep.mubr.bf16.mxu0 0
      %451 = vmatmul.mubr.bf16.gmra.mrb[0].mxu0 %v399
      %v452 = vpop.f32.mrb[0].mxu0
      %v453 = vadd.f32 %v353, %v452
      %v454 = vpop.f32.mrb[0].mxu0
      %v455 = vpop.f32.mrb[0].mxu0
      %v456 = vadd.f32 %v356, %v455
      %v457 = vpop.f32.mrb[0].mxu0
      %458 = vmatprep.mubr.bf16.mxu0 0
      %459 = vmatmul.mubr.bf16.gmra.mrb[0].mxu0 %v402
      %v460 = vpop.f32.mrb[0].mxu0
      %v461 = vadd.f32 %v361, %v460
      %v462 = vpop.f32.mrb[0].mxu0
      %v463 = vpop.f32.mrb[0].mxu0
      %v464 = vadd.f32 %v364, %v463
      %v465 = vpop.f32.mrb[0].mxu0
      %466 = vmatprep.mubr.bf16.mxu0 0
      %467 = vmatmul.mubr.bf16.gmra.mrb[0].mxu0 %v405
      %v468 = vpop.f32.mrb[0].mxu0
      %v469 = vadd.f32 %v369, %v468
      %v470 = vpop.f32.mrb[0].mxu0
      %v471 = vpop.f32.mrb[0].mxu0
      %v472 = vadd.f32 %v372, %v471
      %v473 = vpop.f32.mrb[0].mxu0
      %474 = vdwg.mxu0
      %v475 = vld [vmem:[%s246] sm:$0xf]
      %v476 = vld [vmem:[%s246 + $0x4] sm:$0x1]
      %v477 = vld [vmem:[%s246 + $0x8] sm:$0xf]
      %v478 = vld [vmem:[%s246 + $0xc] sm:$0x1]
      %v479 = vld [vmem:[%s246 + $0x10] sm:$0xf]
      %v480 = vld [vmem:[%s246 + $0x14] sm:$0x1]
      %v481 = vld [vmem:[%s246 + $0x18] sm:$0xf]
      %v482 = vld [vmem:[%s246 + $0x1c] sm:$0x1]
      %v483 = vld [vmem:[%s246 + $0x20] sm:$0xf]
      %v484 = vld [vmem:[%s246 + $0x24] sm:$0x1]
      %v485 = vld [vmem:[%s246 + $0x28] sm:$0xf]
      %v486 = vld [vmem:[%s246 + $0x2c] sm:$0x1]
      %v487 = vld [vmem:[%s246 + $0x30] sm:$0xf]
      %v488 = vld [vmem:[%s246 + $0x34] sm:$0x1]
      %v489 = vld [vmem:[%s246 + $0x38] sm:$0xf]
      %v490 = vld [vmem:[%s246 + $0x3c] sm:$0x1]
      %vm491 = vsmask.f32 3328
      %vm492 = vsmask.f32 7440
      %vm493 = vmor %vm491, %vm492
      %v495 = vshrl.u32 %v475, 16
      %v497 = vrot.slane %v495, 4
      %v498 = vshll.u32 %v475, 16
      %v500 = vrot.slane %v498, 5
      %v501 = vor.u32 %v497, %v500
      %v502 = vrot.slane %v501, 4
      %v504 = vshll.u32 %v476, 16
      %v506 = vrot.slane %v504, 5
      %v507 = vsel %vm493, %v502, %v506
      %v509 = vshrl.u32 %v477, 16
      %v511 = vrot.slane %v509, 4
      %v512 = vshll.u32 %v477, 16
      %v514 = vrot.slane %v512, 5
      %v515 = vor.u32 %v511, %v514
      %v516 = vrot.slane %v515, 4
      %v518 = vshll.u32 %v478, 16
      %v520 = vrot.slane %v518, 5
      %v521 = vsel %vm493, %v516, %v520
      %v523 = vshrl.u32 %v479, 16
      %v525 = vrot.slane %v523, 4
      %v526 = vshll.u32 %v479, 16
      %v528 = vrot.slane %v526, 5
      %v529 = vor.u32 %v525, %v528
      %v530 = vrot.slane %v529, 4
      %v532 = vshll.u32 %v480, 16
      %v534 = vrot.slane %v532, 5
      %v535 = vsel %vm493, %v530, %v534
      %v537 = vshrl.u32 %v481, 16
      %v539 = vrot.slane %v537, 4
      %v540 = vshll.u32 %v481, 16
      %v542 = vrot.slane %v540, 5
      %v543 = vor.u32 %v539, %v542
      %v544 = vrot.slane %v543, 4
      %v546 = vshll.u32 %v482, 16
      %v548 = vrot.slane %v546, 5
      %v549 = vsel %vm493, %v544, %v548
      %v551 = vshrl.u32 %v483, 16
      %v553 = vrot.slane %v551, 4
      %v554 = vshll.u32 %v483, 16
      %v556 = vrot.slane %v554, 5
      %v557 = vor.u32 %v553, %v556
      %v558 = vrot.slane %v557, 4
      %v560 = vshll.u32 %v484, 16
      %v562 = vrot.slane %v560, 5
      %v563 = vsel %vm493, %v558, %v562
      %v565 = vshrl.u32 %v485, 16
      %v567 = vrot.slane %v565, 4
      %v568 = vshll.u32 %v485, 16
      %v570 = vrot.slane %v568, 5
      %v571 = vor.u32 %v567, %v570
      %v572 = vrot.slane %v571, 4
      %v574 = vshll.u32 %v486, 16
      %v576 = vrot.slane %v574, 5
      %v577 = vsel %vm493, %v572, %v576
      %v579 = vshrl.u32 %v487, 16
      %v581 = vrot.slane %v579, 4
      %v582 = vshll.u32 %v487, 16
      %v584 = vrot.slane %v582, 5
      %v585 = vor.u32 %v581, %v584
      %v586 = vrot.slane %v585, 4
      %v588 = vshll.u32 %v488, 16
      %v590 = vrot.slane %v588, 5
      %v591 = vsel %vm493, %v586, %v590
      %v593 = vshrl.u32 %v489, 16
      %v595 = vrot.slane %v593, 4
      %v596 = vshll.u32 %v489, 16
      %v598 = vrot.slane %v596, 5
      %v599 = vor.u32 %v595, %v598
      %v600 = vrot.slane %v599, 4
      %v602 = vshll.u32 %v490, 16
      %v604 = vrot.slane %v602, 5
      %v605 = vsel %vm493, %v600, %v604
      %s606 = scalar_lea.vmem %s1, 4
      %v607 = vld [vmem:[%s606] sm:$0x3]
      %v608 = vunpack.c.l.b16 %v507
      %v609 = vunpack.c.l.b16 %v521
      %v610 = vunpack.c.l.b16 %v535
      %v611 = vunpack.c.l.b16 %v549
      %v612 = vunpack.c.l.b16 %v563
      %v613 = vunpack.c.l.b16 %v577
      %v614 = vunpack.c.l.b16 %v591
      %v615 = vunpack.c.l.b16 %v605
      %v616 = vpack.c.b16 %v609, %v608
      %v617 = vpack.c.b16 %v611, %v610
      %v618 = vpack.c.b16 %v613, %v612
      %v619 = vpack.c.b16 %v615, %v614
      %v621 = vsel %vm293, %v616, 0
      %v624 = vsel %vm293, %v617, 0
      %v627 = vsel %vm293, %v618, 0
      %v630 = vsel %vm293, %v619, 0
      %v633 = vsel %vm306, %v607, 0
      %635 = vmatprep.subr.bf16.mxu0 0
      %636 = vmatpush1.bf16.msra.mxu0 %v633
      %637 = vmatprep.subr.bf16.mxu0 0
      %638 = vmatpush1.bf16.msra.mxu0 0
      %639 = vmatprep.subr.bf16.mxu0 0
      %640 = vmatpush1.bf16.msra.mxu0 0
      %641 = vmatprep.subr.bf16.mxu0 0
      %642 = vmatpush1.bf16.msra.mxu0 0
      %643 = vmatprep.subr.bf16.mxu0 0
      %644 = vmatpush1.bf16.msra.mxu0 0
      %645 = vmatprep.subr.bf16.mxu0 0
      %646 = vmatpush1.bf16.msra.mxu0 0
      %647 = vmatprep.subr.bf16.mxu0 0
      %648 = vmatpush1.bf16.msra.mxu0 0
      %649 = vmatprep.subr.bf16.mxu0 0
      %650 = vmatpush1.bf16.msra.mxu0 0
      %651 = vmatprep.subr.bf16.mxu0 0
      %652 = vmatpush1.bf16.msra.mxu0 0
      %653 = vmatprep.subr.bf16.mxu0 0
      %654 = vmatpush1.bf16.msra.mxu0 0
      %655 = vmatprep.subr.bf16.mxu0 0
      %656 = vmatpush1.bf16.msra.mxu0 0
      %657 = vmatprep.subr.bf16.mxu0 0
      %658 = vmatpush1.bf16.msra.mxu0 0
      %659 = vmatprep.subr.bf16.mxu0 0
      %660 = vmatpush1.bf16.msra.mxu0 0
      %661 = vmatprep.subr.bf16.mxu0 0
      %662 = vmatpush1.bf16.msra.mxu0 0
      %663 = vmatprep.subr.bf16.mxu0 0
      %664 = vmatpush1.bf16.msra.mxu0 0
      %665 = vmatprep.subr.bf16.mxu0 0
      %666 = vmatpush1.bf16.msra.mxu0 0
      %667 = vmatprep.mubr.bf16.mxu0 0
      %668 = vmatmul.mubr.bf16.gmra.mrb[0].mxu0 %v621
      %v669 = vpop.f32.mrb[0].mxu0
      %v670 = vadd.f32 0.0, %v669
      %v671 = vpop.f32.mrb[0].mxu0
      %v672 = vpop.f32.mrb[0].mxu0
      %v673 = vadd.f32 0.0, %v672
      %v674 = vpop.f32.mrb[0].mxu0
      %675 = vmatprep.mubr.bf16.mxu0 0
      %676 = vmatmul.mubr.bf16.gmra.mrb[0].mxu0 %v624
      %v677 = vpop.f32.mrb[0].mxu0
      %v678 = vadd.f32 0.0, %v677
      %v679 = vpop.f32.mrb[0].mxu0
      %v680 = vpop.f32.mrb[0].mxu0
      %v681 = vadd.f32 0.0, %v680
      %v682 = vpop.f32.mrb[0].mxu0
      %683 = vmatprep.mubr.bf16.mxu0 0
      %684 = vmatmul.mubr.bf16.gmra.mrb[0].mxu0 %v627
      %v685 = vpop.f32.mrb[0].mxu0
      %v686 = vadd.f32 0.0, %v685
      %v687 = vpop.f32.mrb[0].mxu0
      %v688 = vpop.f32.mrb[0].mxu0
      %v689 = vadd.f32 0.0, %v688
      %v690 = vpop.f32.mrb[0].mxu0
      %691 = vmatprep.mubr.bf16.mxu0 0
      %692 = vmatmul.mubr.bf16.gmra.mrb[0].mxu0 %v630
      %v693 = vpop.f32.mrb[0].mxu0
      %v694 = vadd.f32 0.0, %v693
      %v695 = vpop.f32.mrb[0].mxu0
      %v696 = vpop.f32.mrb[0].mxu0
      %v697 = vadd.f32 0.0, %v696
      %v698 = vpop.f32.mrb[0].mxu0
      %699 = vdwg.mxu0
      %v700 = vadd.f32 %v445, %v670
      %v701 = vadd.f32 %v448, %v673
      %v702 = vadd.f32 %v453, %v678
      %v703 = vadd.f32 %v456, %v681
      %v704 = vadd.f32 %v461, %v686
      %v705 = vadd.f32 %v464, %v689
      %v706 = vadd.f32 %v469, %v694
      %v707 = vadd.f32 %v472, %v697
      %s708 = scalar_lea.vmem %s246, 144
      %v709 = vld [vmem:[%s708] sm:$0xf]
      %v710 = vld [vmem:[%s708 + $0x8] sm:$0xf]
      %v711 = vld [vmem:[%s708 + $0x10] sm:$0xf]
      %v712 = vld [vmem:[%s708 + $0x18] sm:$0xf]
      %v713 = vld [vmem:[%s708 + $0x20] sm:$0xf]
      %v714 = vld [vmem:[%s708 + $0x28] sm:$0xf]
      %v715 = vld [vmem:[%s708 + $0x30] sm:$0xf]
      %v716 = vld [vmem:[%s708 + $0x38] sm:$0xf]
      %s717 = scalar_lea.vmem %s1, 6
      %v718 = vld [vmem:[%s717] sm:$0x3]
      %v727 = vunpack.c.l.b16 %v709
      %v728 = vunpack.c.l.b16 %v710
      %v729 = vunpack.c.l.b16 %v711
      %v730 = vunpack.c.l.b16 %v712
      %v731 = vunpack.c.l.b16 %v713
      %v732 = vunpack.c.l.b16 %v714
      %v733 = vunpack.c.l.b16 %v715
      %v734 = vunpack.c.l.b16 %v716
      %v735 = vpack.c.b16 %v728, %v727
      %v736 = vpack.c.b16 %v730, %v729
      %v737 = vpack.c.b16 %v732, %v731
      %v738 = vpack.c.b16 %v734, %v733
      %v740 = vsel %vm293, %v735, 0
      %v743 = vsel %vm293, %v736, 0
      %v746 = vsel %vm293, %v737, 0
      %v749 = vsel %vm293, %v738, 0
      %v752 = vsel %vm306, %v718, 0
      %754 = vmatprep.subr.bf16.mxu0 0
      %755 = vmatpush1.bf16.msra.mxu0 %v752
      %756 = vmatprep.subr.bf16.mxu0 0
      %757 = vmatpush1.bf16.msra.mxu0 0
      %758 = vmatprep.subr.bf16.mxu0 0
      %759 = vmatpush1.bf16.msra.mxu0 0
      %760 = vmatprep.subr.bf16.mxu0 0
      %761 = vmatpush1.bf16.msra.mxu0 0
      %762 = vmatprep.subr.bf16.mxu0 0
      %763 = vmatpush1.bf16.msra.mxu0 0
      %764 = vmatprep.subr.bf16.mxu0 0
      %765 = vmatpush1.bf16.msra.mxu0 0
      %766 = vmatprep.subr.bf16.mxu0 0
      %767 = vmatpush1.bf16.msra.mxu0 0
      %768 = vmatprep.subr.bf16.mxu0 0
      %769 = vmatpush1.bf16.msra.mxu0 0
      %770 = vmatprep.subr.bf16.mxu0 0
      %771 = vmatpush1.bf16.msra.mxu0 0
      %772 = vmatprep.subr.bf16.mxu0 0
      %773 = vmatpush1.bf16.msra.mxu0 0
      %774 = vmatprep.subr.bf16.mxu0 0
      %775 = vmatpush1.bf16.msra.mxu0 0
      %776 = vmatprep.subr.bf16.mxu0 0
      %777 = vmatpush1.bf16.msra.mxu0 0
      %778 = vmatprep.subr.bf16.mxu0 0
      %779 = vmatpush1.bf16.msra.mxu0 0
      %780 = vmatprep.subr.bf16.mxu0 0
      %781 = vmatpush1.bf16.msra.mxu0 0
      %782 = vmatprep.subr.bf16.mxu0 0
      %783 = vmatpush1.bf16.msra.mxu0 0
      %784 = vmatprep.subr.bf16.mxu0 0
      %785 = vmatpush1.bf16.msra.mxu0 0
      %786 = vmatprep.mubr.bf16.mxu0 0
      %787 = vmatmul.mubr.bf16.gmra.mrb[0].mxu0 %v740
      %v788 = vpop.f32.mrb[0].mxu0
      %v789 = vadd.f32 0.0, %v788
      %v790 = vpop.f32.mrb[0].mxu0
      %v791 = vpop.f32.mrb[0].mxu0
      %v792 = vadd.f32 0.0, %v791
      %v793 = vpop.f32.mrb[0].mxu0
      %794 = vmatprep.mubr.bf16.mxu0 0
      %795 = vmatmul.mubr.bf16.gmra.mrb[0].mxu0 %v743
      %v796 = vpop.f32.mrb[0].mxu0
      %v797 = vadd.f32 0.0, %v796
      %v798 = vpop.f32.mrb[0].mxu0
      %v799 = vpop.f32.mrb[0].mxu0
      %v800 = vadd.f32 0.0, %v799
      %v801 = vpop.f32.mrb[0].mxu0
      %802 = vmatprep.mubr.bf16.mxu0 0
      %803 = vmatmul.mubr.bf16.gmra.mrb[0].mxu0 %v746
      %v804 = vpop.f32.mrb[0].mxu0
      %v805 = vadd.f32 0.0, %v804
      %v806 = vpop.f32.mrb[0].mxu0
      %v807 = vpop.f32.mrb[0].mxu0
      %v808 = vadd.f32 0.0, %v807
      %v809 = vpop.f32.mrb[0].mxu0
      %810 = vmatprep.mubr.bf16.mxu0 0
      %811 = vmatmul.mubr.bf16.gmra.mrb[0].mxu0 %v749
      %v812 = vpop.f32.mrb[0].mxu0
      %v813 = vadd.f32 0.0, %v812
      %v814 = vpop.f32.mrb[0].mxu0
      %v815 = vpop.f32.mrb[0].mxu0
      %v816 = vadd.f32 0.0, %v815
      %v817 = vpop.f32.mrb[0].mxu0
      %818 = vdwg.mxu0
      %v819 = vadd.f32 %v700, %v789
      %v820 = vadd.f32 %v701, %v792
      %v821 = vadd.f32 %v702, %v797
      %v822 = vadd.f32 %v703, %v800
      %v823 = vadd.f32 %v704, %v805
      %v824 = vadd.f32 %v705, %v808
      %v825 = vadd.f32 %v706, %v813
      %v826 = vadd.f32 %v707, %v816
      %s827 = scalar_lea.vmem %s246, 216
      %v828 = vld [vmem:[%s827] sm:$0xf]
      %v829 = vld [vmem:[%s827 + $0x8] sm:$0xf]
      %v830 = vld [vmem:[%s827 + $0x10] sm:$0xf]
      %v831 = vld [vmem:[%s827 + $0x18] sm:$0xf]
      %v832 = vld [vmem:[%s827 + $0x20] sm:$0xf]
      %v833 = vld [vmem:[%s827 + $0x28] sm:$0xf]
      %v834 = vld [vmem:[%s827 + $0x30] sm:$0xf]
      %v835 = vld [vmem:[%s827 + $0x38] sm:$0xf]
      %s836 = scalar_lea.vmem %s1, 8
      %v837 = vld [vmem:[%s836] sm:$0x3]
      %v846 = vunpack.c.l.b16 %v828
      %v847 = vunpack.c.l.b16 %v829
      %v848 = vunpack.c.l.b16 %v830
      %v849 = vunpack.c.l.b16 %v831
      %v850 = vunpack.c.l.b16 %v832
      %v851 = vunpack.c.l.b16 %v833
      %v852 = vunpack.c.l.b16 %v834
      %v853 = vunpack.c.l.b16 %v835
      %v854 = vpack.c.b16 %v847, %v846
      %v855 = vpack.c.b16 %v849, %v848
      %v856 = vpack.c.b16 %v851, %v850
      %v857 = vpack.c.b16 %v853, %v852
      %v859 = vsel %vm293, %v854, 0
      %v862 = vsel %vm293, %v855, 0
      %v865 = vsel %vm293, %v856, 0
      %v868 = vsel %vm293, %v857, 0
      %v871 = vsel %vm306, %v837, 0
      %873 = vmatprep.subr.bf16.mxu0 0
      %874 = vmatpush1.bf16.msra.mxu0 %v871
      %875 = vmatprep.subr.bf16.mxu0 0
      %876 = vmatpush1.bf16.msra.mxu0 0
      %877 = vmatprep.subr.bf16.mxu0 0
      %878 = vmatpush1.bf16.msra.mxu0 0
      %879 = vmatprep.subr.bf16.mxu0 0
      %880 = vmatpush1.bf16.msra.mxu0 0
      %881 = vmatprep.subr.bf16.mxu0 0
      %882 = vmatpush1.bf16.msra.mxu0 0
      %883 = vmatprep.subr.bf16.mxu0 0
      %884 = vmatpush1.bf16.msra.mxu0 0
      %885 = vmatprep.subr.bf16.mxu0 0
      %886 = vmatpush1.bf16.msra.mxu0 0
      %887 = vmatprep.subr.bf16.mxu0 0
      %888 = vmatpush1.bf16.msra.mxu0 0
      %889 = vmatprep.subr.bf16.mxu0 0
      %890 = vmatpush1.bf16.msra.mxu0 0
      %891 = vmatprep.subr.bf16.mxu0 0
      %892 = vmatpush1.bf16.msra.mxu0 0
      %893 = vmatprep.subr.bf16.mxu0 0
      %894 = vmatpush1.bf16.msra.mxu0 0
      %895 = vmatprep.subr.bf16.mxu0 0
      %896 = vmatpush1.bf16.msra.mxu0 0
      %897 = vmatprep.subr.bf16.mxu0 0
      %898 = vmatpush1.bf16.msra.mxu0 0
      %899 = vmatprep.subr.bf16.mxu0 0
      %900 = vmatpush1.bf16.msra.mxu0 0
      %901 = vmatprep.subr.bf16.mxu0 0
      %902 = vmatpush1.bf16.msra.mxu0 0
      %903 = vmatprep.subr.bf16.mxu0 0
      %904 = vmatpush1.bf16.msra.mxu0 0
      %905 = vmatprep.mubr.bf16.mxu0 0
      %906 = vmatmul.mubr.bf16.gmra.mrb[0].mxu0 %v859
      %v907 = vpop.f32.mrb[0].mxu0
      %v908 = vadd.f32 0.0, %v907
      %v909 = vpop.f32.mrb[0].mxu0
      %v910 = vpop.f32.mrb[0].mxu0
      %v911 = vadd.f32 0.0, %v910
      %v912 = vpop.f32.mrb[0].mxu0
      %913 = vmatprep.mubr.bf16.mxu0 0
      %914 = vmatmul.mubr.bf16.gmra.mrb[0].mxu0 %v862
      %v915 = vpop.f32.mrb[0].mxu0
      %v916 = vadd.f32 0.0, %v915
      %v917 = vpop.f32.mrb[0].mxu0
      %v918 = vpop.f32.mrb[0].mxu0
      %v919 = vadd.f32 0.0, %v918
      %v920 = vpop.f32.mrb[0].mxu0
      %921 = vmatprep.mubr.bf16.mxu0 0
      %922 = vmatmul.mubr.bf16.gmra.mrb[0].mxu0 %v865
      %v923 = vpop.f32.mrb[0].mxu0
      %v924 = vadd.f32 0.0, %v923
      %v925 = vpop.f32.mrb[0].mxu0
      %v926 = vpop.f32.mrb[0].mxu0
      %v927 = vadd.f32 0.0, %v926
      %v928 = vpop.f32.mrb[0].mxu0
      %929 = vmatprep.mubr.bf16.mxu0 0
      %930 = vmatmul.mubr.bf16.gmra.mrb[0].mxu0 %v868
      %v931 = vpop.f32.mrb[0].mxu0
      %v932 = vadd.f32 0.0, %v931
      %v933 = vpop.f32.mrb[0].mxu0
      %v934 = vpop.f32.mrb[0].mxu0
      %v935 = vadd.f32 0.0, %v934
      %v936 = vpop.f32.mrb[0].mxu0
      %937 = vdwg.mxu0
      %v938 = vadd.f32 %v819, %v908
      %v939 = vadd.f32 %v820, %v911
      %v940 = vadd.f32 %v821, %v916
      %v941 = vadd.f32 %v822, %v919
      %v942 = vadd.f32 %v823, %v924
      %v943 = vadd.f32 %v824, %v927
      %v944 = vadd.f32 %v825, %v932
      %v945 = vadd.f32 %v826, %v935
      %v946 = vld [vmem:[%s708] sm:$0xf]
      %v947 = vld [vmem:[%s708 + $0x4] sm:$0x1]
      %v948 = vld [vmem:[%s708 + $0x8] sm:$0xf]
      %v949 = vld [vmem:[%s708 + $0xc] sm:$0x1]
      %v950 = vld [vmem:[%s708 + $0x10] sm:$0xf]
      %v951 = vld [vmem:[%s708 + $0x14] sm:$0x1]
      %v952 = vld [vmem:[%s708 + $0x18] sm:$0xf]
      %v953 = vld [vmem:[%s708 + $0x1c] sm:$0x1]
      %v954 = vld [vmem:[%s708 + $0x20] sm:$0xf]
      %v955 = vld [vmem:[%s708 + $0x24] sm:$0x1]
      %v956 = vld [vmem:[%s708 + $0x28] sm:$0xf]
      %v957 = vld [vmem:[%s708 + $0x2c] sm:$0x1]
      %v958 = vld [vmem:[%s708 + $0x30] sm:$0xf]
      %v959 = vld [vmem:[%s708 + $0x34] sm:$0x1]
      %v960 = vld [vmem:[%s708 + $0x38] sm:$0xf]
      %v961 = vld [vmem:[%s708 + $0x3c] sm:$0x1]
      %v963 = vshrl.u32 %v946, 16
      %v965 = vrot.slane %v963, 4
      %v966 = vshll.u32 %v946, 16
      %v968 = vrot.slane %v966, 5
      %v969 = vor.u32 %v965, %v968
      %v970 = vrot.slane %v969, 4
      %v972 = vshll.u32 %v947, 16
      %v974 = vrot.slane %v972, 5
      %v975 = vsel %vm493, %v970, %v974
      %v977 = vshrl.u32 %v948, 16
      %v979 = vrot.slane %v977, 4
      %v980 = vshll.u32 %v948, 16
      %v982 = vrot.slane %v980, 5
      %v983 = vor.u32 %v979, %v982
      %v984 = vrot.slane %v983, 4
      %v986 = vshll.u32 %v949, 16
      %v988 = vrot.slane %v986, 5
      %v989 = vsel %vm493, %v984, %v988
      %v991 = vshrl.u32 %v950, 16
      %v993 = vrot.slane %v991, 4
      %v994 = vshll.u32 %v950, 16
      %v996 = vrot.slane %v994, 5
      %v997 = vor.u32 %v993, %v996
      %v998 = vrot.slane %v997, 4
      %v1000 = vshll.u32 %v951, 16
      %v1002 = vrot.slane %v1000, 5
      %v1003 = vsel %vm493, %v998, %v1002
      %v1005 = vshrl.u32 %v952, 16
      %v1007 = vrot.slane %v1005, 4
      %v1008 = vshll.u32 %v952, 16
      %v1010 = vrot.slane %v1008, 5
      %v1011 = vor.u32 %v1007, %v1010
      %v1012 = vrot.slane %v1011, 4
      %v1014 = vshll.u32 %v953, 16
      %v1016 = vrot.slane %v1014, 5
      %v1017 = vsel %vm493, %v1012, %v1016
      %v1019 = vshrl.u32 %v954, 16
      %v1021 = vrot.slane %v1019, 4
      %v1022 = vshll.u32 %v954, 16
      %v1024 = vrot.slane %v1022, 5
      %v1025 = vor.u32 %v1021, %v1024
      %v1026 = vrot.slane %v1025, 4
      %v1028 = vshll.u32 %v955, 16
      %v1030 = vrot.slane %v1028, 5
      %v1031 = vsel %vm493, %v1026, %v1030
      %v1033 = vshrl.u32 %v956, 16
      %v1035 = vrot.slane %v1033, 4
      %v1036 = vshll.u32 %v956, 16
      %v1038 = vrot.slane %v1036, 5
      %v1039 = vor.u32 %v1035, %v1038
      %v1040 = vrot.slane %v1039, 4
      %v1042 = vshll.u32 %v957, 16
      %v1044 = vrot.slane %v1042, 5
      %v1045 = vsel %vm493, %v1040, %v1044
      %v1047 = vshrl.u32 %v958, 16
      %v1049 = vrot.slane %v1047, 4
      %v1050 = vshll.u32 %v958, 16
      %v1052 = vrot.slane %v1050, 5
      %v1053 = vor.u32 %v1049, %v1052
      %v1054 = vrot.slane %v1053, 4
      %v1056 = vshll.u32 %v959, 16
      %v1058 = vrot.slane %v1056, 5
      %v1059 = vsel %vm493, %v1054, %v1058
      %v1061 = vshrl.u32 %v960, 16
      %v1063 = vrot.slane %v1061, 4
      %v1064 = vshll.u32 %v960, 16
      %v1066 = vrot.slane %v1064, 5
      %v1067 = vor.u32 %v1063, %v1066
      %v1068 = vrot.slane %v1067, 4
      %v1070 = vshll.u32 %v961, 16
      %v1072 = vrot.slane %v1070, 5
      %v1073 = vsel %vm493, %v1068, %v1072
      %s1074 = scalar_lea.vmem %s1, 10
      %v1075 = vld [vmem:[%s1074] sm:$0x3]
      %v1076 = vunpack.c.l.b16 %v975
      %v1077 = vunpack.c.l.b16 %v989
      %v1078 = vunpack.c.l.b16 %v1003
      %v1079 = vunpack.c.l.b16 %v1017
      %v1080 = vunpack.c.l.b16 %v1031
      %v1081 = vunpack.c.l.b16 %v1045
      %v1082 = vunpack.c.l.b16 %v1059
      %v1083 = vunpack.c.l.b16 %v1073
      %v1084 = vpack.c.b16 %v1077, %v1076
      %v1085 = vpack.c.b16 %v1079, %v1078
      %v1086 = vpack.c.b16 %v1081, %v1080
      %v1087 = vpack.c.b16 %v1083, %v1082
      %v1089 = vsel %vm293, %v1084, 0
      %v1092 = vsel %vm293, %v1085, 0
      %v1095 = vsel %vm293, %v1086, 0
      %v1098 = vsel %vm293, %v1087, 0
      %v1101 = vsel %vm306, %v1075, 0
      %1103 = vmatprep.subr.bf16.mxu0 0
      %1104 = vmatpush1.bf16.msra.mxu0 %v1101
      %1105 = vmatprep.subr.bf16.mxu0 0
      %1106 = vmatpush1.bf16.msra.mxu0 0
      %1107 = vmatprep.subr.bf16.mxu0 0
      %1108 = vmatpush1.bf16.msra.mxu0 0
      %1109 = vmatprep.subr.bf16.mxu0 0
      %1110 = vmatpush1.bf16.msra.mxu0 0
      %1111 = vmatprep.subr.bf16.mxu0 0
      %1112 = vmatpush1.bf16.msra.mxu0 0
      %1113 = vmatprep.subr.bf16.mxu0 0
      %1114 = vmatpush1.bf16.msra.mxu0 0
      %1115 = vmatprep.subr.bf16.mxu0 0
      %1116 = vmatpush1.bf16.msra.mxu0 0
      %1117 = vmatprep.subr.bf16.mxu0 0
      %1118 = vmatpush1.bf16.msra.mxu0 0
      %1119 = vmatprep.subr.bf16.mxu0 0
      %1120 = vmatpush1.bf16.msra.mxu0 0
      %1121 = vmatprep.subr.bf16.mxu0 0
      %1122 = vmatpush1.bf16.msra.mxu0 0
      %1123 = vmatprep.subr.bf16.mxu0 0
      %1124 = vmatpush1.bf16.msra.mxu0 0
      %1125 = vmatprep.subr.bf16.mxu0 0
      %1126 = vmatpush1.bf16.msra.mxu0 0
      %1127 = vmatprep.subr.bf16.mxu0 0
      %1128 = vmatpush1.bf16.msra.mxu0 0
      %1129 = vmatprep.subr.bf16.mxu0 0
      %1130 = vmatpush1.bf16.msra.mxu0 0
      %1131 = vmatprep.subr.bf16.mxu0 0
      %1132 = vmatpush1.bf16.msra.mxu0 0
      %1133 = vmatprep.subr.bf16.mxu0 0
      %1134 = vmatpush1.bf16.msra.mxu0 0
      %1135 = vmatprep.mubr.bf16.mxu0 0
      %1136 = vmatmul.mubr.bf16.gmra.mrb[0].mxu0 %v1089
      %v1137 = vpop.f32.mrb[0].mxu0
      %v1138 = vadd.f32 0.0, %v1137
      %v1139 = vpop.f32.mrb[0].mxu0
      %v1140 = vpop.f32.mrb[0].mxu0
      %v1141 = vadd.f32 0.0, %v1140
      %v1142 = vpop.f32.mrb[0].mxu0
      %1143 = vmatprep.mubr.bf16.mxu0 0
      %1144 = vmatmul.mubr.bf16.gmra.mrb[0].mxu0 %v1092
      %v1145 = vpop.f32.mrb[0].mxu0
      %v1146 = vadd.f32 0.0, %v1145
      %v1147 = vpop.f32.mrb[0].mxu0
      %v1148 = vpop.f32.mrb[0].mxu0
      %v1149 = vadd.f32 0.0, %v1148
      %v1150 = vpop.f32.mrb[0].mxu0
      %1151 = vmatprep.mubr.bf16.mxu0 0
      %1152 = vmatmul.mubr.bf16.gmra.mrb[0].mxu0 %v1095
      %v1153 = vpop.f32.mrb[0].mxu0
      %v1154 = vadd.f32 0.0, %v1153
      %v1155 = vpop.f32.mrb[0].mxu0
      %v1156 = vpop.f32.mrb[0].mxu0
      %v1157 = vadd.f32 0.0, %v1156
      %v1158 = vpop.f32.mrb[0].mxu0
      %1159 = vmatprep.mubr.bf16.mxu0 0
      %1160 = vmatmul.mubr.bf16.gmra.mrb[0].mxu0 %v1098
      %v1161 = vpop.f32.mrb[0].mxu0
      %v1162 = vadd.f32 0.0, %v1161
      %v1163 = vpop.f32.mrb[0].mxu0
      %v1164 = vpop.f32.mrb[0].mxu0
      %v1165 = vadd.f32 0.0, %v1164
      %v1166 = vpop.f32.mrb[0].mxu0
      %1167 = vdwg.mxu0
      %v1168 = vadd.f32 %v938, %v1138
      %v1169 = vadd.f32 %v939, %v1141
      %v1170 = vadd.f32 %v940, %v1146
      %v1171 = vadd.f32 %v941, %v1149
      %v1172 = vadd.f32 %v942, %v1154
      %v1173 = vadd.f32 %v943, %v1157
      %v1174 = vadd.f32 %v944, %v1162
      %v1175 = vadd.f32 %v945, %v1165
      %s1176 = scalar_lea.vmem %s246, 8
      %v1177 = vld [vmem:[%s1176] sm:$0xf]
      %v1178 = vld [vmem:[%s1176 + $0x8] sm:$0xf]
      %v1179 = vld [vmem:[%s1176 + $0x10] sm:$0xf]
      %v1180 = vld [vmem:[%s1176 + $0x18] sm:$0xf]
      %v1181 = vld [vmem:[%s1176 + $0x20] sm:$0xf]
      %v1182 = vld [vmem:[%s1176 + $0x28] sm:$0xf]
      %v1183 = vld [vmem:[%s1176 + $0x30] sm:$0xf]
      %v1184 = vld [vmem:[%s1176 + $0x38] sm:$0xf]
      %s1185 = scalar_lea.vmem %s1, 12
      %v1186 = vld [vmem:[%s1185] sm:$0x3]
      %v1195 = vunpack.c.l.b16 %v1177
      %v1196 = vunpack.c.l.b16 %v1178
      %v1197 = vunpack.c.l.b16 %v1179
      %v1198 = vunpack.c.l.b16 %v1180
      %v1199 = vunpack.c.l.b16 %v1181
      %v1200 = vunpack.c.l.b16 %v1182
      %v1201 = vunpack.c.l.b16 %v1183
      %v1202 = vunpack.c.l.b16 %v1184
      %v1203 = vpack.c.b16 %v1196, %v1195
      %v1204 = vpack.c.b16 %v1198, %v1197
      %v1205 = vpack.c.b16 %v1200, %v1199
      %v1206 = vpack.c.b16 %v1202, %v1201
      %v1208 = vsel %vm293, %v1203, 0
      %v1211 = vsel %vm293, %v1204, 0
      %v1214 = vsel %vm293, %v1205, 0
      %v1217 = vsel %vm293, %v1206, 0
      %v1220 = vsel %vm306, %v1186, 0
      %1222 = vmatprep.subr.bf16.mxu0 0
      %1223 = vmatpush1.bf16.msra.mxu0 %v1220
      %1224 = vmatprep.subr.bf16.mxu0 0
      %1225 = vmatpush1.bf16.msra.mxu0 0
      %1226 = vmatprep.subr.bf16.mxu0 0
      %1227 = vmatpush1.bf16.msra.mxu0 0
      %1228 = vmatprep.subr.bf16.mxu0 0
      %1229 = vmatpush1.bf16.msra.mxu0 0
      %1230 = vmatprep.subr.bf16.mxu0 0
      %1231 = vmatpush1.bf16.msra.mxu0 0
      %1232 = vmatprep.subr.bf16.mxu0 0
      %1233 = vmatpush1.bf16.msra.mxu0 0
      %1234 = vmatprep.subr.bf16.mxu0 0
      %1235 = vmatpush1.bf16.msra.mxu0 0
      %1236 = vmatprep.subr.bf16.mxu0 0
      %1237 = vmatpush1.bf16.msra.mxu0 0
      %1238 = vmatprep.subr.bf16.mxu0 0
      %1239 = vmatpush1.bf16.msra.mxu0 0
      %1240 = vmatprep.subr.bf16.mxu0 0
      %1241 = vmatpush1.bf16.msra.mxu0 0
      %1242 = vmatprep.subr.bf16.mxu0 0
      %1243 = vmatpush1.bf16.msra.mxu0 0
      %1244 = vmatprep.subr.bf16.mxu0 0
      %1245 = vmatpush1.bf16.msra.mxu0 0
      %1246 = vmatprep.subr.bf16.mxu0 0
      %1247 = vmatpush1.bf16.msra.mxu0 0
      %1248 = vmatprep.subr.bf16.mxu0 0
      %1249 = vmatpush1.bf16.msra.mxu0 0
      %1250 = vmatprep.subr.bf16.mxu0 0
      %1251 = vmatpush1.bf16.msra.mxu0 0
      %1252 = vmatprep.subr.bf16.mxu0 0
      %1253 = vmatpush1.bf16.msra.mxu0 0
      %1254 = vmatprep.mubr.bf16.mxu0 0
      %1255 = vmatmul.mubr.bf16.gmra.mrb[0].mxu0 %v1208
      %v1256 = vpop.f32.mrb[0].mxu0
      %v1257 = vadd.f32 0.0, %v1256
      %v1258 = vpop.f32.mrb[0].mxu0
      %v1259 = vpop.f32.mrb[0].mxu0
      %v1260 = vadd.f32 0.0, %v1259
      %v1261 = vpop.f32.mrb[0].mxu0
      %1262 = vmatprep.mubr.bf16.mxu0 0
      %1263 = vmatmul.mubr.bf16.gmra.mrb[0].mxu0 %v1211
      %v1264 = vpop.f32.mrb[0].mxu0
      %v1265 = vadd.f32 0.0, %v1264
      %v1266 = vpop.f32.mrb[0].mxu0
      %v1267 = vpop.f32.mrb[0].mxu0
      %v1268 = vadd.f32 0.0, %v1267
      %v1269 = vpop.f32.mrb[0].mxu0
      %1270 = vmatprep.mubr.bf16.mxu0 0
      %1271 = vmatmul.mubr.bf16.gmra.mrb[0].mxu0 %v1214
      %v1272 = vpop.f32.mrb[0].mxu0
      %v1273 = vadd.f32 0.0, %v1272
      %v1274 = vpop.f32.mrb[0].mxu0
      %v1275 = vpop.f32.mrb[0].mxu0
      %v1276 = vadd.f32 0.0, %v1275
      %v1277 = vpop.f32.mrb[0].mxu0
      %1278 = vmatprep.mubr.bf16.mxu0 0
      %1279 = vmatmul.mubr.bf16.gmra.mrb[0].mxu0 %v1217
      %v1280 = vpop.f32.mrb[0].mxu0
      %v1281 = vadd.f32 0.0, %v1280
      %v1282 = vpop.f32.mrb[0].mxu0
      %v1283 = vpop.f32.mrb[0].mxu0
      %v1284 = vadd.f32 0.0, %v1283
      %v1285 = vpop.f32.mrb[0].mxu0
      %1286 = vdwg.mxu0
      %v1287 = vadd.f32 %v1168, %v1257
      %v1288 = vadd.f32 %v1169, %v1260
      %v1289 = vadd.f32 %v1170, %v1265
      %v1290 = vadd.f32 %v1171, %v1268
      %v1291 = vadd.f32 %v1172, %v1273
      %v1292 = vadd.f32 %v1173, %v1276
      %v1293 = vadd.f32 %v1174, %v1281
      %v1294 = vadd.f32 %v1175, %v1284
      %s1295 = scalar_lea.vmem %s246, 80
      %v1296 = vld [vmem:[%s1295] sm:$0xf]
      %v1297 = vld [vmem:[%s1295 + $0x8] sm:$0xf]
      %v1298 = vld [vmem:[%s1295 + $0x10] sm:$0xf]
      %v1299 = vld [vmem:[%s1295 + $0x18] sm:$0xf]
      %v1300 = vld [vmem:[%s1295 + $0x20] sm:$0xf]
      %v1301 = vld [vmem:[%s1295 + $0x28] sm:$0xf]
      %v1302 = vld [vmem:[%s1295 + $0x30] sm:$0xf]
      %v1303 = vld [vmem:[%s1295 + $0x38] sm:$0xf]
      %s1304 = scalar_lea.vmem %s1, 14
      %v1305 = vld [vmem:[%s1304] sm:$0x3]
      %v1314 = vunpack.c.l.b16 %v1296
      %v1315 = vunpack.c.l.b16 %v1297
      %v1316 = vunpack.c.l.b16 %v1298
      %v1317 = vunpack.c.l.b16 %v1299
      %v1318 = vunpack.c.l.b16 %v1300
      %v1319 = vunpack.c.l.b16 %v1301
      %v1320 = vunpack.c.l.b16 %v1302
      %v1321 = vunpack.c.l.b16 %v1303
      %v1322 = vpack.c.b16 %v1315, %v1314
      %v1323 = vpack.c.b16 %v1317, %v1316
      %v1324 = vpack.c.b16 %v1319, %v1318
      %v1325 = vpack.c.b16 %v1321, %v1320
      %v1327 = vsel %vm293, %v1322, 0
      %v1330 = vsel %vm293, %v1323, 0
      %v1333 = vsel %vm293, %v1324, 0
      %v1336 = vsel %vm293, %v1325, 0
      %v1339 = vsel %vm306, %v1305, 0
      %1341 = vmatprep.subr.bf16.mxu0 0
      %1342 = vmatpush1.bf16.msra.mxu0 %v1339
      %1343 = vmatprep.subr.bf16.mxu0 0
      %1344 = vmatpush1.bf16.msra.mxu0 0
      %1345 = vmatprep.subr.bf16.mxu0 0
      %1346 = vmatpush1.bf16.msra.mxu0 0
      %1347 = vmatprep.subr.bf16.mxu0 0
      %1348 = vmatpush1.bf16.msra.mxu0 0
      %1349 = vmatprep.subr.bf16.mxu0 0
      %1350 = vmatpush1.bf16.msra.mxu0 0
      %1351 = vmatprep.subr.bf16.mxu0 0
      %1352 = vmatpush1.bf16.msra.mxu0 0
      %1353 = vmatprep.subr.bf16.mxu0 0
      %1354 = vmatpush1.bf16.msra.mxu0 0
      %1355 = vmatprep.subr.bf16.mxu0 0
      %1356 = vmatpush1.bf16.msra.mxu0 0
      %1357 = vmatprep.subr.bf16.mxu0 0
      %1358 = vmatpush1.bf16.msra.mxu0 0
      %1359 = vmatprep.subr.bf16.mxu0 0
      %1360 = vmatpush1.bf16.msra.mxu0 0
      %1361 = vmatprep.subr.bf16.mxu0 0
      %1362 = vmatpush1.bf16.msra.mxu0 0
      %1363 = vmatprep.subr.bf16.mxu0 0
      %1364 = vmatpush1.bf16.msra.mxu0 0
      %1365 = vmatprep.subr.bf16.mxu0 0
      %1366 = vmatpush1.bf16.msra.mxu0 0
      %1367 = vmatprep.subr.bf16.mxu0 0
      %1368 = vmatpush1.bf16.msra.mxu0 0
      %1369 = vmatprep.subr.bf16.mxu0 0
      %1370 = vmatpush1.bf16.msra.mxu0 0
      %1371 = vmatprep.subr.bf16.mxu0 0
      %1372 = vmatpush1.bf16.msra.mxu0 0
      %1373 = vmatprep.mubr.bf16.mxu0 0
      %1374 = vmatmul.mubr.bf16.gmra.mrb[0].mxu0 %v1327
      %v1375 = vpop.f32.mrb[0].mxu0
      %v1376 = vadd.f32 0.0, %v1375
      %v1377 = vpop.f32.mrb[0].mxu0
      %v1378 = vpop.f32.mrb[0].mxu0
      %v1379 = vadd.f32 0.0, %v1378
      %v1380 = vpop.f32.mrb[0].mxu0
      %1381 = vmatprep.mubr.bf16.mxu0 0
      %1382 = vmatmul.mubr.bf16.gmra.mrb[0].mxu0 %v1330
      %v1383 = vpop.f32.mrb[0].mxu0
      %v1384 = vadd.f32 0.0, %v1383
      %v1385 = vpop.f32.mrb[0].mxu0
      %v1386 = vpop.f32.mrb[0].mxu0
      %v1387 = vadd.f32 0.0, %v1386
      %v1388 = vpop.f32.mrb[0].mxu0
      %1389 = vmatprep.mubr.bf16.mxu0 0
      %1390 = vmatmul.mubr.bf16.gmra.mrb[0].mxu0 %v1333
      %v1391 = vpop.f32.mrb[0].mxu0
      %v1392 = vadd.f32 0.0, %v1391
      %v1393 = vpop.f32.mrb[0].mxu0
      %v1394 = vpop.f32.mrb[0].mxu0
      %v1395 = vadd.f32 0.0, %v1394
      %v1396 = vpop.f32.mrb[0].mxu0
      %1397 = vmatprep.mubr.bf16.mxu0 0
      %1398 = vmatmul.mubr.bf16.gmra.mrb[0].mxu0 %v1336
      %v1399 = vpop.f32.mrb[0].mxu0
      %v1400 = vadd.f32 0.0, %v1399
      %v1401 = vpop.f32.mrb[0].mxu0
      %v1402 = vpop.f32.mrb[0].mxu0
      %v1403 = vadd.f32 0.0, %v1402
      %v1404 = vpop.f32.mrb[0].mxu0
      %1405 = vdwg.mxu0
      %v1406 = vadd.f32 %v1287, %v1376
      %v1407 = vadd.f32 %v1288, %v1379
      %v1408 = vadd.f32 %v1289, %v1384
      %v1409 = vadd.f32 %v1290, %v1387
      %v1410 = vadd.f32 %v1291, %v1392
      %v1411 = vadd.f32 %v1292, %v1395
      %v1412 = vadd.f32 %v1293, %v1400
      %v1413 = vadd.f32 %v1294, %v1403
      %v1414 = vld [vmem:[%s1176] sm:$0xf]
      %v1415 = vld [vmem:[%s1176 + $0x4] sm:$0x1]
      %v1416 = vld [vmem:[%s1176 + $0x8] sm:$0xf]
      %v1417 = vld [vmem:[%s1176 + $0xc] sm:$0x1]
      %v1418 = vld [vmem:[%s1176 + $0x10] sm:$0xf]
      %v1419 = vld [vmem:[%s1176 + $0x14] sm:$0x1]
      %v1420 = vld [vmem:[%s1176 + $0x18] sm:$0xf]
      %v1421 = vld [vmem:[%s1176 + $0x1c] sm:$0x1]
      %v1422 = vld [vmem:[%s1176 + $0x20] sm:$0xf]
      %v1423 = vld [vmem:[%s1176 + $0x24] sm:$0x1]
      %v1424 = vld [vmem:[%s1176 + $0x28] sm:$0xf]
      %v1425 = vld [vmem:[%s1176 + $0x2c] sm:$0x1]
      %v1426 = vld [vmem:[%s1176 + $0x30] sm:$0xf]
      %v1427 = vld [vmem:[%s1176 + $0x34] sm:$0x1]
      %v1428 = vld [vmem:[%s1176 + $0x38] sm:$0xf]
      %v1429 = vld [vmem:[%s1176 + $0x3c] sm:$0x1]
      %v1431 = vshrl.u32 %v1414, 16
      %v1433 = vrot.slane %v1431, 4
      %v1434 = vshll.u32 %v1414, 16
      %v1436 = vrot.slane %v1434, 5
      %v1437 = vor.u32 %v1433, %v1436
      %v1438 = vrot.slane %v1437, 4
      %v1440 = vshll.u32 %v1415, 16
      %v1442 = vrot.slane %v1440, 5
      %v1443 = vsel %vm493, %v1438, %v1442
      %v1445 = vshrl.u32 %v1416, 16
      %v1447 = vrot.slane %v1445, 4
      %v1448 = vshll.u32 %v1416, 16
      %v1450 = vrot.slane %v1448, 5
      %v1451 = vor.u32 %v1447, %v1450
      %v1452 = vrot.slane %v1451, 4
      %v1454 = vshll.u32 %v1417, 16
      %v1456 = vrot.slane %v1454, 5
      %v1457 = vsel %vm493, %v1452, %v1456
      %v1459 = vshrl.u32 %v1418, 16
      %v1461 = vrot.slane %v1459, 4
      %v1462 = vshll.u32 %v1418, 16
      %v1464 = vrot.slane %v1462, 5
      %v1465 = vor.u32 %v1461, %v1464
      %v1466 = vrot.slane %v1465, 4
      %v1468 = vshll.u32 %v1419, 16
      %v1470 = vrot.slane %v1468, 5
      %v1471 = vsel %vm493, %v1466, %v1470
      %v1473 = vshrl.u32 %v1420, 16
      %v1475 = vrot.slane %v1473, 4
      %v1476 = vshll.u32 %v1420, 16
      %v1478 = vrot.slane %v1476, 5
      %v1479 = vor.u32 %v1475, %v1478
      %v1480 = vrot.slane %v1479, 4
      %v1482 = vshll.u32 %v1421, 16
      %v1484 = vrot.slane %v1482, 5
      %v1485 = vsel %vm493, %v1480, %v1484
      %v1487 = vshrl.u32 %v1422, 16
      %v1489 = vrot.slane %v1487, 4
      %v1490 = vshll.u32 %v1422, 16
      %v1492 = vrot.slane %v1490, 5
      %v1493 = vor.u32 %v1489, %v1492
      %v1494 = vrot.slane %v1493, 4
      %v1496 = vshll.u32 %v1423, 16
      %v1498 = vrot.slane %v1496, 5
      %v1499 = vsel %vm493, %v1494, %v1498
      %v1501 = vshrl.u32 %v1424, 16
      %v1503 = vrot.slane %v1501, 4
      %v1504 = vshll.u32 %v1424, 16
      %v1506 = vrot.slane %v1504, 5
      %v1507 = vor.u32 %v1503, %v1506
      %v1508 = vrot.slane %v1507, 4
      %v1510 = vshll.u32 %v1425, 16
      %v1512 = vrot.slane %v1510, 5
      %v1513 = vsel %vm493, %v1508, %v1512
      %v1515 = vshrl.u32 %v1426, 16
      %v1517 = vrot.slane %v1515, 4
      %v1518 = vshll.u32 %v1426, 16
      %v1520 = vrot.slane %v1518, 5
      %v1521 = vor.u32 %v1517, %v1520
      %v1522 = vrot.slane %v1521, 4
      %v1524 = vshll.u32 %v1427, 16
      %v1526 = vrot.slane %v1524, 5
      %v1527 = vsel %vm493, %v1522, %v1526
      %v1529 = vshrl.u32 %v1428, 16
      %v1531 = vrot.slane %v1529, 4
      %v1532 = vshll.u32 %v1428, 16
      %v1534 = vrot.slane %v1532, 5
      %v1535 = vor.u32 %v1531, %v1534
      %v1536 = vrot.slane %v1535, 4
      %v1538 = vshll.u32 %v1429, 16
      %v1540 = vrot.slane %v1538, 5
      %v1541 = vsel %vm493, %v1536, %v1540
      %s1542 = scalar_lea.vmem %s1, 16
      %v1543 = vld [vmem:[%s1542] sm:$0x3]
      %v1544 = vunpack.c.l.b16 %v1443
      %v1545 = vunpack.c.l.b16 %v1457
      %v1546 = vunpack.c.l.b16 %v1471
      %v1547 = vunpack.c.l.b16 %v1485
      %v1548 = vunpack.c.l.b16 %v1499
      %v1549 = vunpack.c.l.b16 %v1513
      %v1550 = vunpack.c.l.b16 %v1527
      %v1551 = vunpack.c.l.b16 %v1541
      %v1552 = vpack.c.b16 %v1545, %v1544
      %v1553 = vpack.c.b16 %v1547, %v1546
      %v1554 = vpack.c.b16 %v1549, %v1548
      %v1555 = vpack.c.b16 %v1551, %v1550
      %v1557 = vsel %vm293, %v1552, 0
      %v1560 = vsel %vm293, %v1553, 0
      %v1563 = vsel %vm293, %v1554, 0
      %v1566 = vsel %vm293, %v1555, 0
      %v1569 = vsel %vm306, %v1543, 0
      %1571 = vmatprep.subr.bf16.mxu0 0
      %1572 = vmatpush1.bf16.msra.mxu0 %v1569
      %1573 = vmatprep.subr.bf16.mxu0 0
      %1574 = vmatpush1.bf16.msra.mxu0 0
      %1575 = vmatprep.subr.bf16.mxu0 0
      %1576 = vmatpush1.bf16.msra.mxu0 0
      %1577 = vmatprep.subr.bf16.mxu0 0
      %1578 = vmatpush1.bf16.msra.mxu0 0
      %1579 = vmatprep.subr.bf16.mxu0 0
      %1580 = vmatpush1.bf16.msra.mxu0 0
      %1581 = vmatprep.subr.bf16.mxu0 0
      %1582 = vmatpush1.bf16.msra.mxu0 0
      %1583 = vmatprep.subr.bf16.mxu0 0
      %1584 = vmatpush1.bf16.msra.mxu0 0
      %1585 = vmatprep.subr.bf16.mxu0 0
      %1586 = vmatpush1.bf16.msra.mxu0 0
      %1587 = vmatprep.subr.bf16.mxu0 0
      %1588 = vmatpush1.bf16.msra.mxu0 0
      %1589 = vmatprep.subr.bf16.mxu0 0
      %1590 = vmatpush1.bf16.msra.mxu0 0
      %1591 = vmatprep.subr.bf16.mxu0 0
      %1592 = vmatpush1.bf16.msra.mxu0 0
      %1593 = vmatprep.subr.bf16.mxu0 0
      %1594 = vmatpush1.bf16.msra.mxu0 0
      %1595 = vmatprep.subr.bf16.mxu0 0
      %1596 = vmatpush1.bf16.msra.mxu0 0
      %1597 = vmatprep.subr.bf16.mxu0 0
      %1598 = vmatpush1.bf16.msra.mxu0 0
      %1599 = vmatprep.subr.bf16.mxu0 0
      %1600 = vmatpush1.bf16.msra.mxu0 0
      %1601 = vmatprep.subr.bf16.mxu0 0
      %1602 = vmatpush1.bf16.msra.mxu0 0
      %1603 = vmatprep.mubr.bf16.mxu0 0
      %1604 = vmatmul.mubr.bf16.gmra.mrb[0].mxu0 %v1557
      %v1605 = vpop.f32.mrb[0].mxu0
      %v1606 = vadd.f32 0.0, %v1605
      %v1607 = vpop.f32.mrb[0].mxu0
      %v1608 = vpop.f32.mrb[0].mxu0
      %v1609 = vadd.f32 0.0, %v1608
      %v1610 = vpop.f32.mrb[0].mxu0
      %1611 = vmatprep.mubr.bf16.mxu0 0
      %1612 = vmatmul.mubr.bf16.gmra.mrb[0].mxu0 %v1560
      %v1613 = vpop.f32.mrb[0].mxu0
      %v1614 = vadd.f32 0.0, %v1613
      %v1615 = vpop.f32.mrb[0].mxu0
      %v1616 = vpop.f32.mrb[0].mxu0
      %v1617 = vadd.f32 0.0, %v1616
      %v1618 = vpop.f32.mrb[0].mxu0
      %1619 = vmatprep.mubr.bf16.mxu0 0
      %1620 = vmatmul.mubr.bf16.gmra.mrb[0].mxu0 %v1563
      %v1621 = vpop.f32.mrb[0].mxu0
      %v1622 = vadd.f32 0.0, %v1621
      %v1623 = vpop.f32.mrb[0].mxu0
      %v1624 = vpop.f32.mrb[0].mxu0
      %v1625 = vadd.f32 0.0, %v1624
      %v1626 = vpop.f32.mrb[0].mxu0
      %1627 = vmatprep.mubr.bf16.mxu0 0
      %1628 = vmatmul.mubr.bf16.gmra.mrb[0].mxu0 %v1566
      %v1629 = vpop.f32.mrb[0].mxu0
      %v1630 = vadd.f32 0.0, %v1629
      %v1631 = vpop.f32.mrb[0].mxu0
      %v1632 = vpop.f32.mrb[0].mxu0
      %v1633 = vadd.f32 0.0, %v1632
      %v1634 = vpop.f32.mrb[0].mxu0
      %1635 = vdwg.mxu0
      %v1636 = vadd.f32 %v1406, %v1606
      %v1637 = vadd.f32 %v1407, %v1609
      %v1638 = vadd.f32 %v1408, %v1614
      %v1639 = vadd.f32 %v1409, %v1617
      %v1640 = vadd.f32 %v1410, %v1622
      %v1641 = vadd.f32 %v1411, %v1625
      %v1642 = vadd.f32 %v1412, %v1630
      %v1643 = vadd.f32 %v1413, %v1633
      %v1644 = vld [vmem:[%s2] sm:$0x1]
      %v1646 = vlaneseq
      %v1647 = vshrl.u32 %v1646, 7
      %v1648 = vsub.s32 0, %v1647
      %v1649 = vrot.slane %v1644, %v1648
      %v1651 = vadd.f32 %v1636, %v1649
      %v1652 = vadd.f32 %v1637, %v1649
      %v1653 = vadd.f32 %v1638, %v1649
      %v1654 = vadd.f32 %v1639, %v1649
      %v1655 = vadd.f32 %v1640, %v1649
      %v1656 = vadd.f32 %v1641, %v1649
      %v1657 = vadd.f32 %v1642, %v1649
      %v1658 = vadd.f32 %v1643, %v1649
      %v1659 = vmax.f32 %v1651, 0.0
      %v1660 = vmax.f32 %v1652, 0.0
      %v1661 = vmax.f32 %v1653, 0.0
      %v1662 = vmax.f32 %v1654, 0.0
      %v1663 = vmax.f32 %v1655, 0.0
      %v1664 = vmax.f32 %v1656, 0.0
      %v1665 = vmax.f32 %v1657, 0.0
      %v1666 = vmax.f32 %v1658, 0.0
      %1667 = vst [vmem:[#allocation2] sm:$0xf] 0
      %1668 = vst [vmem:[#allocation2 + $0x4] sm:$0x1] 0
      %1669 = vst [vmem:[#allocation2 + $0x8] sm:$0xf] 0
      %1670 = vst [vmem:[#allocation2 + $0xc] sm:$0x1] 0
      %1671 = vst [vmem:[#allocation2 + $0x10] sm:$0xf] 0
      %1672 = vst [vmem:[#allocation2 + $0x14] sm:$0x1] 0
      %1673 = vst [vmem:[#allocation2 + $0x18] sm:$0xf] 0
      %1674 = vst [vmem:[#allocation2 + $0x1c] sm:$0x1] 0
      %1675 = vst [vmem:[#allocation2 + $0x20] sm:$0xf] 0
      %1676 = vst [vmem:[#allocation2 + $0x24] sm:$0x1] 0
      %1677 = vst [vmem:[#allocation2 + $0x28] sm:$0xf] 0
      %1678 = vst [vmem:[#allocation2 + $0x2c] sm:$0x1] 0
      %1679 = vst [vmem:[#allocation2 + $0x30] sm:$0xf] 0
      %1680 = vst [vmem:[#allocation2 + $0x34] sm:$0x1] 0
      %1681 = vst [vmem:[#allocation2 + $0x38] sm:$0xf] 0
      %1682 = vst [vmem:[#allocation2 + $0x3c] sm:$0x1] 0
      %1683 = vst [vmem:[#allocation2 + $0x40] sm:$0xf] 0
      %1684 = vst [vmem:[#allocation2 + $0x44] sm:$0x1] 0
      %1685 = vst [vmem:[#allocation2 + $0x48] sm:$0xf] 0
      %1686 = vst [vmem:[#allocation2 + $0x4c] sm:$0x1] 0
      %v1687 = vpack.c.bf16 %v1659, %v1659
      %v1688 = vpack.c.bf16 %v1660, %v1660
      %v1689 = vpack.c.bf16 %v1661, %v1661
      %v1690 = vpack.c.bf16 %v1662, %v1662
      %v1691 = vpack.c.bf16 %v1663, %v1663
      %v1692 = vpack.c.bf16 %v1664, %v1664
      %v1693 = vpack.c.bf16 %v1665, %v1665
      %v1694 = vpack.c.bf16 %v1666, %v1666
      %v1703 = vunpack.c.l.b16 %v1687
      %v1704 = vunpack.c.l.b16 %v1688
      %v1705 = vunpack.c.l.b16 %v1689
      %v1706 = vunpack.c.l.b16 %v1690
      %v1707 = vunpack.c.l.b16 %v1691
      %v1708 = vunpack.c.l.b16 %v1692
      %v1709 = vunpack.c.l.b16 %v1693
      %v1710 = vunpack.c.l.b16 %v1694
      %v1711 = vpack.c.b16 %v1703, %v1703
      %v1712 = vpack.c.b16 %v1704, %v1704
      %v1713 = vpack.c.b16 %v1705, %v1705
      %v1714 = vpack.c.b16 %v1706, %v1706
      %v1715 = vpack.c.b16 %v1707, %v1707
      %v1716 = vpack.c.b16 %v1708, %v1708
      %v1717 = vpack.c.b16 %v1709, %v1709
      %v1718 = vpack.c.b16 %v1710, %v1710
      %v1720 = vshrl.u32 %v1711, 16
      %v1722 = vrot.slane %v1720, 7
      %v1723 = vshll.u32 %v1711, 16
      %v1725 = vor.u32 %v1722, %v1723
      %v1726 = vrot.slane %v1722, 4
      %v1728 = vshrl.u32 %v1712, 16
      %v1730 = vrot.slane %v1728, 7
      %v1731 = vshll.u32 %v1712, 16
      %v1733 = vor.u32 %v1730, %v1731
      %v1734 = vrot.slane %v1730, 4
      %v1736 = vshrl.u32 %v1713, 16
      %v1738 = vrot.slane %v1736, 7
      %v1739 = vshll.u32 %v1713, 16
      %v1741 = vor.u32 %v1738, %v1739
      %v1742 = vrot.slane %v1738, 4
      %v1744 = vshrl.u32 %v1714, 16
      %v1746 = vrot.slane %v1744, 7
      %v1747 = vshll.u32 %v1714, 16
      %v1749 = vor.u32 %v1746, %v1747
      %v1750 = vrot.slane %v1746, 4
      %v1752 = vshrl.u32 %v1715, 16
      %v1754 = vrot.slane %v1752, 7
      %v1755 = vshll.u32 %v1715, 16
      %v1757 = vor.u32 %v1754, %v1755
      %v1758 = vrot.slane %v1754, 4
      %v1760 = vshrl.u32 %v1716, 16
      %v1762 = vrot.slane %v1760, 7
      %v1763 = vshll.u32 %v1716, 16
      %v1765 = vor.u32 %v1762, %v1763
      %v1766 = vrot.slane %v1762, 4
      %v1768 = vshrl.u32 %v1717, 16
      %v1770 = vrot.slane %v1768, 7
      %v1771 = vshll.u32 %v1717, 16
      %v1773 = vor.u32 %v1770, %v1771
      %v1774 = vrot.slane %v1770, 4
      %v1776 = vshrl.u32 %v1718, 16
      %v1778 = vrot.slane %v1776, 7
      %v1779 = vshll.u32 %v1718, 16
      %v1781 = vor.u32 %v1778, %v1779
      %v1782 = vrot.slane %v1778, 4
      %s1799 = scalar_lea.vmem [#allocation2], 8
      %vm1800 = vcmask 1043456
      %vm1801 = vsmask.f32 7938
      %vm1802 = vmand %vm1800, %vm1801
      %v1803 = vld [vmem:[%s1799] sm:$0xf]
      %v1804 = vsel %vm1802, %v1725, %v1803
      %1805 = vst [vmem:[%s1799] sm:$0xf] %v1804
      %vm1806 = vcmask 1040384
      %vm1807 = vsmask.f32 256
      %vm1808 = vmand %vm1806, %vm1807
      %v1809 = vld [vmem:[%s1799 + $0x4] sm:$0x1]
      %v1810 = vsel %vm1808, %v1726, %v1809
      %1811 = vst [vmem:[%s1799 + $0x4] sm:$0x1] %v1810
      %v1812 = vld [vmem:[%s1799 + $0x8] sm:$0xf]
      %v1813 = vsel %vm1802, %v1733, %v1812
      %1814 = vst [vmem:[%s1799 + $0x8] sm:$0xf] %v1813
      %v1815 = vld [vmem:[%s1799 + $0xc] sm:$0x1]
      %v1816 = vsel %vm1808, %v1734, %v1815
      %1817 = vst [vmem:[%s1799 + $0xc] sm:$0x1] %v1816
      %v1818 = vld [vmem:[%s1799 + $0x10] sm:$0xf]
      %v1819 = vsel %vm1802, %v1741, %v1818
      %1820 = vst [vmem:[%s1799 + $0x10] sm:$0xf] %v1819
      %v1821 = vld [vmem:[%s1799 + $0x14] sm:$0x1]
      %v1822 = vsel %vm1808, %v1742, %v1821
      %1823 = vst [vmem:[%s1799 + $0x14] sm:$0x1] %v1822
      %v1824 = vld [vmem:[%s1799 + $0x18] sm:$0xf]
      %v1825 = vsel %vm1802, %v1749, %v1824
      %1826 = vst [vmem:[%s1799 + $0x18] sm:$0xf] %v1825
      %v1827 = vld [vmem:[%s1799 + $0x1c] sm:$0x1]
      %v1828 = vsel %vm1808, %v1750, %v1827
      %1829 = vst [vmem:[%s1799 + $0x1c] sm:$0x1] %v1828
      %v1830 = vld [vmem:[%s1799 + $0x20] sm:$0xf]
      %v1831 = vsel %vm1802, %v1757, %v1830
      %1832 = vst [vmem:[%s1799 + $0x20] sm:$0xf] %v1831
      %v1833 = vld [vmem:[%s1799 + $0x24] sm:$0x1]
      %v1834 = vsel %vm1808, %v1758, %v1833
      %1835 = vst [vmem:[%s1799 + $0x24] sm:$0x1] %v1834
      %v1836 = vld [vmem:[%s1799 + $0x28] sm:$0xf]
      %v1837 = vsel %vm1802, %v1765, %v1836
      %1838 = vst [vmem:[%s1799 + $0x28] sm:$0xf] %v1837
      %v1839 = vld [vmem:[%s1799 + $0x2c] sm:$0x1]
      %v1840 = vsel %vm1808, %v1766, %v1839
      %1841 = vst [vmem:[%s1799 + $0x2c] sm:$0x1] %v1840
      %v1842 = vld [vmem:[%s1799 + $0x30] sm:$0xf]
      %v1843 = vsel %vm1802, %v1773, %v1842
      %1844 = vst [vmem:[%s1799 + $0x30] sm:$0xf] %v1843
      %v1845 = vld [vmem:[%s1799 + $0x34] sm:$0x1]
      %v1846 = vsel %vm1808, %v1774, %v1845
      %1847 = vst [vmem:[%s1799 + $0x34] sm:$0x1] %v1846
      %v1848 = vld [vmem:[%s1799 + $0x38] sm:$0xf]
      %v1849 = vsel %vm1802, %v1781, %v1848
      %1850 = vst [vmem:[%s1799 + $0x38] sm:$0xf] %v1849
      %v1851 = vld [vmem:[%s1799 + $0x3c] sm:$0x1]
      %v1852 = vsel %vm1808, %v1782, %v1851
      %1853 = vst [vmem:[%s1799 + $0x3c] sm:$0x1] %v1852
      %v1854 = vld [vmem:[#allocation2] sm:$0xf]
      %v1855 = vld [vmem:[#allocation2 + $0x8] sm:$0xf]
      %v1856 = vld [vmem:[#allocation2 + $0x10] sm:$0xf]
      %v1857 = vld [vmem:[#allocation2 + $0x18] sm:$0xf]
      %v1858 = vld [vmem:[#allocation2 + $0x20] sm:$0xf]
      %v1859 = vld [vmem:[#allocation2 + $0x28] sm:$0xf]
      %v1860 = vld [vmem:[#allocation2 + $0x30] sm:$0xf]
      %v1861 = vld [vmem:[#allocation2 + $0x38] sm:$0xf]
      %v1862 = vld [vmem:[%s3] sm:$0xf]
      %v1863 = vld [vmem:[%s3 + $0x4] sm:$0xf]
      %v1864 = vld [vmem:[%s3 + $0x8] sm:$0xf]
      %v1865 = vld [vmem:[%s3 + $0xc] sm:$0xf]
      %v1866 = vld [vmem:[%s3 + $0x10] sm:$0xf]
      %v1867 = vld [vmem:[%s3 + $0x14] sm:$0xf]
      %v1868 = vld [vmem:[%s3 + $0x18] sm:$0xf]
      %v1869 = vld [vmem:[%s3 + $0x1c] sm:$0xf]
      %v1870 = vld [vmem:[%s3 + $0x20] sm:$0xf]
      %v1871 = vld [vmem:[%s3 + $0x24] sm:$0xf]
      %v1872 = vld [vmem:[%s3 + $0x28] sm:$0xf]
      %v1873 = vld [vmem:[%s3 + $0x2c] sm:$0xf]
      %v1874 = vld [vmem:[%s3 + $0x30] sm:$0xf]
      %v1875 = vld [vmem:[%s3 + $0x34] sm:$0xf]
      %v1876 = vld [vmem:[%s3 + $0x38] sm:$0xf]
      %v1877 = vld [vmem:[%s3 + $0x3c] sm:$0xf]
      %v1878 = vld [vmem:[#allocation2 + $0x4] sm:$0x1]
      %v1879 = vld [vmem:[#allocation2 + $0xc] sm:$0x1]
      %v1880 = vld [vmem:[#allocation2 + $0x14] sm:$0x1]
      %v1881 = vld [vmem:[#allocation2 + $0x1c] sm:$0x1]
      %v1882 = vld [vmem:[#allocation2 + $0x24] sm:$0x1]
      %v1883 = vld [vmem:[#allocation2 + $0x2c] sm:$0x1]
      %v1884 = vld [vmem:[#allocation2 + $0x34] sm:$0x1]
      %v1885 = vld [vmem:[#allocation2 + $0x3c] sm:$0x1]
      %v1887 = vshrl.u32 %v1854, 16
      %v1889 = vrot.slane %v1887, 4
      %v1890 = vshll.u32 %v1854, 16
      %v1892 = vrot.slane %v1890, 5
      %v1893 = vor.u32 %v1889, %v1892
      %v1894 = vrot.slane %v1893, 4
      %v1896 = vshll.u32 %v1878, 16
      %v1898 = vrot.slane %v1896, 5
      %v1899 = vsel %vm493, %v1894, %v1898
      %v1901 = vshrl.u32 %v1855, 16
      %v1903 = vrot.slane %v1901, 4
      %v1904 = vshll.u32 %v1855, 16
      %v1906 = vrot.slane %v1904, 5
      %v1907 = vor.u32 %v1903, %v1906
      %v1908 = vrot.slane %v1907, 4
      %v1910 = vshll.u32 %v1879, 16
      %v1912 = vrot.slane %v1910, 5
      %v1913 = vsel %vm493, %v1908, %v1912
      %v1915 = vshrl.u32 %v1856, 16
      %v1917 = vrot.slane %v1915, 4
      %v1918 = vshll.u32 %v1856, 16
      %v1920 = vrot.slane %v1918, 5
      %v1921 = vor.u32 %v1917, %v1920
      %v1922 = vrot.slane %v1921, 4
      %v1924 = vshll.u32 %v1880, 16
      %v1926 = vrot.slane %v1924, 5
      %v1927 = vsel %vm493, %v1922, %v1926
      %v1929 = vshrl.u32 %v1857, 16
      %v1931 = vrot.slane %v1929, 4
      %v1932 = vshll.u32 %v1857, 16
      %v1934 = vrot.slane %v1932, 5
      %v1935 = vor.u32 %v1931, %v1934
      %v1936 = vrot.slane %v1935, 4
      %v1938 = vshll.u32 %v1881, 16
      %v1940 = vrot.slane %v1938, 5
      %v1941 = vsel %vm493, %v1936, %v1940
      %v1943 = vshrl.u32 %v1858, 16
      %v1945 = vrot.slane %v1943, 4
      %v1946 = vshll.u32 %v1858, 16
      %v1948 = vrot.slane %v1946, 5
      %v1949 = vor.u32 %v1945, %v1948
      %v1950 = vrot.slane %v1949, 4
      %v1952 = vshll.u32 %v1882, 16
      %v1954 = vrot.slane %v1952, 5
      %v1955 = vsel %vm493, %v1950, %v1954
      %v1957 = vshrl.u32 %v1859, 16
      %v1959 = vrot.slane %v1957, 4
      %v1960 = vshll.u32 %v1859, 16
      %v1962 = vrot.slane %v1960, 5
      %v1963 = vor.u32 %v1959, %v1962
      %v1964 = vrot.slane %v1963, 4
      %v1966 = vshll.u32 %v1883, 16
      %v1968 = vrot.slane %v1966, 5
      %v1969 = vsel %vm493, %v1964, %v1968
      %v1971 = vshrl.u32 %v1860, 16
      %v1973 = vrot.slane %v1971, 4
      %v1974 = vshll.u32 %v1860, 16
      %v1976 = vrot.slane %v1974, 5
      %v1977 = vor.u32 %v1973, %v1976
      %v1978 = vrot.slane %v1977, 4
      %v1980 = vshll.u32 %v1884, 16
      %v1982 = vrot.slane %v1980, 5
      %v1983 = vsel %vm493, %v1978, %v1982
      %v1985 = vshrl.u32 %v1861, 16
      %v1987 = vrot.slane %v1985, 4
      %v1988 = vshll.u32 %v1861, 16
      %v1990 = vrot.slane %v1988, 5
      %v1991 = vor.u32 %v1987, %v1990
      %v1992 = vrot.slane %v1991, 4
      %v1994 = vshll.u32 %v1885, 16
      %v1996 = vrot.slane %v1994, 5
      %v1997 = vsel %vm493, %v1992, %v1996
      %s1998 = scalar_lea.vmem %s3, 64
      %v1999 = vld [vmem:[%s1998] sm:$0xf]
      %v2000 = vld [vmem:[%s1998 + $0x4] sm:$0xf]
      %v2001 = vld [vmem:[%s1998 + $0x8] sm:$0xf]
      %v2002 = vld [vmem:[%s1998 + $0xc] sm:$0xf]
      %v2003 = vld [vmem:[%s1998 + $0x10] sm:$0xf]
      %v2004 = vld [vmem:[%s1998 + $0x14] sm:$0xf]
      %v2005 = vld [vmem:[%s1998 + $0x18] sm:$0xf]
      %v2006 = vld [vmem:[%s1998 + $0x1c] sm:$0xf]
      %v2007 = vld [vmem:[%s1998 + $0x20] sm:$0xf]
      %v2008 = vld [vmem:[%s1998 + $0x24] sm:$0xf]
      %v2009 = vld [vmem:[%s1998 + $0x28] sm:$0xf]
      %v2010 = vld [vmem:[%s1998 + $0x2c] sm:$0xf]
      %v2011 = vld [vmem:[%s1998 + $0x30] sm:$0xf]
      %v2012 = vld [vmem:[%s1998 + $0x34] sm:$0xf]
      %v2013 = vld [vmem:[%s1998 + $0x38] sm:$0xf]
      %v2014 = vld [vmem:[%s1998 + $0x3c] sm:$0xf]
      %v2015 = vunpack.c.l.b16 %v1899
      %v2016 = vunpack.c.l.b16 %v1913
      %v2017 = vunpack.c.l.b16 %v1927
      %v2018 = vunpack.c.l.b16 %v1941
      %v2019 = vunpack.c.l.b16 %v1955
      %v2020 = vunpack.c.l.b16 %v1969
      %v2021 = vunpack.c.l.b16 %v1983
      %v2022 = vunpack.c.l.b16 %v1997
      %v2023 = vpack.c.b16 %v2016, %v2015
      %v2024 = vpack.c.b16 %v2018, %v2017
      %v2025 = vpack.c.b16 %v2020, %v2019
      %v2026 = vpack.c.b16 %v2022, %v2021
      %v2047 = vunpack.c.l.b16 %v1999
      %v2048 = vunpack.c.l.b16 %v2000
      %v2049 = vunpack.c.l.b16 %v2001
      %v2050 = vunpack.c.l.b16 %v2002
      %v2051 = vunpack.c.l.b16 %v2003
      %v2052 = vunpack.c.l.b16 %v2004
      %v2053 = vunpack.c.l.b16 %v2005
      %v2054 = vunpack.c.l.b16 %v2006
      %v2055 = vunpack.c.l.b16 %v2007
      %v2056 = vunpack.c.l.b16 %v2008
      %v2057 = vunpack.c.l.b16 %v2009
      %v2058 = vunpack.c.l.b16 %v2010
      %v2059 = vunpack.c.l.b16 %v2011
      %v2060 = vunpack.c.l.b16 %v2012
      %v2061 = vunpack.c.l.b16 %v2013
      %v2062 = vunpack.c.l.b16 %v2014
      %v2063 = vpack.c.b16 %v2048, %v2047
      %v2064 = vpack.c.b16 %v2050, %v2049
      %v2065 = vpack.c.b16 %v2052, %v2051
      %v2066 = vpack.c.b16 %v2054, %v2053
      %v2067 = vpack.c.b16 %v2056, %v2055
      %v2068 = vpack.c.b16 %v2058, %v2057
      %v2069 = vpack.c.b16 %v2060, %v2059
      %v2070 = vpack.c.b16 %v2062, %v2061
      %2079 = vmatprep.subr.bf16.mxu0 0
      %2080 = vmatpush1.bf16.msra.mxu0 %v2063
      %2081 = vmatprep.subr.bf16.mxu0 0
      %2082 = vmatpush1.bf16.msra.mxu0 %v2064
      %2083 = vmatprep.subr.bf16.mxu0 0
      %2084 = vmatpush1.bf16.msra.mxu0 %v2065
      %2085 = vmatprep.subr.bf16.mxu0 0
      %2086 = vmatpush1.bf16.msra.mxu0 %v2066
      %2087 = vmatprep.subr.bf16.mxu0 0
      %2088 = vmatpush1.bf16.msra.mxu0 %v2067
      %2089 = vmatprep.subr.bf16.mxu0 0
      %2090 = vmatpush1.bf16.msra.mxu0 %v2068
      %2091 = vmatprep.subr.bf16.mxu0 0
      %2092 = vmatpush1.bf16.msra.mxu0 %v2069
      %2093 = vmatprep.subr.bf16.mxu0 0
      %2094 = vmatpush1.bf16.msra.mxu0 %v2070
      %2095 = vmatprep.subr.bf16.mxu0 0
      %2096 = vmatpush1.bf16.msra.mxu0 0
      %2097 = vmatprep.subr.bf16.mxu0 0
      %2098 = vmatpush1.bf16.msra.mxu0 0
      %2099 = vmatprep.subr.bf16.mxu0 0
      %2100 = vmatpush1.bf16.msra.mxu0 0
      %2101 = vmatprep.subr.bf16.mxu0 0
      %2102 = vmatpush1.bf16.msra.mxu0 0
      %2103 = vmatprep.subr.bf16.mxu0 0
      %2104 = vmatpush1.bf16.msra.mxu0 0
      %2105 = vmatprep.subr.bf16.mxu0 0
      %2106 = vmatpush1.bf16.msra.mxu0 0
      %2107 = vmatprep.subr.bf16.mxu0 0
      %2108 = vmatpush1.bf16.msra.mxu0 0
      %2109 = vmatprep.subr.bf16.mxu0 0
      %2110 = vmatpush1.bf16.msra.mxu0 0
      %2111 = vmatprep.mubr.bf16.mxu0 0
      %2112 = vmatmul.mubr.bf16.gmra.mrb[0].mxu0 %v2023
      %v2113 = vpop.f32.mrb[0].mxu0
      %v2114 = vadd.f32 0.0, %v2113
      %v2115 = vpop.f32.mrb[0].mxu0
      %v2116 = vpop.f32.mrb[0].mxu0
      %v2117 = vadd.f32 0.0, %v2116
      %v2118 = vpop.f32.mrb[0].mxu0
      %2119 = vmatprep.mubr.bf16.mxu0 0
      %2120 = vmatmul.mubr.bf16.gmra.mrb[0].mxu0 %v2024
      %v2121 = vpop.f32.mrb[0].mxu0
      %v2122 = vadd.f32 0.0, %v2121
      %v2123 = vpop.f32.mrb[0].mxu0
      %v2124 = vpop.f32.mrb[0].mxu0
      %v2125 = vadd.f32 0.0, %v2124
      %v2126 = vpop.f32.mrb[0].mxu0
      %2127 = vmatprep.mubr.bf16.mxu0 0
      %2128 = vmatmul.mubr.bf16.gmra.mrb[0].mxu0 %v2025
      %v2129 = vpop.f32.mrb[0].mxu0
      %v2130 = vadd.f32 0.0, %v2129
      %v2131 = vpop.f32.mrb[0].mxu0
      %v2132 = vpop.f32.mrb[0].mxu0
      %v2133 = vadd.f32 0.0, %v2132
      %v2134 = vpop.f32.mrb[0].mxu0
      %2135 = vmatprep.mubr.bf16.mxu0 0
      %2136 = vmatmul.mubr.bf16.gmra.mrb[0].mxu0 %v2026
      %v2137 = vpop.f32.mrb[0].mxu0
      %v2138 = vadd.f32 0.0, %v2137
      %v2139 = vpop.f32.mrb[0].mxu0
      %v2140 = vpop.f32.mrb[0].mxu0
      %v2141 = vadd.f32 0.0, %v2140
      %v2142 = vpop.f32.mrb[0].mxu0
      %2143 = vdwg.mxu0
      %v2152 = vunpack.c.l.b16 %v1854
      %v2153 = vunpack.c.l.b16 %v1855
      %v2154 = vunpack.c.l.b16 %v1856
      %v2155 = vunpack.c.l.b16 %v1857
      %v2156 = vunpack.c.l.b16 %v1858
      %v2157 = vunpack.c.l.b16 %v1859
      %v2158 = vunpack.c.l.b16 %v1860
      %v2159 = vunpack.c.l.b16 %v1861
      %v2160 = vpack.c.b16 %v2153, %v2152
      %v2161 = vpack.c.b16 %v2155, %v2154
      %v2162 = vpack.c.b16 %v2157, %v2156
      %v2163 = vpack.c.b16 %v2159, %v2158
      %v2184 = vunpack.c.l.b16 %v1862
      %v2185 = vunpack.c.l.b16 %v1863
      %v2186 = vunpack.c.l.b16 %v1864
      %v2187 = vunpack.c.l.b16 %v1865
      %v2188 = vunpack.c.l.b16 %v1866
      %v2189 = vunpack.c.l.b16 %v1867
      %v2190 = vunpack.c.l.b16 %v1868
      %v2191 = vunpack.c.l.b16 %v1869
      %v2192 = vunpack.c.l.b16 %v1870
      %v2193 = vunpack.c.l.b16 %v1871
      %v2194 = vunpack.c.l.b16 %v1872
      %v2195 = vunpack.c.l.b16 %v1873
      %v2196 = vunpack.c.l.b16 %v1874
      %v2197 = vunpack.c.l.b16 %v1875
      %v2198 = vunpack.c.l.b16 %v1876
      %v2199 = vunpack.c.l.b16 %v1877
      %v2200 = vpack.c.b16 %v2185, %v2184
      %v2201 = vpack.c.b16 %v2187, %v2186
      %v2202 = vpack.c.b16 %v2189, %v2188
      %v2203 = vpack.c.b16 %v2191, %v2190
      %v2204 = vpack.c.b16 %v2193, %v2192
      %v2205 = vpack.c.b16 %v2195, %v2194
      %v2206 = vpack.c.b16 %v2197, %v2196
      %v2207 = vpack.c.b16 %v2199, %v2198
      %2216 = vmatprep.subr.bf16.mxu0 0
      %2217 = vmatpush1.bf16.msra.mxu0 %v2200
      %2218 = vmatprep.subr.bf16.mxu0 0
      %2219 = vmatpush1.bf16.msra.mxu0 %v2201
      %2220 = vmatprep.subr.bf16.mxu0 0
      %2221 = vmatpush1.bf16.msra.mxu0 %v2202
      %2222 = vmatprep.subr.bf16.mxu0 0
      %2223 = vmatpush1.bf16.msra.mxu0 %v2203
      %2224 = vmatprep.subr.bf16.mxu0 0
      %2225 = vmatpush1.bf16.msra.mxu0 %v2204
      %2226 = vmatprep.subr.bf16.mxu0 0
      %2227 = vmatpush1.bf16.msra.mxu0 %v2205
      %2228 = vmatprep.subr.bf16.mxu0 0
      %2229 = vmatpush1.bf16.msra.mxu0 %v2206
      %2230 = vmatprep.subr.bf16.mxu0 0
      %2231 = vmatpush1.bf16.msra.mxu0 %v2207
      %2232 = vmatprep.subr.bf16.mxu0 0
      %2233 = vmatpush1.bf16.msra.mxu0 0
      %2234 = vmatprep.subr.bf16.mxu0 0
      %2235 = vmatpush1.bf16.msra.mxu0 0
      %2236 = vmatprep.subr.bf16.mxu0 0
      %2237 = vmatpush1.bf16.msra.mxu0 0
      %2238 = vmatprep.subr.bf16.mxu0 0
      %2239 = vmatpush1.bf16.msra.mxu0 0
      %2240 = vmatprep.subr.bf16.mxu0 0
      %2241 = vmatpush1.bf16.msra.mxu0 0
      %2242 = vmatprep.subr.bf16.mxu0 0
      %2243 = vmatpush1.bf16.msra.mxu0 0
      %2244 = vmatprep.subr.bf16.mxu0 0
      %2245 = vmatpush1.bf16.msra.mxu0 0
      %2246 = vmatprep.subr.bf16.mxu0 0
      %2247 = vmatpush1.bf16.msra.mxu0 0
      %2248 = vmatprep.mubr.bf16.mxu0 0
      %2249 = vmatmul.mubr.bf16.gmra.mrb[0].mxu0 %v2160
      %v2250 = vpop.f32.mrb[0].mxu0
      %v2251 = vadd.f32 %v2114, %v2250
      %v2252 = vpop.f32.mrb[0].mxu0
      %v2253 = vpop.f32.mrb[0].mxu0
      %v2254 = vadd.f32 %v2117, %v2253
      %v2255 = vpop.f32.mrb[0].mxu0
      %2256 = vmatprep.mubr.bf16.mxu0 0
      %2257 = vmatmul.mubr.bf16.gmra.mrb[0].mxu0 %v2161
      %v2258 = vpop.f32.mrb[0].mxu0
      %v2259 = vadd.f32 %v2122, %v2258
      %v2260 = vpop.f32.mrb[0].mxu0
      %v2261 = vpop.f32.mrb[0].mxu0
      %v2262 = vadd.f32 %v2125, %v2261
      %v2263 = vpop.f32.mrb[0].mxu0
      %2264 = vmatprep.mubr.bf16.mxu0 0
      %2265 = vmatmul.mubr.bf16.gmra.mrb[0].mxu0 %v2162
      %v2266 = vpop.f32.mrb[0].mxu0
      %v2267 = vadd.f32 %v2130, %v2266
      %v2268 = vpop.f32.mrb[0].mxu0
      %v2269 = vpop.f32.mrb[0].mxu0
      %v2270 = vadd.f32 %v2133, %v2269
      %v2271 = vpop.f32.mrb[0].mxu0
      %2272 = vmatprep.mubr.bf16.mxu0 0
      %2273 = vmatmul.mubr.bf16.gmra.mrb[0].mxu0 %v2163
      %v2274 = vpop.f32.mrb[0].mxu0
      %v2275 = vadd.f32 %v2138, %v2274
      %v2276 = vpop.f32.mrb[0].mxu0
      %v2277 = vpop.f32.mrb[0].mxu0
      %v2278 = vadd.f32 %v2141, %v2277
      %v2279 = vpop.f32.mrb[0].mxu0
      %2280 = vdwg.mxu0
      %v2281 = vld [vmem:[#allocation2] sm:$0xe]
      %v2282 = vld [vmem:[#allocation2 + $0x8] sm:$0xe]
      %v2283 = vld [vmem:[#allocation2 + $0x10] sm:$0xe]
      %v2284 = vld [vmem:[#allocation2 + $0x18] sm:$0xe]
      %v2285 = vld [vmem:[#allocation2 + $0x20] sm:$0xe]
      %v2286 = vld [vmem:[#allocation2 + $0x28] sm:$0xe]
      %v2287 = vld [vmem:[#allocation2 + $0x30] sm:$0xe]
      %v2288 = vld [vmem:[#allocation2 + $0x38] sm:$0xe]
      %vm2305 = vcmask 1042432
      %vm2306 = vcmask 1046532
      %vm2307 = vmor %vm2305, %vm2306
      %v2308 = vrot.slane %v2281, 5
      %v2309 = vrot.slane %v2308, 4
      %v2310 = vrot.slane %v1878, 5
      %v2311 = vsel %vm2307, %v2309, %v2310
      %v2312 = vrot.slane %v2282, 5
      %v2313 = vrot.slane %v2312, 4
      %v2314 = vrot.slane %v1879, 5
      %v2315 = vsel %vm2307, %v2313, %v2314
      %v2316 = vrot.slane %v2283, 5
      %v2317 = vrot.slane %v2316, 4
      %v2318 = vrot.slane %v1880, 5
      %v2319 = vsel %vm2307, %v2317, %v2318
      %v2320 = vrot.slane %v2284, 5
      %v2321 = vrot.slane %v2320, 4
      %v2322 = vrot.slane %v1881, 5
      %v2323 = vsel %vm2307, %v2321, %v2322
      %v2324 = vrot.slane %v2285, 5
      %v2325 = vrot.slane %v2324, 4
      %v2326 = vrot.slane %v1882, 5
      %v2327 = vsel %vm2307, %v2325, %v2326
      %v2328 = vrot.slane %v2286, 5
      %v2329 = vrot.slane %v2328, 4
      %v2330 = vrot.slane %v1883, 5
      %v2331 = vsel %vm2307, %v2329, %v2330
      %v2332 = vrot.slane %v2287, 5
      %v2333 = vrot.slane %v2332, 4
      %v2334 = vrot.slane %v1884, 5
      %v2335 = vsel %vm2307, %v2333, %v2334
      %v2336 = vrot.slane %v2288, 5
      %v2337 = vrot.slane %v2336, 4
      %v2338 = vrot.slane %v1885, 5
      %v2339 = vsel %vm2307, %v2337, %v2338
      %s2340 = scalar_lea.vmem %s3, 128
      %v2341 = vld [vmem:[%s2340] sm:$0xf]
      %v2342 = vld [vmem:[%s2340 + $0x4] sm:$0xf]
      %v2343 = vld [vmem:[%s2340 + $0x8] sm:$0xf]
      %v2344 = vld [vmem:[%s2340 + $0xc] sm:$0xf]
      %v2345 = vld [vmem:[%s2340 + $0x10] sm:$0xf]
      %v2346 = vld [vmem:[%s2340 + $0x14] sm:$0xf]
      %v2347 = vld [vmem:[%s2340 + $0x18] sm:$0xf]
      %v2348 = vld [vmem:[%s2340 + $0x1c] sm:$0xf]
      %v2349 = vld [vmem:[%s2340 + $0x20] sm:$0xf]
      %v2350 = vld [vmem:[%s2340 + $0x24] sm:$0xf]
      %v2351 = vld [vmem:[%s2340 + $0x28] sm:$0xf]
      %v2352 = vld [vmem:[%s2340 + $0x2c] sm:$0xf]
      %v2353 = vld [vmem:[%s2340 + $0x30] sm:$0xf]
      %v2354 = vld [vmem:[%s2340 + $0x34] sm:$0xf]
      %v2355 = vld [vmem:[%s2340 + $0x38] sm:$0xf]
      %v2356 = vld [vmem:[%s2340 + $0x3c] sm:$0xf]
      %v2357 = vunpack.c.l.b16 %v2311
      %v2358 = vunpack.c.l.b16 %v2315
      %v2359 = vunpack.c.l.b16 %v2319
      %v2360 = vunpack.c.l.b16 %v2323
      %v2361 = vunpack.c.l.b16 %v2327
      %v2362 = vunpack.c.l.b16 %v2331
      %v2363 = vunpack.c.l.b16 %v2335
      %v2364 = vunpack.c.l.b16 %v2339
      %v2365 = vpack.c.b16 %v2358, %v2357
      %v2366 = vpack.c.b16 %v2360, %v2359
      %v2367 = vpack.c.b16 %v2362, %v2361
      %v2368 = vpack.c.b16 %v2364, %v2363
      %v2389 = vunpack.c.l.b16 %v2341
      %v2390 = vunpack.c.l.b16 %v2342
      %v2391 = vunpack.c.l.b16 %v2343
      %v2392 = vunpack.c.l.b16 %v2344
      %v2393 = vunpack.c.l.b16 %v2345
      %v2394 = vunpack.c.l.b16 %v2346
      %v2395 = vunpack.c.l.b16 %v2347
      %v2396 = vunpack.c.l.b16 %v2348
      %v2397 = vunpack.c.l.b16 %v2349
      %v2398 = vunpack.c.l.b16 %v2350
      %v2399 = vunpack.c.l.b16 %v2351
      %v2400 = vunpack.c.l.b16 %v2352
      %v2401 = vunpack.c.l.b16 %v2353
      %v2402 = vunpack.c.l.b16 %v2354
      %v2403 = vunpack.c.l.b16 %v2355
      %v2404 = vunpack.c.l.b16 %v2356
      %v2405 = vpack.c.b16 %v2390, %v2389
      %v2406 = vpack.c.b16 %v2392, %v2391
      %v2407 = vpack.c.b16 %v2394, %v2393
      %v2408 = vpack.c.b16 %v2396, %v2395
      %v2409 = vpack.c.b16 %v2398, %v2397
      %v2410 = vpack.c.b16 %v2400, %v2399
      %v2411 = vpack.c.b16 %v2402, %v2401
      %v2412 = vpack.c.b16 %v2404, %v2403
      %2421 = vmatprep.subr.bf16.mxu0 0
      %2422 = vmatpush1.bf16.msra.mxu0 %v2405
      %2423 = vmatprep.subr.bf16.mxu0 0
      %2424 = vmatpush1.bf16.msra.mxu0 %v2406
      %2425 = vmatprep.subr.bf16.mxu0 0
      %2426 = vmatpush1.bf16.msra.mxu0 %v2407
      %2427 = vmatprep.subr.bf16.mxu0 0
      %2428 = vmatpush1.bf16.msra.mxu0 %v2408
      %2429 = vmatprep.subr.bf16.mxu0 0
      %2430 = vmatpush1.bf16.msra.mxu0 %v2409
      %2431 = vmatprep.subr.bf16.mxu0 0
      %2432 = vmatpush1.bf16.msra.mxu0 %v2410
      %2433 = vmatprep.subr.bf16.mxu0 0
      %2434 = vmatpush1.bf16.msra.mxu0 %v2411
      %2435 = vmatprep.subr.bf16.mxu0 0
      %2436 = vmatpush1.bf16.msra.mxu0 %v2412
      %2437 = vmatprep.subr.bf16.mxu0 0
      %2438 = vmatpush1.bf16.msra.mxu0 0
      %2439 = vmatprep.subr.bf16.mxu0 0
      %2440 = vmatpush1.bf16.msra.mxu0 0
      %2441 = vmatprep.subr.bf16.mxu0 0
      %2442 = vmatpush1.bf16.msra.mxu0 0
      %2443 = vmatprep.subr.bf16.mxu0 0
      %2444 = vmatpush1.bf16.msra.mxu0 0
      %2445 = vmatprep.subr.bf16.mxu0 0
      %2446 = vmatpush1.bf16.msra.mxu0 0
      %2447 = vmatprep.subr.bf16.mxu0 0
      %2448 = vmatpush1.bf16.msra.mxu0 0
      %2449 = vmatprep.subr.bf16.mxu0 0
      %2450 = vmatpush1.bf16.msra.mxu0 0
      %2451 = vmatprep.subr.bf16.mxu0 0
      %2452 = vmatpush1.bf16.msra.mxu0 0
      %2453 = vmatprep.mubr.bf16.mxu0 0
      %2454 = vmatmul.mubr.bf16.gmra.mrb[0].mxu0 %v2365
      %v2455 = vpop.f32.mrb[0].mxu0
      %v2456 = vadd.f32 0.0, %v2455
      %v2457 = vpop.f32.mrb[0].mxu0
      %v2458 = vpop.f32.mrb[0].mxu0
      %v2459 = vadd.f32 0.0, %v2458
      %v2460 = vpop.f32.mrb[0].mxu0
      %2461 = vmatprep.mubr.bf16.mxu0 0
      %2462 = vmatmul.mubr.bf16.gmra.mrb[0].mxu0 %v2366
      %v2463 = vpop.f32.mrb[0].mxu0
      %v2464 = vadd.f32 0.0, %v2463
      %v2465 = vpop.f32.mrb[0].mxu0
      %v2466 = vpop.f32.mrb[0].mxu0
      %v2467 = vadd.f32 0.0, %v2466
      %v2468 = vpop.f32.mrb[0].mxu0
      %2469 = vmatprep.mubr.bf16.mxu0 0
      %2470 = vmatmul.mubr.bf16.gmra.mrb[0].mxu0 %v2367
      %v2471 = vpop.f32.mrb[0].mxu0
      %v2472 = vadd.f32 0.0, %v2471
      %v2473 = vpop.f32.mrb[0].mxu0
      %v2474 = vpop.f32.mrb[0].mxu0
      %v2475 = vadd.f32 0.0, %v2474
      %v2476 = vpop.f32.mrb[0].mxu0
      %2477 = vmatprep.mubr.bf16.mxu0 0
      %2478 = vmatmul.mubr.bf16.gmra.mrb[0].mxu0 %v2368
      %v2479 = vpop.f32.mrb[0].mxu0
      %v2480 = vadd.f32 0.0, %v2479
      %v2481 = vpop.f32.mrb[0].mxu0
      %v2482 = vpop.f32.mrb[0].mxu0
      %v2483 = vadd.f32 0.0, %v2482
      %v2484 = vpop.f32.mrb[0].mxu0
      %2485 = vdwg.mxu0
      %v2486 = vadd.f32 %v2251, %v2456
      %v2487 = vadd.f32 %v2254, %v2459
      %v2488 = vadd.f32 %v2259, %v2464
      %v2489 = vadd.f32 %v2262, %v2467
      %v2490 = vadd.f32 %v2267, %v2472
      %v2491 = vadd.f32 %v2270, %v2475
      %v2492 = vadd.f32 %v2275, %v2480
      %v2493 = vadd.f32 %v2278, %v2483
      %v2494 = vld [vmem:[%s1799] sm:$0xf]
      %v2495 = vld [vmem:[%s1799 + $0x8] sm:$0xf]
      %v2496 = vld [vmem:[%s1799 + $0x10] sm:$0xf]
      %v2497 = vld [vmem:[%s1799 + $0x18] sm:$0xf]
      %v2498 = vld [vmem:[%s1799 + $0x20] sm:$0xf]
      %v2499 = vld [vmem:[%s1799 + $0x28] sm:$0xf]
      %v2500 = vld [vmem:[%s1799 + $0x30] sm:$0xf]
      %v2501 = vld [vmem:[%s1799 + $0x38] sm:$0xf]
      %s2502 = scalar_lea.vmem %s3, 192
      %v2503 = vld [vmem:[%s2502] sm:$0xf]
      %v2504 = vld [vmem:[%s2502 + $0x4] sm:$0xf]
      %v2505 = vld [vmem:[%s2502 + $0x8] sm:$0xf]
      %v2506 = vld [vmem:[%s2502 + $0xc] sm:$0xf]
      %v2507 = vld [vmem:[%s2502 + $0x10] sm:$0xf]
      %v2508 = vld [vmem:[%s2502 + $0x14] sm:$0xf]
      %v2509 = vld [vmem:[%s2502 + $0x18] sm:$0xf]
      %v2510 = vld [vmem:[%s2502 + $0x1c] sm:$0xf]
      %v2511 = vld [vmem:[%s2502 + $0x20] sm:$0xf]
      %v2512 = vld [vmem:[%s2502 + $0x24] sm:$0xf]
      %v2513 = vld [vmem:[%s2502 + $0x28] sm:$0xf]
      %v2514 = vld [vmem:[%s2502 + $0x2c] sm:$0xf]
      %v2515 = vld [vmem:[%s2502 + $0x30] sm:$0xf]
      %v2516 = vld [vmem:[%s2502 + $0x34] sm:$0xf]
      %v2517 = vld [vmem:[%s2502 + $0x38] sm:$0xf]
      %v2518 = vld [vmem:[%s2502 + $0x3c] sm:$0xf]
      %v2527 = vunpack.c.l.b16 %v2494
      %v2528 = vunpack.c.l.b16 %v2495
      %v2529 = vunpack.c.l.b16 %v2496
      %v2530 = vunpack.c.l.b16 %v2497
      %v2531 = vunpack.c.l.b16 %v2498
      %v2532 = vunpack.c.l.b16 %v2499
      %v2533 = vunpack.c.l.b16 %v2500
      %v2534 = vunpack.c.l.b16 %v2501
      %v2535 = vpack.c.b16 %v2528, %v2527
      %v2536 = vpack.c.b16 %v2530, %v2529
      %v2537 = vpack.c.b16 %v2532, %v2531
      %v2538 = vpack.c.b16 %v2534, %v2533
      %v2559 = vunpack.c.l.b16 %v2503
      %v2560 = vunpack.c.l.b16 %v2504
      %v2561 = vunpack.c.l.b16 %v2505
      %v2562 = vunpack.c.l.b16 %v2506
      %v2563 = vunpack.c.l.b16 %v2507
      %v2564 = vunpack.c.l.b16 %v2508
      %v2565 = vunpack.c.l.b16 %v2509
      %v2566 = vunpack.c.l.b16 %v2510
      %v2567 = vunpack.c.l.b16 %v2511
      %v2568 = vunpack.c.l.b16 %v2512
      %v2569 = vunpack.c.l.b16 %v2513
      %v2570 = vunpack.c.l.b16 %v2514
      %v2571 = vunpack.c.l.b16 %v2515
      %v2572 = vunpack.c.l.b16 %v2516
      %v2573 = vunpack.c.l.b16 %v2517
      %v2574 = vunpack.c.l.b16 %v2518
      %v2575 = vpack.c.b16 %v2560, %v2559
      %v2576 = vpack.c.b16 %v2562, %v2561
      %v2577 = vpack.c.b16 %v2564, %v2563
      %v2578 = vpack.c.b16 %v2566, %v2565
      %v2579 = vpack.c.b16 %v2568, %v2567
      %v2580 = vpack.c.b16 %v2570, %v2569
      %v2581 = vpack.c.b16 %v2572, %v2571
      %v2582 = vpack.c.b16 %v2574, %v2573
      %2591 = vmatprep.subr.bf16.mxu0 0
      %2592 = vmatpush1.bf16.msra.mxu0 %v2575
      %2593 = vmatprep.subr.bf16.mxu0 0
      %2594 = vmatpush1.bf16.msra.mxu0 %v2576
      %2595 = vmatprep.subr.bf16.mxu0 0
      %2596 = vmatpush1.bf16.msra.mxu0 %v2577
      %2597 = vmatprep.subr.bf16.mxu0 0
      %2598 = vmatpush1.bf16.msra.mxu0 %v2578
      %2599 = vmatprep.subr.bf16.mxu0 0
      %2600 = vmatpush1.bf16.msra.mxu0 %v2579
      %2601 = vmatprep.subr.bf16.mxu0 0
      %2602 = vmatpush1.bf16.msra.mxu0 %v2580
      %2603 = vmatprep.subr.bf16.mxu0 0
      %2604 = vmatpush1.bf16.msra.mxu0 %v2581
      %2605 = vmatprep.subr.bf16.mxu0 0
      %2606 = vmatpush1.bf16.msra.mxu0 %v2582
      %2607 = vmatprep.subr.bf16.mxu0 0
      %2608 = vmatpush1.bf16.msra.mxu0 0
      %2609 = vmatprep.subr.bf16.mxu0 0
      %2610 = vmatpush1.bf16.msra.mxu0 0
      %2611 = vmatprep.subr.bf16.mxu0 0
      %2612 = vmatpush1.bf16.msra.mxu0 0
      %2613 = vmatprep.subr.bf16.mxu0 0
      %2614 = vmatpush1.bf16.msra.mxu0 0
      %2615 = vmatprep.subr.bf16.mxu0 0
      %2616 = vmatpush1.bf16.msra.mxu0 0
      %2617 = vmatprep.subr.bf16.mxu0 0
      %2618 = vmatpush1.bf16.msra.mxu0 0
      %2619 = vmatprep.subr.bf16.mxu0 0
      %2620 = vmatpush1.bf16.msra.mxu0 0
      %2621 = vmatprep.subr.bf16.mxu0 0
      %2622 = vmatpush1.bf16.msra.mxu0 0
      %2623 = vmatprep.mubr.bf16.mxu0 0
      %2624 = vmatmul.mubr.bf16.gmra.mrb[0].mxu0 %v2535
      %v2625 = vpop.f32.mrb[0].mxu0
      %v2626 = vadd.f32 0.0, %v2625
      %v2627 = vpop.f32.mrb[0].mxu0
      %v2628 = vpop.f32.mrb[0].mxu0
      %v2629 = vadd.f32 0.0, %v2628
      %v2630 = vpop.f32.mrb[0].mxu0
      %2631 = vmatprep.mubr.bf16.mxu0 0
      %2632 = vmatmul.mubr.bf16.gmra.mrb[0].mxu0 %v2536
      %v2633 = vpop.f32.mrb[0].mxu0
      %v2634 = vadd.f32 0.0, %v2633
      %v2635 = vpop.f32.mrb[0].mxu0
      %v2636 = vpop.f32.mrb[0].mxu0
      %v2637 = vadd.f32 0.0, %v2636
      %v2638 = vpop.f32.mrb[0].mxu0
      %2639 = vmatprep.mubr.bf16.mxu0 0
      %2640 = vmatmul.mubr.bf16.gmra.mrb[0].mxu0 %v2537
      %v2641 = vpop.f32.mrb[0].mxu0
      %v2642 = vadd.f32 0.0, %v2641
      %v2643 = vpop.f32.mrb[0].mxu0
      %v2644 = vpop.f32.mrb[0].mxu0
      %v2645 = vadd.f32 0.0, %v2644
      %v2646 = vpop.f32.mrb[0].mxu0
      %2647 = vmatprep.mubr.bf16.mxu0 0
      %2648 = vmatmul.mubr.bf16.gmra.mrb[0].mxu0 %v2538
      %v2649 = vpop.f32.mrb[0].mxu0
      %v2650 = vadd.f32 0.0, %v2649
      %v2651 = vpop.f32.mrb[0].mxu0
      %v2652 = vpop.f32.mrb[0].mxu0
      %v2653 = vadd.f32 0.0, %v2652
      %v2654 = vpop.f32.mrb[0].mxu0
      %2655 = vdwg.mxu0
      %v2656 = vadd.f32 %v2486, %v2626
      %v2657 = vadd.f32 %v2487, %v2629
      %v2658 = vadd.f32 %v2488, %v2634
      %v2659 = vadd.f32 %v2489, %v2637
      %v2660 = vadd.f32 %v2490, %v2642
      %v2661 = vadd.f32 %v2491, %v2645
      %v2662 = vadd.f32 %v2492, %v2650
      %v2663 = vadd.f32 %v2493, %v2653
      %v2664 = vld [vmem:[%s1799] sm:$0xf]
      %v2665 = vld [vmem:[%s1799 + $0x4] sm:$0x1]
      %v2666 = vld [vmem:[%s1799 + $0x8] sm:$0xf]
      %v2667 = vld [vmem:[%s1799 + $0xc] sm:$0x1]
      %v2668 = vld [vmem:[%s1799 + $0x10] sm:$0xf]
      %v2669 = vld [vmem:[%s1799 + $0x14] sm:$0x1]
      %v2670 = vld [vmem:[%s1799 + $0x18] sm:$0xf]
      %v2671 = vld [vmem:[%s1799 + $0x1c] sm:$0x1]
      %v2672 = vld [vmem:[%s1799 + $0x20] sm:$0xf]
      %v2673 = vld [vmem:[%s1799 + $0x24] sm:$0x1]
      %v2674 = vld [vmem:[%s1799 + $0x28] sm:$0xf]
      %v2675 = vld [vmem:[%s1799 + $0x2c] sm:$0x1]
      %v2676 = vld [vmem:[%s1799 + $0x30] sm:$0xf]
      %v2677 = vld [vmem:[%s1799 + $0x34] sm:$0x1]
      %v2678 = vld [vmem:[%s1799 + $0x38] sm:$0xf]
      %v2679 = vld [vmem:[%s1799 + $0x3c] sm:$0x1]
      %v2681 = vshrl.u32 %v2664, 16
      %v2683 = vrot.slane %v2681, 4
      %v2684 = vshll.u32 %v2664, 16
      %v2686 = vrot.slane %v2684, 5
      %v2687 = vor.u32 %v2683, %v2686
      %v2688 = vrot.slane %v2687, 4
      %v2690 = vshll.u32 %v2665, 16
      %v2692 = vrot.slane %v2690, 5
      %v2693 = vsel %vm493, %v2688, %v2692
      %v2695 = vshrl.u32 %v2666, 16
      %v2697 = vrot.slane %v2695, 4
      %v2698 = vshll.u32 %v2666, 16
      %v2700 = vrot.slane %v2698, 5
      %v2701 = vor.u32 %v2697, %v2700
      %v2702 = vrot.slane %v2701, 4
      %v2704 = vshll.u32 %v2667, 16
      %v2706 = vrot.slane %v2704, 5
      %v2707 = vsel %vm493, %v2702, %v2706
      %v2709 = vshrl.u32 %v2668, 16
      %v2711 = vrot.slane %v2709, 4
      %v2712 = vshll.u32 %v2668, 16
      %v2714 = vrot.slane %v2712, 5
      %v2715 = vor.u32 %v2711, %v2714
      %v2716 = vrot.slane %v2715, 4
      %v2718 = vshll.u32 %v2669, 16
      %v2720 = vrot.slane %v2718, 5
      %v2721 = vsel %vm493, %v2716, %v2720
      %v2723 = vshrl.u32 %v2670, 16
      %v2725 = vrot.slane %v2723, 4
      %v2726 = vshll.u32 %v2670, 16
      %v2728 = vrot.slane %v2726, 5
      %v2729 = vor.u32 %v2725, %v2728
      %v2730 = vrot.slane %v2729, 4
      %v2732 = vshll.u32 %v2671, 16
      %v2734 = vrot.slane %v2732, 5
      %v2735 = vsel %vm493, %v2730, %v2734
      %v2737 = vshrl.u32 %v2672, 16
      %v2739 = vrot.slane %v2737, 4
      %v2740 = vshll.u32 %v2672, 16
      %v2742 = vrot.slane %v2740, 5
      %v2743 = vor.u32 %v2739, %v2742
      %v2744 = vrot.slane %v2743, 4
      %v2746 = vshll.u32 %v2673, 16
      %v2748 = vrot.slane %v2746, 5
      %v2749 = vsel %vm493, %v2744, %v2748
      %v2751 = vshrl.u32 %v2674, 16
      %v2753 = vrot.slane %v2751, 4
      %v2754 = vshll.u32 %v2674, 16
      %v2756 = vrot.slane %v2754, 5
      %v2757 = vor.u32 %v2753, %v2756
      %v2758 = vrot.slane %v2757, 4
      %v2760 = vshll.u32 %v2675, 16
      %v2762 = vrot.slane %v2760, 5
      %v2763 = vsel %vm493, %v2758, %v2762
      %v2765 = vshrl.u32 %v2676, 16
      %v2767 = vrot.slane %v2765, 4
      %v2768 = vshll.u32 %v2676, 16
      %v2770 = vrot.slane %v2768, 5
      %v2771 = vor.u32 %v2767, %v2770
      %v2772 = vrot.slane %v2771, 4
      %v2774 = vshll.u32 %v2677, 16
      %v2776 = vrot.slane %v2774, 5
      %v2777 = vsel %vm493, %v2772, %v2776
      %v2779 = vshrl.u32 %v2678, 16
      %v2781 = vrot.slane %v2779, 4
      %v2782 = vshll.u32 %v2678, 16
      %v2784 = vrot.slane %v2782, 5
      %v2785 = vor.u32 %v2781, %v2784
      %v2786 = vrot.slane %v2785, 4
      %v2788 = vshll.u32 %v2679, 16
      %v2790 = vrot.slane %v2788, 5
      %v2791 = vsel %vm493, %v2786, %v2790
      %s2792 = scalar_lea.vmem %s3, 256
      %v2793 = vld [vmem:[%s2792] sm:$0xf]
      %v2794 = vld [vmem:[%s2792 + $0x4] sm:$0xf]
      %v2795 = vld [vmem:[%s2792 + $0x8] sm:$0xf]
      %v2796 = vld [vmem:[%s2792 + $0xc] sm:$0xf]
      %v2797 = vld [vmem:[%s2792 + $0x10] sm:$0xf]
      %v2798 = vld [vmem:[%s2792 + $0x14] sm:$0xf]
      %v2799 = vld [vmem:[%s2792 + $0x18] sm:$0xf]
      %v2800 = vld [vmem:[%s2792 + $0x1c] sm:$0xf]
      %v2801 = vld [vmem:[%s2792 + $0x20] sm:$0xf]
      %v2802 = vld [vmem:[%s2792 + $0x24] sm:$0xf]
      %v2803 = vld [vmem:[%s2792 + $0x28] sm:$0xf]
      %v2804 = vld [vmem:[%s2792 + $0x2c] sm:$0xf]
      %v2805 = vld [vmem:[%s2792 + $0x30] sm:$0xf]
      %v2806 = vld [vmem:[%s2792 + $0x34] sm:$0xf]
      %v2807 = vld [vmem:[%s2792 + $0x38] sm:$0xf]
      %v2808 = vld [vmem:[%s2792 + $0x3c] sm:$0xf]
      %v2809 = vunpack.c.l.b16 %v2693
      %v2810 = vunpack.c.l.b16 %v2707
      %v2811 = vunpack.c.l.b16 %v2721
      %v2812 = vunpack.c.l.b16 %v2735
      %v2813 = vunpack.c.l.b16 %v2749
      %v2814 = vunpack.c.l.b16 %v2763
      %v2815 = vunpack.c.l.b16 %v2777
      %v2816 = vunpack.c.l.b16 %v2791
      %v2817 = vpack.c.b16 %v2810, %v2809
      %v2818 = vpack.c.b16 %v2812, %v2811
      %v2819 = vpack.c.b16 %v2814, %v2813
      %v2820 = vpack.c.b16 %v2816, %v2815
      %v2841 = vunpack.c.l.b16 %v2793
      %v2842 = vunpack.c.l.b16 %v2794
      %v2843 = vunpack.c.l.b16 %v2795
      %v2844 = vunpack.c.l.b16 %v2796
      %v2845 = vunpack.c.l.b16 %v2797
      %v2846 = vunpack.c.l.b16 %v2798
      %v2847 = vunpack.c.l.b16 %v2799
      %v2848 = vunpack.c.l.b16 %v2800
      %v2849 = vunpack.c.l.b16 %v2801
      %v2850 = vunpack.c.l.b16 %v2802
      %v2851 = vunpack.c.l.b16 %v2803
      %v2852 = vunpack.c.l.b16 %v2804
      %v2853 = vunpack.c.l.b16 %v2805
      %v2854 = vunpack.c.l.b16 %v2806
      %v2855 = vunpack.c.l.b16 %v2807
      %v2856 = vunpack.c.l.b16 %v2808
      %v2857 = vpack.c.b16 %v2842, %v2841
      %v2858 = vpack.c.b16 %v2844, %v2843
      %v2859 = vpack.c.b16 %v2846, %v2845
      %v2860 = vpack.c.b16 %v2848, %v2847
      %v2861 = vpack.c.b16 %v2850, %v2849
      %v2862 = vpack.c.b16 %v2852, %v2851
      %v2863 = vpack.c.b16 %v2854, %v2853
      %v2864 = vpack.c.b16 %v2856, %v2855
      %2873 = vmatprep.subr.bf16.mxu0 0
      %2874 = vmatpush1.bf16.msra.mxu0 %v2857
      %2875 = vmatprep.subr.bf16.mxu0 0
      %2876 = vmatpush1.bf16.msra.mxu0 %v2858
      %2877 = vmatprep.subr.bf16.mxu0 0
      %2878 = vmatpush1.bf16.msra.mxu0 %v2859
      %2879 = vmatprep.subr.bf16.mxu0 0
      %2880 = vmatpush1.bf16.msra.mxu0 %v2860
      %2881 = vmatprep.subr.bf16.mxu0 0
      %2882 = vmatpush1.bf16.msra.mxu0 %v2861
      %2883 = vmatprep.subr.bf16.mxu0 0
      %2884 = vmatpush1.bf16.msra.mxu0 %v2862
      %2885 = vmatprep.subr.bf16.mxu0 0
      %2886 = vmatpush1.bf16.msra.mxu0 %v2863
      %2887 = vmatprep.subr.bf16.mxu0 0
      %2888 = vmatpush1.bf16.msra.mxu0 %v2864
      %2889 = vmatprep.subr.bf16.mxu0 0
      %2890 = vmatpush1.bf16.msra.mxu0 0
      %2891 = vmatprep.subr.bf16.mxu0 0
      %2892 = vmatpush1.bf16.msra.mxu0 0
      %2893 = vmatprep.subr.bf16.mxu0 0
      %2894 = vmatpush1.bf16.msra.mxu0 0
      %2895 = vmatprep.subr.bf16.mxu0 0
      %2896 = vmatpush1.bf16.msra.mxu0 0
      %2897 = vmatprep.subr.bf16.mxu0 0
      %2898 = vmatpush1.bf16.msra.mxu0 0
      %2899 = vmatprep.subr.bf16.mxu0 0
      %2900 = vmatpush1.bf16.msra.mxu0 0
      %2901 = vmatprep.subr.bf16.mxu0 0
      %2902 = vmatpush1.bf16.msra.mxu0 0
      %2903 = vmatprep.subr.bf16.mxu0 0
      %2904 = vmatpush1.bf16.msra.mxu0 0
      %2905 = vmatprep.mubr.bf16.mxu0 0
      %2906 = vmatmul.mubr.bf16.gmra.mrb[0].mxu0 %v2817
      %v2907 = vpop.f32.mrb[0].mxu0
      %v2908 = vadd.f32 0.0, %v2907
      %v2909 = vpop.f32.mrb[0].mxu0
      %v2910 = vpop.f32.mrb[0].mxu0
      %v2911 = vadd.f32 0.0, %v2910
      %v2912 = vpop.f32.mrb[0].mxu0
      %2913 = vmatprep.mubr.bf16.mxu0 0
      %2914 = vmatmul.mubr.bf16.gmra.mrb[0].mxu0 %v2818
      %v2915 = vpop.f32.mrb[0].mxu0
      %v2916 = vadd.f32 0.0, %v2915
      %v2917 = vpop.f32.mrb[0].mxu0
      %v2918 = vpop.f32.mrb[0].mxu0
      %v2919 = vadd.f32 0.0, %v2918
      %v2920 = vpop.f32.mrb[0].mxu0
      %2921 = vmatprep.mubr.bf16.mxu0 0
      %2922 = vmatmul.mubr.bf16.gmra.mrb[0].mxu0 %v2819
      %v2923 = vpop.f32.mrb[0].mxu0
      %v2924 = vadd.f32 0.0, %v2923
      %v2925 = vpop.f32.mrb[0].mxu0
      %v2926 = vpop.f32.mrb[0].mxu0
      %v2927 = vadd.f32 0.0, %v2926
      %v2928 = vpop.f32.mrb[0].mxu0
      %2929 = vmatprep.mubr.bf16.mxu0 0
      %2930 = vmatmul.mubr.bf16.gmra.mrb[0].mxu0 %v2820
      %v2931 = vpop.f32.mrb[0].mxu0
      %v2932 = vadd.f32 0.0, %v2931
      %v2933 = vpop.f32.mrb[0].mxu0
      %v2934 = vpop.f32.mrb[0].mxu0
      %v2935 = vadd.f32 0.0, %v2934
      %v2936 = vpop.f32.mrb[0].mxu0
      %2937 = vdwg.mxu0
      %v2938 = vadd.f32 %v2656, %v2908
      %v2939 = vadd.f32 %v2657, %v2911
      %v2940 = vadd.f32 %v2658, %v2916
      %v2941 = vadd.f32 %v2659, %v2919
      %v2942 = vadd.f32 %v2660, %v2924
      %v2943 = vadd.f32 %v2661, %v2927
      %v2944 = vadd.f32 %v2662, %v2932
      %v2945 = vadd.f32 %v2663, %v2935
      %v2946 = vld [vmem:[%s1799] sm:$0xe]
      %v2947 = vld [vmem:[%s1799 + $0x8] sm:$0xe]
      %v2948 = vld [vmem:[%s1799 + $0x10] sm:$0xe]
      %v2949 = vld [vmem:[%s1799 + $0x18] sm:$0xe]
      %v2950 = vld [vmem:[%s1799 + $0x20] sm:$0xe]
      %v2951 = vld [vmem:[%s1799 + $0x28] sm:$0xe]
      %v2952 = vld [vmem:[%s1799 + $0x30] sm:$0xe]
      %v2953 = vld [vmem:[%s1799 + $0x38] sm:$0xe]
      %v2970 = vrot.slane %v2946, 5
      %v2971 = vrot.slane %v2970, 4
      %v2972 = vrot.slane %v2665, 5
      %v2973 = vsel %vm2307, %v2971, %v2972
      %v2974 = vrot.slane %v2947, 5
      %v2975 = vrot.slane %v2974, 4
      %v2976 = vrot.slane %v2667, 5
      %v2977 = vsel %vm2307, %v2975, %v2976
      %v2978 = vrot.slane %v2948, 5
      %v2979 = vrot.slane %v2978, 4
      %v2980 = vrot.slane %v2669, 5
      %v2981 = vsel %vm2307, %v2979, %v2980
      %v2982 = vrot.slane %v2949, 5
      %v2983 = vrot.slane %v2982, 4
      %v2984 = vrot.slane %v2671, 5
      %v2985 = vsel %vm2307, %v2983, %v2984
      %v2986 = vrot.slane %v2950, 5
      %v2987 = vrot.slane %v2986, 4
      %v2988 = vrot.slane %v2673, 5
      %v2989 = vsel %vm2307, %v2987, %v2988
      %v2990 = vrot.slane %v2951, 5
      %v2991 = vrot.slane %v2990, 4
      %v2992 = vrot.slane %v2675, 5
      %v2993 = vsel %vm2307, %v2991, %v2992
      %v2994 = vrot.slane %v2952, 5
      %v2995 = vrot.slane %v2994, 4
      %v2996 = vrot.slane %v2677, 5
      %v2997 = vsel %vm2307, %v2995, %v2996
      %v2998 = vrot.slane %v2953, 5
      %v2999 = vrot.slane %v2998, 4
      %v3000 = vrot.slane %v2679, 5
      %v3001 = vsel %vm2307, %v2999, %v3000
      %s3002 = scalar_lea.vmem %s3, 320
      %v3003 = vld [vmem:[%s3002] sm:$0xf]
      %v3004 = vld [vmem:[%s3002 + $0x4] sm:$0xf]
      %v3005 = vld [vmem:[%s3002 + $0x8] sm:$0xf]
      %v3006 = vld [vmem:[%s3002 + $0xc] sm:$0xf]
      %v3007 = vld [vmem:[%s3002 + $0x10] sm:$0xf]
      %v3008 = vld [vmem:[%s3002 + $0x14] sm:$0xf]
      %v3009 = vld [vmem:[%s3002 + $0x18] sm:$0xf]
      %v3010 = vld [vmem:[%s3002 + $0x1c] sm:$0xf]
      %v3011 = vld [vmem:[%s3002 + $0x20] sm:$0xf]
      %v3012 = vld [vmem:[%s3002 + $0x24] sm:$0xf]
      %v3013 = vld [vmem:[%s3002 + $0x28] sm:$0xf]
      %v3014 = vld [vmem:[%s3002 + $0x2c] sm:$0xf]
      %v3015 = vld [vmem:[%s3002 + $0x30] sm:$0xf]
      %v3016 = vld [vmem:[%s3002 + $0x34] sm:$0xf]
      %v3017 = vld [vmem:[%s3002 + $0x38] sm:$0xf]
      %v3018 = vld [vmem:[%s3002 + $0x3c] sm:$0xf]
      %v3019 = vunpack.c.l.b16 %v2973
      %v3020 = vunpack.c.l.b16 %v2977
      %v3021 = vunpack.c.l.b16 %v2981
      %v3022 = vunpack.c.l.b16 %v2985
      %v3023 = vunpack.c.l.b16 %v2989
      %v3024 = vunpack.c.l.b16 %v2993
      %v3025 = vunpack.c.l.b16 %v2997
      %v3026 = vunpack.c.l.b16 %v3001
      %v3027 = vpack.c.b16 %v3020, %v3019
      %v3028 = vpack.c.b16 %v3022, %v3021
      %v3029 = vpack.c.b16 %v3024, %v3023
      %v3030 = vpack.c.b16 %v3026, %v3025
      %v3051 = vunpack.c.l.b16 %v3003
      %v3052 = vunpack.c.l.b16 %v3004
      %v3053 = vunpack.c.l.b16 %v3005
      %v3054 = vunpack.c.l.b16 %v3006
      %v3055 = vunpack.c.l.b16 %v3007
      %v3056 = vunpack.c.l.b16 %v3008
      %v3057 = vunpack.c.l.b16 %v3009
      %v3058 = vunpack.c.l.b16 %v3010
      %v3059 = vunpack.c.l.b16 %v3011
      %v3060 = vunpack.c.l.b16 %v3012
      %v3061 = vunpack.c.l.b16 %v3013
      %v3062 = vunpack.c.l.b16 %v3014
      %v3063 = vunpack.c.l.b16 %v3015
      %v3064 = vunpack.c.l.b16 %v3016
      %v3065 = vunpack.c.l.b16 %v3017
      %v3066 = vunpack.c.l.b16 %v3018
      %v3067 = vpack.c.b16 %v3052, %v3051
      %v3068 = vpack.c.b16 %v3054, %v3053
      %v3069 = vpack.c.b16 %v3056, %v3055
      %v3070 = vpack.c.b16 %v3058, %v3057
      %v3071 = vpack.c.b16 %v3060, %v3059
      %v3072 = vpack.c.b16 %v3062, %v3061
      %v3073 = vpack.c.b16 %v3064, %v3063
      %v3074 = vpack.c.b16 %v3066, %v3065
      %3083 = vmatprep.subr.bf16.mxu0 0
      %3084 = vmatpush1.bf16.msra.mxu0 %v3067
      %3085 = vmatprep.subr.bf16.mxu0 0
      %3086 = vmatpush1.bf16.msra.mxu0 %v3068
      %3087 = vmatprep.subr.bf16.mxu0 0
      %3088 = vmatpush1.bf16.msra.mxu0 %v3069
      %3089 = vmatprep.subr.bf16.mxu0 0
      %3090 = vmatpush1.bf16.msra.mxu0 %v3070
      %3091 = vmatprep.subr.bf16.mxu0 0
      %3092 = vmatpush1.bf16.msra.mxu0 %v3071
      %3093 = vmatprep.subr.bf16.mxu0 0
      %3094 = vmatpush1.bf16.msra.mxu0 %v3072
      %3095 = vmatprep.subr.bf16.mxu0 0
      %3096 = vmatpush1.bf16.msra.mxu0 %v3073
      %3097 = vmatprep.subr.bf16.mxu0 0
      %3098 = vmatpush1.bf16.msra.mxu0 %v3074
      %3099 = vmatprep.subr.bf16.mxu0 0
      %3100 = vmatpush1.bf16.msra.mxu0 0
      %3101 = vmatprep.subr.bf16.mxu0 0
      %3102 = vmatpush1.bf16.msra.mxu0 0
      %3103 = vmatprep.subr.bf16.mxu0 0
      %3104 = vmatpush1.bf16.msra.mxu0 0
      %3105 = vmatprep.subr.bf16.mxu0 0
      %3106 = vmatpush1.bf16.msra.mxu0 0
      %3107 = vmatprep.subr.bf16.mxu0 0
      %3108 = vmatpush1.bf16.msra.mxu0 0
      %3109 = vmatprep.subr.bf16.mxu0 0
      %3110 = vmatpush1.bf16.msra.mxu0 0
      %3111 = vmatprep.subr.bf16.mxu0 0
      %3112 = vmatpush1.bf16.msra.mxu0 0
      %3113 = vmatprep.subr.bf16.mxu0 0
      %3114 = vmatpush1.bf16.msra.mxu0 0
      %3115 = vmatprep.mubr.bf16.mxu0 0
      %3116 = vmatmul.mubr.bf16.gmra.mrb[0].mxu0 %v3027
      %v3117 = vpop.f32.mrb[0].mxu0
      %v3118 = vadd.f32 0.0, %v3117
      %v3119 = vpop.f32.mrb[0].mxu0
      %v3120 = vpop.f32.mrb[0].mxu0
      %v3121 = vadd.f32 0.0, %v3120
      %v3122 = vpop.f32.mrb[0].mxu0
      %3123 = vmatprep.mubr.bf16.mxu0 0
      %3124 = vmatmul.mubr.bf16.gmra.mrb[0].mxu0 %v3028
      %v3125 = vpop.f32.mrb[0].mxu0
      %v3126 = vadd.f32 0.0, %v3125
      %v3127 = vpop.f32.mrb[0].mxu0
      %v3128 = vpop.f32.mrb[0].mxu0
      %v3129 = vadd.f32 0.0, %v3128
      %v3130 = vpop.f32.mrb[0].mxu0
      %3131 = vmatprep.mubr.bf16.mxu0 0
      %3132 = vmatmul.mubr.bf16.gmra.mrb[0].mxu0 %v3029
      %v3133 = vpop.f32.mrb[0].mxu0
      %v3134 = vadd.f32 0.0, %v3133
      %v3135 = vpop.f32.mrb[0].mxu0
      %v3136 = vpop.f32.mrb[0].mxu0
      %v3137 = vadd.f32 0.0, %v3136
      %v3138 = vpop.f32.mrb[0].mxu0
      %3139 = vmatprep.mubr.bf16.mxu0 0
      %3140 = vmatmul.mubr.bf16.gmra.mrb[0].mxu0 %v3030
      %v3141 = vpop.f32.mrb[0].mxu0
      %v3142 = vadd.f32 0.0, %v3141
      %v3143 = vpop.f32.mrb[0].mxu0
      %v3144 = vpop.f32.mrb[0].mxu0
      %v3145 = vadd.f32 0.0, %v3144
      %v3146 = vpop.f32.mrb[0].mxu0
      %3147 = vdwg.mxu0
      %v3148 = vadd.f32 %v2938, %v3118
      %v3149 = vadd.f32 %v2939, %v3121
      %v3150 = vadd.f32 %v2940, %v3126
      %v3151 = vadd.f32 %v2941, %v3129
      %v3152 = vadd.f32 %v2942, %v3134
      %v3153 = vadd.f32 %v2943, %v3137
      %v3154 = vadd.f32 %v2944, %v3142
      %v3155 = vadd.f32 %v2945, %v3145
      %s3156 = scalar_lea.vmem [#allocation2], 16
      %v3157 = vld [vmem:[%s3156] sm:$0xf]
      %v3158 = vld [vmem:[%s3156 + $0x8] sm:$0xf]
      %v3159 = vld [vmem:[%s3156 + $0x10] sm:$0xf]
      %v3160 = vld [vmem:[%s3156 + $0x18] sm:$0xf]
      %v3161 = vld [vmem:[%s3156 + $0x20] sm:$0xf]
      %v3162 = vld [vmem:[%s3156 + $0x28] sm:$0xf]
      %v3163 = vld [vmem:[%s3156 + $0x30] sm:$0xf]
      %v3164 = vld [vmem:[%s3156 + $0x38] sm:$0xf]
      %s3165 = scalar_lea.vmem %s3, 384
      %v3166 = vld [vmem:[%s3165] sm:$0xf]
      %v3167 = vld [vmem:[%s3165 + $0x4] sm:$0xf]
      %v3168 = vld [vmem:[%s3165 + $0x8] sm:$0xf]
      %v3169 = vld [vmem:[%s3165 + $0xc] sm:$0xf]
      %v3170 = vld [vmem:[%s3165 + $0x10] sm:$0xf]
      %v3171 = vld [vmem:[%s3165 + $0x14] sm:$0xf]
      %v3172 = vld [vmem:[%s3165 + $0x18] sm:$0xf]
      %v3173 = vld [vmem:[%s3165 + $0x1c] sm:$0xf]
      %v3174 = vld [vmem:[%s3165 + $0x20] sm:$0xf]
      %v3175 = vld [vmem:[%s3165 + $0x24] sm:$0xf]
      %v3176 = vld [vmem:[%s3165 + $0x28] sm:$0xf]
      %v3177 = vld [vmem:[%s3165 + $0x2c] sm:$0xf]
      %v3178 = vld [vmem:[%s3165 + $0x30] sm:$0xf]
      %v3179 = vld [vmem:[%s3165 + $0x34] sm:$0xf]
      %v3180 = vld [vmem:[%s3165 + $0x38] sm:$0xf]
      %v3181 = vld [vmem:[%s3165 + $0x3c] sm:$0xf]
      %v3190 = vunpack.c.l.b16 %v3157
      %v3191 = vunpack.c.l.b16 %v3158
      %v3192 = vunpack.c.l.b16 %v3159
      %v3193 = vunpack.c.l.b16 %v3160
      %v3194 = vunpack.c.l.b16 %v3161
      %v3195 = vunpack.c.l.b16 %v3162
      %v3196 = vunpack.c.l.b16 %v3163
      %v3197 = vunpack.c.l.b16 %v3164
      %v3198 = vpack.c.b16 %v3191, %v3190
      %v3199 = vpack.c.b16 %v3193, %v3192
      %v3200 = vpack.c.b16 %v3195, %v3194
      %v3201 = vpack.c.b16 %v3197, %v3196
      %v3222 = vunpack.c.l.b16 %v3166
      %v3223 = vunpack.c.l.b16 %v3167
      %v3224 = vunpack.c.l.b16 %v3168
      %v3225 = vunpack.c.l.b16 %v3169
      %v3226 = vunpack.c.l.b16 %v3170
      %v3227 = vunpack.c.l.b16 %v3171
      %v3228 = vunpack.c.l.b16 %v3172
      %v3229 = vunpack.c.l.b16 %v3173
      %v3230 = vunpack.c.l.b16 %v3174
      %v3231 = vunpack.c.l.b16 %v3175
      %v3232 = vunpack.c.l.b16 %v3176
      %v3233 = vunpack.c.l.b16 %v3177
      %v3234 = vunpack.c.l.b16 %v3178
      %v3235 = vunpack.c.l.b16 %v3179
      %v3236 = vunpack.c.l.b16 %v3180
      %v3237 = vunpack.c.l.b16 %v3181
      %v3238 = vpack.c.b16 %v3223, %v3222
      %v3239 = vpack.c.b16 %v3225, %v3224
      %v3240 = vpack.c.b16 %v3227, %v3226
      %v3241 = vpack.c.b16 %v3229, %v3228
      %v3242 = vpack.c.b16 %v3231, %v3230
      %v3243 = vpack.c.b16 %v3233, %v3232
      %v3244 = vpack.c.b16 %v3235, %v3234
      %v3245 = vpack.c.b16 %v3237, %v3236
      %3254 = vmatprep.subr.bf16.mxu0 0
      %3255 = vmatpush1.bf16.msra.mxu0 %v3238
      %3256 = vmatprep.subr.bf16.mxu0 0
      %3257 = vmatpush1.bf16.msra.mxu0 %v3239
      %3258 = vmatprep.subr.bf16.mxu0 0
      %3259 = vmatpush1.bf16.msra.mxu0 %v3240
      %3260 = vmatprep.subr.bf16.mxu0 0
      %3261 = vmatpush1.bf16.msra.mxu0 %v3241
      %3262 = vmatprep.subr.bf16.mxu0 0
      %3263 = vmatpush1.bf16.msra.mxu0 %v3242
      %3264 = vmatprep.subr.bf16.mxu0 0
      %3265 = vmatpush1.bf16.msra.mxu0 %v3243
      %3266 = vmatprep.subr.bf16.mxu0 0
      %3267 = vmatpush1.bf16.msra.mxu0 %v3244
      %3268 = vmatprep.subr.bf16.mxu0 0
      %3269 = vmatpush1.bf16.msra.mxu0 %v3245
      %3270 = vmatprep.subr.bf16.mxu0 0
      %3271 = vmatpush1.bf16.msra.mxu0 0
      %3272 = vmatprep.subr.bf16.mxu0 0
      %3273 = vmatpush1.bf16.msra.mxu0 0
      %3274 = vmatprep.subr.bf16.mxu0 0
      %3275 = vmatpush1.bf16.msra.mxu0 0
      %3276 = vmatprep.subr.bf16.mxu0 0
      %3277 = vmatpush1.bf16.msra.mxu0 0
      %3278 = vmatprep.subr.bf16.mxu0 0
      %3279 = vmatpush1.bf16.msra.mxu0 0
      %3280 = vmatprep.subr.bf16.mxu0 0
      %3281 = vmatpush1.bf16.msra.mxu0 0
      %3282 = vmatprep.subr.bf16.mxu0 0
      %3283 = vmatpush1.bf16.msra.mxu0 0
      %3284 = vmatprep.subr.bf16.mxu0 0
      %3285 = vmatpush1.bf16.msra.mxu0 0
      %3286 = vmatprep.mubr.bf16.mxu0 0
      %3287 = vmatmul.mubr.bf16.gmra.mrb[0].mxu0 %v3198
      %v3288 = vpop.f32.mrb[0].mxu0
      %v3289 = vadd.f32 0.0, %v3288
      %v3290 = vpop.f32.mrb[0].mxu0
      %v3291 = vpop.f32.mrb[0].mxu0
      %v3292 = vadd.f32 0.0, %v3291
      %v3293 = vpop.f32.mrb[0].mxu0
      %3294 = vmatprep.mubr.bf16.mxu0 0
      %3295 = vmatmul.mubr.bf16.gmra.mrb[0].mxu0 %v3199
      %v3296 = vpop.f32.mrb[0].mxu0
      %v3297 = vadd.f32 0.0, %v3296
      %v3298 = vpop.f32.mrb[0].mxu0
      %v3299 = vpop.f32.mrb[0].mxu0
      %v3300 = vadd.f32 0.0, %v3299
      %v3301 = vpop.f32.mrb[0].mxu0
      %3302 = vmatprep.mubr.bf16.mxu0 0
      %3303 = vmatmul.mubr.bf16.gmra.mrb[0].mxu0 %v3200
      %v3304 = vpop.f32.mrb[0].mxu0
      %v3305 = vadd.f32 0.0, %v3304
      %v3306 = vpop.f32.mrb[0].mxu0
      %v3307 = vpop.f32.mrb[0].mxu0
      %v3308 = vadd.f32 0.0, %v3307
      %v3309 = vpop.f32.mrb[0].mxu0
      %3310 = vmatprep.mubr.bf16.mxu0 0
      %3311 = vmatmul.mubr.bf16.gmra.mrb[0].mxu0 %v3201
      %v3312 = vpop.f32.mrb[0].mxu0
      %v3313 = vadd.f32 0.0, %v3312
      %v3314 = vpop.f32.mrb[0].mxu0
      %v3315 = vpop.f32.mrb[0].mxu0
      %v3316 = vadd.f32 0.0, %v3315
      %v3317 = vpop.f32.mrb[0].mxu0
      %3318 = vdwg.mxu0
      %v3319 = vadd.f32 %v3148, %v3289
      %v3320 = vadd.f32 %v3149, %v3292
      %v3321 = vadd.f32 %v3150, %v3297
      %v3322 = vadd.f32 %v3151, %v3300
      %v3323 = vadd.f32 %v3152, %v3305
      %v3324 = vadd.f32 %v3153, %v3308
      %v3325 = vadd.f32 %v3154, %v3313
      %v3326 = vadd.f32 %v3155, %v3316
      %v3327 = vld [vmem:[%s3156] sm:$0xf]
      %v3328 = vld [vmem:[%s3156 + $0x4] sm:$0x1]
      %v3329 = vld [vmem:[%s3156 + $0x8] sm:$0xf]
      %v3330 = vld [vmem:[%s3156 + $0xc] sm:$0x1]
      %v3331 = vld [vmem:[%s3156 + $0x10] sm:$0xf]
      %v3332 = vld [vmem:[%s3156 + $0x14] sm:$0x1]
      %v3333 = vld [vmem:[%s3156 + $0x18] sm:$0xf]
      %v3334 = vld [vmem:[%s3156 + $0x1c] sm:$0x1]
      %v3335 = vld [vmem:[%s3156 + $0x20] sm:$0xf]
      %v3336 = vld [vmem:[%s3156 + $0x24] sm:$0x1]
      %v3337 = vld [vmem:[%s3156 + $0x28] sm:$0xf]
      %v3338 = vld [vmem:[%s3156 + $0x2c] sm:$0x1]
      %v3339 = vld [vmem:[%s3156 + $0x30] sm:$0xf]
      %v3340 = vld [vmem:[%s3156 + $0x34] sm:$0x1]
      %v3341 = vld [vmem:[%s3156 + $0x38] sm:$0xf]
      %v3342 = vld [vmem:[%s3156 + $0x3c] sm:$0x1]
      %v3344 = vshrl.u32 %v3327, 16
      %v3346 = vrot.slane %v3344, 4
      %v3347 = vshll.u32 %v3327, 16
      %v3349 = vrot.slane %v3347, 5
      %v3350 = vor.u32 %v3346, %v3349
      %v3351 = vrot.slane %v3350, 4
      %v3353 = vshll.u32 %v3328, 16
      %v3355 = vrot.slane %v3353, 5
      %v3356 = vsel %vm493, %v3351, %v3355
      %v3358 = vshrl.u32 %v3329, 16
      %v3360 = vrot.slane %v3358, 4
      %v3361 = vshll.u32 %v3329, 16
      %v3363 = vrot.slane %v3361, 5
      %v3364 = vor.u32 %v3360, %v3363
      %v3365 = vrot.slane %v3364, 4
      %v3367 = vshll.u32 %v3330, 16
      %v3369 = vrot.slane %v3367, 5
      %v3370 = vsel %vm493, %v3365, %v3369
      %v3372 = vshrl.u32 %v3331, 16
      %v3374 = vrot.slane %v3372, 4
      %v3375 = vshll.u32 %v3331, 16
      %v3377 = vrot.slane %v3375, 5
      %v3378 = vor.u32 %v3374, %v3377
      %v3379 = vrot.slane %v3378, 4
      %v3381 = vshll.u32 %v3332, 16
      %v3383 = vrot.slane %v3381, 5
      %v3384 = vsel %vm493, %v3379, %v3383
      %v3386 = vshrl.u32 %v3333, 16
      %v3388 = vrot.slane %v3386, 4
      %v3389 = vshll.u32 %v3333, 16
      %v3391 = vrot.slane %v3389, 5
      %v3392 = vor.u32 %v3388, %v3391
      %v3393 = vrot.slane %v3392, 4
      %v3395 = vshll.u32 %v3334, 16
      %v3397 = vrot.slane %v3395, 5
      %v3398 = vsel %vm493, %v3393, %v3397
      %v3400 = vshrl.u32 %v3335, 16
      %v3402 = vrot.slane %v3400, 4
      %v3403 = vshll.u32 %v3335, 16
      %v3405 = vrot.slane %v3403, 5
      %v3406 = vor.u32 %v3402, %v3405
      %v3407 = vrot.slane %v3406, 4
      %v3409 = vshll.u32 %v3336, 16
      %v3411 = vrot.slane %v3409, 5
      %v3412 = vsel %vm493, %v3407, %v3411
      %v3414 = vshrl.u32 %v3337, 16
      %v3416 = vrot.slane %v3414, 4
      %v3417 = vshll.u32 %v3337, 16
      %v3419 = vrot.slane %v3417, 5
      %v3420 = vor.u32 %v3416, %v3419
      %v3421 = vrot.slane %v3420, 4
      %v3423 = vshll.u32 %v3338, 16
      %v3425 = vrot.slane %v3423, 5
      %v3426 = vsel %vm493, %v3421, %v3425
      %v3428 = vshrl.u32 %v3339, 16
      %v3430 = vrot.slane %v3428, 4
      %v3431 = vshll.u32 %v3339, 16
      %v3433 = vrot.slane %v3431, 5
      %v3434 = vor.u32 %v3430, %v3433
      %v3435 = vrot.slane %v3434, 4
      %v3437 = vshll.u32 %v3340, 16
      %v3439 = vrot.slane %v3437, 5
      %v3440 = vsel %vm493, %v3435, %v3439
      %v3442 = vshrl.u32 %v3341, 16
      %v3444 = vrot.slane %v3442, 4
      %v3445 = vshll.u32 %v3341, 16
      %v3447 = vrot.slane %v3445, 5
      %v3448 = vor.u32 %v3444, %v3447
      %v3449 = vrot.slane %v3448, 4
      %v3451 = vshll.u32 %v3342, 16
      %v3453 = vrot.slane %v3451, 5
      %v3454 = vsel %vm493, %v3449, %v3453
      %s3455 = scalar_lea.vmem %s3, 448
      %v3456 = vld [vmem:[%s3455] sm:$0xf]
      %v3457 = vld [vmem:[%s3455 + $0x4] sm:$0xf]
      %v3458 = vld [vmem:[%s3455 + $0x8] sm:$0xf]
      %v3459 = vld [vmem:[%s3455 + $0xc] sm:$0xf]
      %v3460 = vld [vmem:[%s3455 + $0x10] sm:$0xf]
      %v3461 = vld [vmem:[%s3455 + $0x14] sm:$0xf]
      %v3462 = vld [vmem:[%s3455 + $0x18] sm:$0xf]
      %v3463 = vld [vmem:[%s3455 + $0x1c] sm:$0xf]
      %v3464 = vld [vmem:[%s3455 + $0x20] sm:$0xf]
      %v3465 = vld [vmem:[%s3455 + $0x24] sm:$0xf]
      %v3466 = vld [vmem:[%s3455 + $0x28] sm:$0xf]
      %v3467 = vld [vmem:[%s3455 + $0x2c] sm:$0xf]
      %v3468 = vld [vmem:[%s3455 + $0x30] sm:$0xf]
      %v3469 = vld [vmem:[%s3455 + $0x34] sm:$0xf]
      %v3470 = vld [vmem:[%s3455 + $0x38] sm:$0xf]
      %v3471 = vld [vmem:[%s3455 + $0x3c] sm:$0xf]
      %v3472 = vunpack.c.l.b16 %v3356
      %v3473 = vunpack.c.l.b16 %v3370
      %v3474 = vunpack.c.l.b16 %v3384
      %v3475 = vunpack.c.l.b16 %v3398
      %v3476 = vunpack.c.l.b16 %v3412
      %v3477 = vunpack.c.l.b16 %v3426
      %v3478 = vunpack.c.l.b16 %v3440
      %v3479 = vunpack.c.l.b16 %v3454
      %v3480 = vpack.c.b16 %v3473, %v3472
      %v3481 = vpack.c.b16 %v3475, %v3474
      %v3482 = vpack.c.b16 %v3477, %v3476
      %v3483 = vpack.c.b16 %v3479, %v3478
      %v3504 = vunpack.c.l.b16 %v3456
      %v3505 = vunpack.c.l.b16 %v3457
      %v3506 = vunpack.c.l.b16 %v3458
      %v3507 = vunpack.c.l.b16 %v3459
      %v3508 = vunpack.c.l.b16 %v3460
      %v3509 = vunpack.c.l.b16 %v3461
      %v3510 = vunpack.c.l.b16 %v3462
      %v3511 = vunpack.c.l.b16 %v3463
      %v3512 = vunpack.c.l.b16 %v3464
      %v3513 = vunpack.c.l.b16 %v3465
      %v3514 = vunpack.c.l.b16 %v3466
      %v3515 = vunpack.c.l.b16 %v3467
      %v3516 = vunpack.c.l.b16 %v3468
      %v3517 = vunpack.c.l.b16 %v3469
      %v3518 = vunpack.c.l.b16 %v3470
      %v3519 = vunpack.c.l.b16 %v3471
      %v3520 = vpack.c.b16 %v3505, %v3504
      %v3521 = vpack.c.b16 %v3507, %v3506
      %v3522 = vpack.c.b16 %v3509, %v3508
      %v3523 = vpack.c.b16 %v3511, %v3510
      %v3524 = vpack.c.b16 %v3513, %v3512
      %v3525 = vpack.c.b16 %v3515, %v3514
      %v3526 = vpack.c.b16 %v3517, %v3516
      %v3527 = vpack.c.b16 %v3519, %v3518
      %3536 = vmatprep.subr.bf16.mxu0 0
      %3537 = vmatpush1.bf16.msra.mxu0 %v3520
      %3538 = vmatprep.subr.bf16.mxu0 0
      %3539 = vmatpush1.bf16.msra.mxu0 %v3521
      %3540 = vmatprep.subr.bf16.mxu0 0
      %3541 = vmatpush1.bf16.msra.mxu0 %v3522
      %3542 = vmatprep.subr.bf16.mxu0 0
      %3543 = vmatpush1.bf16.msra.mxu0 %v3523
      %3544 = vmatprep.subr.bf16.mxu0 0
      %3545 = vmatpush1.bf16.msra.mxu0 %v3524
      %3546 = vmatprep.subr.bf16.mxu0 0
      %3547 = vmatpush1.bf16.msra.mxu0 %v3525
      %3548 = vmatprep.subr.bf16.mxu0 0
      %3549 = vmatpush1.bf16.msra.mxu0 %v3526
      %3550 = vmatprep.subr.bf16.mxu0 0
      %3551 = vmatpush1.bf16.msra.mxu0 %v3527
      %3552 = vmatprep.subr.bf16.mxu0 0
      %3553 = vmatpush1.bf16.msra.mxu0 0
      %3554 = vmatprep.subr.bf16.mxu0 0
      %3555 = vmatpush1.bf16.msra.mxu0 0
      %3556 = vmatprep.subr.bf16.mxu0 0
      %3557 = vmatpush1.bf16.msra.mxu0 0
      %3558 = vmatprep.subr.bf16.mxu0 0
      %3559 = vmatpush1.bf16.msra.mxu0 0
      %3560 = vmatprep.subr.bf16.mxu0 0
      %3561 = vmatpush1.bf16.msra.mxu0 0
      %3562 = vmatprep.subr.bf16.mxu0 0
      %3563 = vmatpush1.bf16.msra.mxu0 0
      %3564 = vmatprep.subr.bf16.mxu0 0
      %3565 = vmatpush1.bf16.msra.mxu0 0
      %3566 = vmatprep.subr.bf16.mxu0 0
      %3567 = vmatpush1.bf16.msra.mxu0 0
      %3568 = vmatprep.mubr.bf16.mxu0 0
      %3569 = vmatmul.mubr.bf16.gmra.mrb[0].mxu0 %v3480
      %v3570 = vpop.f32.mrb[0].mxu0
      %v3571 = vadd.f32 0.0, %v3570
      %v3572 = vpop.f32.mrb[0].mxu0
      %v3573 = vpop.f32.mrb[0].mxu0
      %v3574 = vadd.f32 0.0, %v3573
      %v3575 = vpop.f32.mrb[0].mxu0
      %3576 = vmatprep.mubr.bf16.mxu0 0
      %3577 = vmatmul.mubr.bf16.gmra.mrb[0].mxu0 %v3481
      %v3578 = vpop.f32.mrb[0].mxu0
      %v3579 = vadd.f32 0.0, %v3578
      %v3580 = vpop.f32.mrb[0].mxu0
      %v3581 = vpop.f32.mrb[0].mxu0
      %v3582 = vadd.f32 0.0, %v3581
      %v3583 = vpop.f32.mrb[0].mxu0
      %3584 = vmatprep.mubr.bf16.mxu0 0
      %3585 = vmatmul.mubr.bf16.gmra.mrb[0].mxu0 %v3482
      %v3586 = vpop.f32.mrb[0].mxu0
      %v3587 = vadd.f32 0.0, %v3586
      %v3588 = vpop.f32.mrb[0].mxu0
      %v3589 = vpop.f32.mrb[0].mxu0
      %v3590 = vadd.f32 0.0, %v3589
      %v3591 = vpop.f32.mrb[0].mxu0
      %3592 = vmatprep.mubr.bf16.mxu0 0
      %3593 = vmatmul.mubr.bf16.gmra.mrb[0].mxu0 %v3483
      %v3594 = vpop.f32.mrb[0].mxu0
      %v3595 = vadd.f32 0.0, %v3594
      %v3596 = vpop.f32.mrb[0].mxu0
      %v3597 = vpop.f32.mrb[0].mxu0
      %v3598 = vadd.f32 0.0, %v3597
      %v3599 = vpop.f32.mrb[0].mxu0
      %3600 = vdwg.mxu0
      %v3601 = vadd.f32 %v3319, %v3571
      %v3602 = vadd.f32 %v3320, %v3574
      %v3603 = vadd.f32 %v3321, %v3579
      %v3604 = vadd.f32 %v3322, %v3582
      %v3605 = vadd.f32 %v3323, %v3587
      %v3606 = vadd.f32 %v3324, %v3590
      %v3607 = vadd.f32 %v3325, %v3595
      %v3608 = vadd.f32 %v3326, %v3598
      %v3609 = vld [vmem:[%s3156] sm:$0xe]
      %v3610 = vld [vmem:[%s3156 + $0x8] sm:$0xe]
      %v3611 = vld [vmem:[%s3156 + $0x10] sm:$0xe]
      %v3612 = vld [vmem:[%s3156 + $0x18] sm:$0xe]
      %v3613 = vld [vmem:[%s3156 + $0x20] sm:$0xe]
      %v3614 = vld [vmem:[%s3156 + $0x28] sm:$0xe]
      %v3615 = vld [vmem:[%s3156 + $0x30] sm:$0xe]
      %v3616 = vld [vmem:[%s3156 + $0x38] sm:$0xe]
      %v3633 = vrot.slane %v3609, 5
      %v3634 = vrot.slane %v3633, 4
      %v3635 = vrot.slane %v3328, 5
      %v3636 = vsel %vm2307, %v3634, %v3635
      %v3637 = vrot.slane %v3610, 5
      %v3638 = vrot.slane %v3637, 4
      %v3639 = vrot.slane %v3330, 5
      %v3640 = vsel %vm2307, %v3638, %v3639
      %v3641 = vrot.slane %v3611, 5
      %v3642 = vrot.slane %v3641, 4
      %v3643 = vrot.slane %v3332, 5
      %v3644 = vsel %vm2307, %v3642, %v3643
      %v3645 = vrot.slane %v3612, 5
      %v3646 = vrot.slane %v3645, 4
      %v3647 = vrot.slane %v3334, 5
      %v3648 = vsel %vm2307, %v3646, %v3647
      %v3649 = vrot.slane %v3613, 5
      %v3650 = vrot.slane %v3649, 4
      %v3651 = vrot.slane %v3336, 5
      %v3652 = vsel %vm2307, %v3650, %v3651
      %v3653 = vrot.slane %v3614, 5
      %v3654 = vrot.slane %v3653, 4
      %v3655 = vrot.slane %v3338, 5
      %v3656 = vsel %vm2307, %v3654, %v3655
      %v3657 = vrot.slane %v3615, 5
      %v3658 = vrot.slane %v3657, 4
      %v3659 = vrot.slane %v3340, 5
      %v3660 = vsel %vm2307, %v3658, %v3659
      %v3661 = vrot.slane %v3616, 5
      %v3662 = vrot.slane %v3661, 4
      %v3663 = vrot.slane %v3342, 5
      %v3664 = vsel %vm2307, %v3662, %v3663
      %s3665 = scalar_lea.vmem %s3, 512
      %v3666 = vld [vmem:[%s3665] sm:$0xf]
      %v3667 = vld [vmem:[%s3665 + $0x4] sm:$0xf]
      %v3668 = vld [vmem:[%s3665 + $0x8] sm:$0xf]
      %v3669 = vld [vmem:[%s3665 + $0xc] sm:$0xf]
      %v3670 = vld [vmem:[%s3665 + $0x10] sm:$0xf]
      %v3671 = vld [vmem:[%s3665 + $0x14] sm:$0xf]
      %v3672 = vld [vmem:[%s3665 + $0x18] sm:$0xf]
      %v3673 = vld [vmem:[%s3665 + $0x1c] sm:$0xf]
      %v3674 = vld [vmem:[%s3665 + $0x20] sm:$0xf]
      %v3675 = vld [vmem:[%s3665 + $0x24] sm:$0xf]
      %v3676 = vld [vmem:[%s3665 + $0x28] sm:$0xf]
      %v3677 = vld [vmem:[%s3665 + $0x2c] sm:$0xf]
      %v3678 = vld [vmem:[%s3665 + $0x30] sm:$0xf]
      %v3679 = vld [vmem:[%s3665 + $0x34] sm:$0xf]
      %v3680 = vld [vmem:[%s3665 + $0x38] sm:$0xf]
      %v3681 = vld [vmem:[%s3665 + $0x3c] sm:$0xf]
      %v3682 = vunpack.c.l.b16 %v3636
      %v3683 = vunpack.c.l.b16 %v3640
      %v3684 = vunpack.c.l.b16 %v3644
      %v3685 = vunpack.c.l.b16 %v3648
      %v3686 = vunpack.c.l.b16 %v3652
      %v3687 = vunpack.c.l.b16 %v3656
      %v3688 = vunpack.c.l.b16 %v3660
      %v3689 = vunpack.c.l.b16 %v3664
      %v3690 = vpack.c.b16 %v3683, %v3682
      %v3691 = vpack.c.b16 %v3685, %v3684
      %v3692 = vpack.c.b16 %v3687, %v3686
      %v3693 = vpack.c.b16 %v3689, %v3688
      %v3714 = vunpack.c.l.b16 %v3666
      %v3715 = vunpack.c.l.b16 %v3667
      %v3716 = vunpack.c.l.b16 %v3668
      %v3717 = vunpack.c.l.b16 %v3669
      %v3718 = vunpack.c.l.b16 %v3670
      %v3719 = vunpack.c.l.b16 %v3671
      %v3720 = vunpack.c.l.b16 %v3672
      %v3721 = vunpack.c.l.b16 %v3673
      %v3722 = vunpack.c.l.b16 %v3674
      %v3723 = vunpack.c.l.b16 %v3675
      %v3724 = vunpack.c.l.b16 %v3676
      %v3725 = vunpack.c.l.b16 %v3677
      %v3726 = vunpack.c.l.b16 %v3678
      %v3727 = vunpack.c.l.b16 %v3679
      %v3728 = vunpack.c.l.b16 %v3680
      %v3729 = vunpack.c.l.b16 %v3681
      %v3730 = vpack.c.b16 %v3715, %v3714
      %v3731 = vpack.c.b16 %v3717, %v3716
      %v3732 = vpack.c.b16 %v3719, %v3718
      %v3733 = vpack.c.b16 %v3721, %v3720
      %v3734 = vpack.c.b16 %v3723, %v3722
      %v3735 = vpack.c.b16 %v3725, %v3724
      %v3736 = vpack.c.b16 %v3727, %v3726
      %v3737 = vpack.c.b16 %v3729, %v3728
      %3746 = vmatprep.subr.bf16.mxu0 0
      %3747 = vmatpush1.bf16.msra.mxu0 %v3730
      %3748 = vmatprep.subr.bf16.mxu0 0
      %3749 = vmatpush1.bf16.msra.mxu0 %v3731
      %3750 = vmatprep.subr.bf16.mxu0 0
      %3751 = vmatpush1.bf16.msra.mxu0 %v3732
      %3752 = vmatprep.subr.bf16.mxu0 0
      %3753 = vmatpush1.bf16.msra.mxu0 %v3733
      %3754 = vmatprep.subr.bf16.mxu0 0
      %3755 = vmatpush1.bf16.msra.mxu0 %v3734
      %3756 = vmatprep.subr.bf16.mxu0 0
      %3757 = vmatpush1.bf16.msra.mxu0 %v3735
      %3758 = vmatprep.subr.bf16.mxu0 0
      %3759 = vmatpush1.bf16.msra.mxu0 %v3736
      %3760 = vmatprep.subr.bf16.mxu0 0
      %3761 = vmatpush1.bf16.msra.mxu0 %v3737
      %3762 = vmatprep.subr.bf16.mxu0 0
      %3763 = vmatpush1.bf16.msra.mxu0 0
      %3764 = vmatprep.subr.bf16.mxu0 0
      %3765 = vmatpush1.bf16.msra.mxu0 0
      %3766 = vmatprep.subr.bf16.mxu0 0
      %3767 = vmatpush1.bf16.msra.mxu0 0
      %3768 = vmatprep.subr.bf16.mxu0 0
      %3769 = vmatpush1.bf16.msra.mxu0 0
      %3770 = vmatprep.subr.bf16.mxu0 0
      %3771 = vmatpush1.bf16.msra.mxu0 0
      %3772 = vmatprep.subr.bf16.mxu0 0
      %3773 = vmatpush1.bf16.msra.mxu0 0
      %3774 = vmatprep.subr.bf16.mxu0 0
      %3775 = vmatpush1.bf16.msra.mxu0 0
      %3776 = vmatprep.subr.bf16.mxu0 0
      %3777 = vmatpush1.bf16.msra.mxu0 0
      %3778 = vmatprep.mubr.bf16.mxu0 0
      %3779 = vmatmul.mubr.bf16.gmra.mrb[0].mxu0 %v3690
      %v3780 = vpop.f32.mrb[0].mxu0
      %v3781 = vadd.f32 0.0, %v3780
      %v3782 = vpop.f32.mrb[0].mxu0
      %v3783 = vpop.f32.mrb[0].mxu0
      %v3784 = vadd.f32 0.0, %v3783
      %v3785 = vpop.f32.mrb[0].mxu0
      %3786 = vmatprep.mubr.bf16.mxu0 0
      %3787 = vmatmul.mubr.bf16.gmra.mrb[0].mxu0 %v3691
      %v3788 = vpop.f32.mrb[0].mxu0
      %v3789 = vadd.f32 0.0, %v3788
      %v3790 = vpop.f32.mrb[0].mxu0
      %v3791 = vpop.f32.mrb[0].mxu0
      %v3792 = vadd.f32 0.0, %v3791
      %v3793 = vpop.f32.mrb[0].mxu0
      %3794 = vmatprep.mubr.bf16.mxu0 0
      %3795 = vmatmul.mubr.bf16.gmra.mrb[0].mxu0 %v3692
      %v3796 = vpop.f32.mrb[0].mxu0
      %v3797 = vadd.f32 0.0, %v3796
      %v3798 = vpop.f32.mrb[0].mxu0
      %v3799 = vpop.f32.mrb[0].mxu0
      %v3800 = vadd.f32 0.0, %v3799
      %v3801 = vpop.f32.mrb[0].mxu0
      %3802 = vmatprep.mubr.bf16.mxu0 0
      %3803 = vmatmul.mubr.bf16.gmra.mrb[0].mxu0 %v3693
      %v3804 = vpop.f32.mrb[0].mxu0
      %v3805 = vadd.f32 0.0, %v3804
      %v3806 = vpop.f32.mrb[0].mxu0
      %v3807 = vpop.f32.mrb[0].mxu0
      %v3808 = vadd.f32 0.0, %v3807
      %v3809 = vpop.f32.mrb[0].mxu0
      %3810 = vdwg.mxu0
      %v3811 = vadd.f32 %v3601, %v3781
      %v3812 = vadd.f32 %v3602, %v3784
      %v3813 = vadd.f32 %v3603, %v3789
      %v3814 = vadd.f32 %v3604, %v3792
      %v3815 = vadd.f32 %v3605, %v3797
      %v3816 = vadd.f32 %v3606, %v3800
      %v3817 = vadd.f32 %v3607, %v3805
      %v3818 = vadd.f32 %v3608, %v3808
      %v3819 = vld [vmem:[%s4] sm:$0x1]
      %v3821 = vlaneseq
      %v3822 = vshrl.u32 %v3821, 7
      %v3823 = vsub.s32 0, %v3822
      %v3824 = vrot.slane %v3819, %v3823
      %v3826 = vadd.f32 %v3811, %v3824
      %v3827 = vadd.f32 %v3812, %v3824
      %v3828 = vadd.f32 %v3813, %v3824
      %v3829 = vadd.f32 %v3814, %v3824
      %v3830 = vadd.f32 %v3815, %v3824
      %v3831 = vadd.f32 %v3816, %v3824
      %v3832 = vadd.f32 %v3817, %v3824
      %v3833 = vadd.f32 %v3818, %v3824
      %v3834 = vld [vmem:[%s827] sm:$0xf]
      %v3835 = vld [vmem:[%s827 + $0x8] sm:$0xf]
      %v3836 = vld [vmem:[%s827 + $0x10] sm:$0xf]
      %v3837 = vld [vmem:[%s827 + $0x18] sm:$0xf]
      %v3838 = vld [vmem:[%s827 + $0x20] sm:$0xf]
      %v3839 = vld [vmem:[%s827 + $0x28] sm:$0xf]
      %v3840 = vld [vmem:[%s827 + $0x30] sm:$0xf]
      %v3841 = vld [vmem:[%s827 + $0x38] sm:$0xf]
      %v3842 = vld [vmem:[%s5] sm:$0x3]
      %v3851 = vunpack.c.l.b16 %v3834
      %v3852 = vunpack.c.l.b16 %v3835
      %v3853 = vunpack.c.l.b16 %v3836
      %v3854 = vunpack.c.l.b16 %v3837
      %v3855 = vunpack.c.l.b16 %v3838
      %v3856 = vunpack.c.l.b16 %v3839
      %v3857 = vunpack.c.l.b16 %v3840
      %v3858 = vunpack.c.l.b16 %v3841
      %v3859 = vpack.c.b16 %v3852, %v3851
      %v3860 = vpack.c.b16 %v3854, %v3853
      %v3861 = vpack.c.b16 %v3856, %v3855
      %v3862 = vpack.c.b16 %v3858, %v3857
      %v3864 = vsel %vm293, %v3859, 0
      %v3867 = vsel %vm293, %v3860, 0
      %v3870 = vsel %vm293, %v3861, 0
      %v3873 = vsel %vm293, %v3862, 0
      %v3876 = vsel %vm306, %v3842, 0
      %3878 = vmatprep.subr.bf16.mxu0 0
      %3879 = vmatpush1.bf16.msra.mxu0 %v3876
      %3880 = vmatprep.subr.bf16.mxu0 0
      %3881 = vmatpush1.bf16.msra.mxu0 0
      %3882 = vmatprep.subr.bf16.mxu0 0
      %3883 = vmatpush1.bf16.msra.mxu0 0
      %3884 = vmatprep.subr.bf16.mxu0 0
      %3885 = vmatpush1.bf16.msra.mxu0 0
      %3886 = vmatprep.subr.bf16.mxu0 0
      %3887 = vmatpush1.bf16.msra.mxu0 0
      %3888 = vmatprep.subr.bf16.mxu0 0
      %3889 = vmatpush1.bf16.msra.mxu0 0
      %3890 = vmatprep.subr.bf16.mxu0 0
      %3891 = vmatpush1.bf16.msra.mxu0 0
      %3892 = vmatprep.subr.bf16.mxu0 0
      %3893 = vmatpush1.bf16.msra.mxu0 0
      %3894 = vmatprep.subr.bf16.mxu0 0
      %3895 = vmatpush1.bf16.msra.mxu0 0
      %3896 = vmatprep.subr.bf16.mxu0 0
      %3897 = vmatpush1.bf16.msra.mxu0 0
      %3898 = vmatprep.subr.bf16.mxu0 0
      %3899 = vmatpush1.bf16.msra.mxu0 0
      %3900 = vmatprep.subr.bf16.mxu0 0
      %3901 = vmatpush1.bf16.msra.mxu0 0
      %3902 = vmatprep.subr.bf16.mxu0 0
      %3903 = vmatpush1.bf16.msra.mxu0 0
      %3904 = vmatprep.subr.bf16.mxu0 0
      %3905 = vmatpush1.bf16.msra.mxu0 0
      %3906 = vmatprep.subr.bf16.mxu0 0
      %3907 = vmatpush1.bf16.msra.mxu0 0
      %3908 = vmatprep.subr.bf16.mxu0 0
      %3909 = vmatpush1.bf16.msra.mxu0 0
      %3910 = vmatprep.mubr.bf16.mxu0 0
      %3911 = vmatmul.mubr.bf16.gmra.mrb[0].mxu0 %v3864
      %v3912 = vpop.f32.mrb[0].mxu0
      %v3913 = vadd.f32 0.0, %v3912
      %v3914 = vpop.f32.mrb[0].mxu0
      %v3915 = vpop.f32.mrb[0].mxu0
      %v3916 = vadd.f32 0.0, %v3915
      %v3917 = vpop.f32.mrb[0].mxu0
      %3918 = vmatprep.mubr.bf16.mxu0 0
      %3919 = vmatmul.mubr.bf16.gmra.mrb[0].mxu0 %v3867
      %v3920 = vpop.f32.mrb[0].mxu0
      %v3921 = vadd.f32 0.0, %v3920
      %v3922 = vpop.f32.mrb[0].mxu0
      %v3923 = vpop.f32.mrb[0].mxu0
      %v3924 = vadd.f32 0.0, %v3923
      %v3925 = vpop.f32.mrb[0].mxu0
      %3926 = vmatprep.mubr.bf16.mxu0 0
      %3927 = vmatmul.mubr.bf16.gmra.mrb[0].mxu0 %v3870
      %v3928 = vpop.f32.mrb[0].mxu0
      %v3929 = vadd.f32 0.0, %v3928
      %v3930 = vpop.f32.mrb[0].mxu0
      %v3931 = vpop.f32.mrb[0].mxu0
      %v3932 = vadd.f32 0.0, %v3931
      %v3933 = vpop.f32.mrb[0].mxu0
      %3934 = vmatprep.mubr.bf16.mxu0 0
      %3935 = vmatmul.mubr.bf16.gmra.mrb[0].mxu0 %v3873
      %v3936 = vpop.f32.mrb[0].mxu0
      %v3937 = vadd.f32 0.0, %v3936
      %v3938 = vpop.f32.mrb[0].mxu0
      %v3939 = vpop.f32.mrb[0].mxu0
      %v3940 = vadd.f32 0.0, %v3939
      %v3941 = vpop.f32.mrb[0].mxu0
      %3942 = vdwg.mxu0
      %v3943 = vadd.f32 %v3826, %v3913
      %v3944 = vadd.f32 %v3827, %v3916
      %v3945 = vadd.f32 %v3828, %v3921
      %v3946 = vadd.f32 %v3829, %v3924
      %v3947 = vadd.f32 %v3830, %v3929
      %v3948 = vadd.f32 %v3831, %v3932
      %v3949 = vadd.f32 %v3832, %v3937
      %v3950 = vadd.f32 %v3833, %v3940
      %v3951 = vmax.f32 %v3943, 0.0
      %v3952 = vmax.f32 %v3944, 0.0
      %v3953 = vmax.f32 %v3945, 0.0
      %v3954 = vmax.f32 %v3946, 0.0
      %v3955 = vmax.f32 %v3947, 0.0
      %v3956 = vmax.f32 %v3948, 0.0
      %v3957 = vmax.f32 %v3949, 0.0
      %v3958 = vmax.f32 %v3950, 0.0
      %3959 = vst [vmem:[%s251] sm:$0xff] %v3951
      %3960 = vst [vmem:[%s251 + $0x8] sm:$0xff] %v3952
      %3961 = vst [vmem:[%s251 + $0x10] sm:$0xff] %v3953
      %3962 = vst [vmem:[%s251 + $0x18] sm:$0xff] %v3954
      %3963 = vst [vmem:[%s251 + $0x20] sm:$0xff] %v3955
      %3964 = vst [vmem:[%s251 + $0x28] sm:$0xff] %v3956
      %3965 = vst [vmem:[%s251 + $0x30] sm:$0xff] %v3957
      %3966 = vst [vmem:[%s251 + $0x38] sm:$0xff] %v3958
      %p3967 = scmp.lt.s32.totalorder %s17, 1
      %s3968 = scalar_select %p3967, %s17, 1
      %s3969 = smul.addr %s3968, 8
      %s3970 = smul.addr %s3969, 8
      %s3971 = scalar_lea.vmem %s6, %s3970
      // Predicated region
      $region45: #{residual_forward_jit.1} parent=43 // pred_check
        %p3972 = pneg %p166
      $region46: #{residual_forward_jit.1} parent=43 // pred_check_branch
        %3974 = sbr.rel (%p3972) target = $region48
      $region47: #{residual_forward_jit.1} parent=43 // pred_region
        _
      $region48: #{residual_forward_jit.1} parent=43 // pred_fallthru
        _
    $region44: #{residual_forward_jit.1} parent=5 // pred_fallthru
      _
    %p3975 = scmp.le.s32.totalorder 2, %s12
    // Predicated region
    $region49: #{residual_forward_jit.1} parent=5 // pred_check
      %p3976 = pneg %p3975
    $region50: #{residual_forward_jit.1} parent=5 // pred_check_branch
      %3978 = sbr.rel (%p3976) target = $region52
    $region51: #{residual_forward_jit.1} parent=5 // pred_region
      %s3979 = ssub.s32 %s12, 2
      // Predicated region
      $region53: #{residual_forward_jit.1} parent=51 // pred_check
        %p3980 = pneg %p172
      $region54: #{residual_forward_jit.1} parent=51 // pred_check_branch
        %3982 = sbr.rel (%p3980) target = $region56
      $region55: #{residual_forward_jit.1} parent=51 // pred_region
        %p3983 = scmp.lt.s32.totalorder %s18, 1
        %s3984 = scalar_select %p3983, %s18, 1
        %s3985 = smul.addr %s3984, 8
        %s3986 = smul.addr %s3985, 8
        %s3987 = scalar_lea.vmem %s6, %s3986
      $region56: #{residual_forward_jit.1} parent=51 // pred_fallthru
        _
    $region52: #{residual_forward_jit.1} parent=5 // pred_fallthru
      _
  $region6: #{residual_forward_jit.1} parent=0 // loop_footer
    %s16 = sadd.s32 1, %s12
  $region7: #{residual_forward_jit.1} parent=0 // loop_footer_branch
    %11 = sbr.rel target = $region3
  $region8: #{residual_forward_jit.1} parent=0 // loop_exit
    _

</llo_original>
